<compile_context>
chip_gen: v6e
topology: v6e:2x2x1
jax: 0.10.0
libtpu: 0.0.40
codegen_flags: <defaults>
</compile_context>

<pallas_src>
import functools

import jax
import jax.numpy as jnp
from jax.experimental import pallas as pl
from jax.experimental.pallas import tpu as pltpu


def _round_up(x, m):
    return (x + m - 1) // m * m


def _vmem_capacity_bytes():
    try:
        info = pltpu.get_tpu_info()
        cap = getattr(info, "vmem_capacity_bytes", None)
        if cap:
            return int(cap)
    except Exception:
        pass
    return 64 << 20  # conservative (v7x per-TC)


def _pick_k_tile(cin_p, max_tk=512):
    """K tile (multiple of 128) that divides CIN_P; no tiling for small Cin."""
    if cin_p <= max_tk:
        return cin_p
    for tk in (512, 384, 256, 128):
        if tk <= max_tk and cin_p % tk == 0:
            return tk
    return 128


def _pick_batch_block(n, mp, m_target=256):
    """Largest divisor NB of N with NB*MP <= m_target while keeping >=2 parallel
    grid steps (megacore / pipelining takes priority over MXU M-fill)."""
    nb = 1
    for cand in range(1, n + 1):
        if n % cand == 0 and cand * mp <= m_target and (n // cand) >= min(2, n):
            nb = cand
    return nb


# ----------------------------- Pallas kernel ---------------------------------
def _conv3x3s2_kernel(planes_ref, w_ref, b_ref, o_ref, acc_ref, *, ww: int, mp: int, nb: int):
    """Direct 3x3 / stride-2 conv = 9 accumulated tap matmuls, K-tiled over grid axis 1.

    planes_ref: (4, NB, L, TK)     parity-split, row-flattened, zero-padded input block.
                plane p = (row_parity)*2 + (col_parity); plane row = h2*WW + w2.
    w_ref:      (9, TK, COUT_P)    per-tap weight slab for this K tile, tap = kh*3 + kw.
    b_ref:      (1, COUT_P)        bias (f32), folded into the k==0 accumulator init.
    o_ref:      (NB, MP, COUT_P)   MP = round_up(Ho*WW, 8); out row t -> (ho,wo)=divmod(t,WW).
    acc_ref:    (NB*MP, COUT_P)    f32 VMEM accumulator, persistent across the K axis.
    """
    k = pl.program_id(1)
    tk = planes_ref.shape[-1]
    cout_p = o_ref.shape[-1]

    @pl.when(k == 0)
    def _init():
        acc_ref[...] = jnp.broadcast_to(b_ref[...], acc_ref.shape)

    for kh in range(3):
        for kw in range(3):
            plane = (kh & 1) * 2 + (kw & 1)          # which parity plane
            start = (kh >> 1) * ww + (kw >> 1)       # static row offset into the plane
            xt = planes_ref[plane, :, start:start + mp, :]       # (NB, MP, TK)
            xt = xt.reshape(nb * mp, tk)                          # free: MP % 8 == 0
            acc_ref[...] += jnp.dot(xt, w_ref[kh * 3 + kw],
                                    preferred_element_type=jnp.float32)

    @pl.when(k == pl.num_programs(1) - 1)
    def _finalize():
        o_ref[...] = acc_ref[...].reshape(nb, mp, cout_p).astype(o_ref.dtype)


# ------------------------------- host wrapper ---------------------------------
def _conv3x3_s2_nhwc(x_nhwc, w_oihw, b, *, apply_relu=False, compute_dtype=None):
    """3x3 / stride-2 / pad-1 conv (+ optional input ReLU), NHWC in -> NHWC out."""
    N, H, W, Cin = x_nhwc.shape
    Cout = w_oihw.shape[0]
    Ho = (H - 1) // 2 + 1
    Wo = (W - 1) // 2 + 1
    HH, WW = Ho + 1, Wo + 1                      # parity-plane spatial dims
    MP = _round_up(Ho * WW, 8)                   # kernel output rows (sublane aligned)
    L = _round_up(MP + WW + 1, 8)                # plane rows incl. slack for tap offsets
    CIN_P = _round_up(Cin, 128)                  # lane-dense K per tap
    COUT_P = _round_up(Cout, 128)                # lane-dense output stores

    dt = compute_dtype if compute_dtype is not None else x_nhwc.dtype

    TK = _pick_k_tile(CIN_P)
    KT = CIN_P // TK
    NB = _pick_batch_block(N, MP)
    NG = N // NB

    # ---- plane prep (one fused XLA pass: relu + pad + space-to-depth + pad) ----
    x = jnp.maximum(x_nhwc, 0) if apply_relu else x_nhwc
    pad_b = 2 * HH - 1 - H                       # pad so padded dims = (2*HH, 2*WW)
    pad_r = 2 * WW - 1 - W
    xp = jnp.pad(x, ((0, 0), (1, pad_b), (1, pad_r), (0, 0)))
    # plane-major layout (4, N, L, CIN_P) so the kernel uses leading-int plane indexing
    planes = xp.reshape(N, HH, 2, WW, 2, Cin).transpose(2, 4, 0, 1, 3, 5)
    planes = planes.reshape(4, N, HH * WW, Cin)
    planes = jnp.pad(planes, ((0, 0), (0, 0), (0, L - HH * WW), (0, CIN_P - Cin)))
    planes = planes.astype(dt)

    # ---- weights: (Cout, Cin, 3, 3) -> (9, CIN_P, COUT_P), tap-major ----
    w = jnp.transpose(w_oihw, (2, 3, 1, 0)).reshape(9, Cin, Cout)
    w = jnp.pad(w, ((0, 0), (0, CIN_P - Cin), (0, COUT_P - Cout))).astype(dt)
    bias = jnp.pad(b, (0, COUT_P - Cout)).astype(jnp.float32).reshape(1, COUT_P)

    # ---- VMEM budget from the actual per-spec buffer counts ----
    esize = jnp.dtype(dt).itemsize
    plane_blk = NB * 4 * L * TK * esize
    w_blk = 9 * TK * COUT_P * esize
    out_blk = NB * MP * COUT_P * 4
    acc_bytes = NB * MP * COUT_P * 4
    w_bufs = 1 if KT == 1 else 2                 # single-buffered when never re-fetched
    vmem_need = (2 * plane_blk + w_bufs * w_blk + 2 * out_blk + acc_bytes
                 + 2 * COUT_P * 4 + (4 << 20))   # + compiler scratch headroom
    cap = _vmem_capacity_bytes()
    vmem = int(min(max(vmem_need, 16 << 20), max(cap - (8 << 20), 16 << 20)))

    kernel = functools.partial(_conv3x3s2_kernel, ww=WW, mp=MP, nb=NB)

    if KT == 1:
        # weight block index is constant across the whole grid -> single-buffer it
        w_spec = pl.BlockSpec((9, TK, COUT_P), lambda n, k: (0, k, 0),
                              pipeline_mode=pl.Buffered(1))
    else:
        w_spec = pl.BlockSpec((9, TK, COUT_P), lambda n, k: (0, k, 0))

    out = pl.pallas_call(
        kernel,
        out_shape=jax.ShapeDtypeStruct((N, MP, COUT_P), jnp.float32),
        grid=(NG, KT),
        in_specs=[
            pl.BlockSpec((4, NB, L, TK), lambda n, k: (0, n, 0, k)),
            w_spec,
            pl.BlockSpec((1, COUT_P), lambda n, k: (0, 0)),
        ],
        out_specs=pl.BlockSpec((NB, MP, COUT_P), lambda n, k: (n, 0, 0)),
        scratch_shapes=[pltpu.VMEM((NB * MP, COUT_P), jnp.float32)],
        compiler_params=pltpu.CompilerParams(
            dimension_semantics=("parallel", "arbitrary"),
            vmem_limit_bytes=vmem,
        ),
    )(planes, w, bias)

    # drop padded rows, the per-row junk column (wo == Wo) and padded channels
    out = out[:, :Ho * WW, :Cout].reshape(N, Ho, WW, Cout)[:, :, :Wo, :]
    return out.astype(x_nhwc.dtype)


def last_level_p6p7(c5, p5, params, use_P5, compute_dtype=jnp.bfloat16):
    """Default deployment config: bf16 planes/weights, f32 accumulation/bias/output."""
    x = p5 if use_P5 else c5
    x_nhwc = jnp.transpose(x, (0, 2, 3, 1))                        # NCHW -> NHWC once
    p6_nhwc = _conv3x3_s2_nhwc(x_nhwc, params["w6"], params["b6"],
                               apply_relu=False, compute_dtype=compute_dtype)
    # p6 stays NHWC; ReLU for the p7 conv is fused into its plane-prep pass.
    p7_nhwc = _conv3x3_s2_nhwc(p6_nhwc, params["w7"], params["b7"],
                               apply_relu=True, compute_dtype=compute_dtype)
    p6 = jnp.transpose(p6_nhwc, (0, 3, 1, 2))                      # NHWC -> NCHW once
    p7 = jnp.transpose(p7_nhwc, (0, 3, 1, 2))
    return [p6, p7]


# --------------------------- parameter init ----------------------------------
def _kaiming_uniform_a1(key, cout, cin, k=3):
    # nn.init.kaiming_uniform_(w, a=1): gain = sqrt(2/(1+1)) = 1
    fan_in = cin * k * k
    bound = (3.0 / fan_in) ** 0.5
    return jax.random.uniform(key, (cout, cin, k, k), jnp.float32, -bound, bound)


def init_params(key, in_channels, out_channels):
    k6, k7 = jax.random.split(key)
    return {
        "w6": _kaiming_uniform_a1(k6, out_channels, in_channels),
        "b6": jnp.zeros((out_channels,), jnp.float32),
        "w7": _kaiming_uniform_a1(k7, out_channels, out_channels),
        "b7": jnp.zeros((out_channels,), jnp.float32),
    }


# ------------------------------ reference ------------------------------------
def _ref_conv(x, w, b):
    y = jax.lax.conv_general_dilated(
        x, w, window_strides=(2, 2), padding=((1, 1), (1, 1)),
        dimension_numbers=("NCHW", "OIHW", "NCHW"))
    return y + b[None, :, None, None]


def _ref_forward(c5, p5, params, use_P5):
    x = p5 if use_P5 else c5
    p6 = _ref_conv(x, params["w6"], params["b6"])
    p7 = _ref_conv(jnp.maximum(p6, 0.0), params["w7"], params["b7"])
    return [p6, p7]


# --------------------------------- main ---------------------------------------
if __name__ == "__main__":
    in_channels, out_channels = 4, 8          # in != out  =>  use_P5 = False (x = c5)
    N, H, W = 2, 16, 16
    use_P5 = in_channels == out_channels

    key = jax.random.PRNGKey(0)
    k_c5, k_p5, k_w = jax.random.split(key, 3)
    c5 = jax.random.normal(k_c5, (N, in_channels, H, W), jnp.float32)
    p5 = jax.random.normal(k_p5, (N, out_channels, H, W), jnp.float32)
    params = init_params(k_w, in_channels, out_channels)

    r6, r7 = _ref_forward(c5, p5, params, use_P5)

    # ---- f32 compute path: tight numerical check against the XLA conv reference ----
    fwd_f32 = jax.jit(lambda a, b, p: last_level_p6p7(a, b, p, use_P5,
                                                      compute_dtype=jnp.float32))
    p6, p7 = fwd_f32(c5, p5, params)
    jax.block_until_ready(p6)
    jax.block_until_ready(p7)
    assert p6.shape == (N, out_channels, H // 2, W // 2), p6.shape
    assert p7.shape == (N, out_channels, H // 4, W // 4), p7.shape
    assert jnp.allclose(p6, r6, atol=1e-4, rtol=1e-4), float(jnp.max(jnp.abs(p6 - r6)))
    assert jnp.allclose(p7, r7, atol=1e-4, rtol=1e-4), float(jnp.max(jnp.abs(p7 - r7)))

    # ---- bf16 deployment path (default): f32 accumulation, looser tolerance ----
    fwd_bf16 = jax.jit(lambda a, b, p: last_level_p6p7(a, b, p, use_P5))
    q6, q7 = fwd_bf16(c5, p5, params)
    jax.block_until_ready(q6)
    jax.block_until_ready(q7)
    assert q6.shape == (N, out_channels, H // 2, W // 2), q6.shape
    assert q7.shape == (N, out_channels, H // 4, W // 4), q7.shape
    assert jnp.allclose(q6, r6, atol=5e-2, rtol=5e-2), float(jnp.max(jnp.abs(q6 - r6)))
    assert jnp.allclose(q7, r7, atol=5e-2, rtol=5e-2), float(jnp.max(jnp.abs(q7 - r7)))

    print("KERNEL_OK")
</pallas_src>

<mosaic_0001>
module attributes {stable_mosaic.version = 11 : i64} {
  func.func @_conv3x3s2_kernel(%arg0: i32, %arg1: i32, %arg2: memref<4x1x88x128xf32, #tpu.memory_space<vmem>>, %arg3: memref<9x128x128xf32, #tpu.memory_space<vmem>>, %arg4: memref<1x128xf32, #tpu.memory_space<vmem>>, %arg5: memref<1x72x128xf32, #tpu.memory_space<vmem>>, %arg6: memref<72x128xf32, #tpu.memory_space<vmem>>) attributes {dimension_semantics = [#tpu.dimension_semantics<parallel>, #tpu.dimension_semantics<arbitrary>], iteration_bounds = array<i64: 2, 1>, scalar_prefetch = 0 : i64, scratch_operands = 1 : i64, tpu.core_type = #tpu.core_type<tc>, window_params = [{transform_indices = @transform_0, window_bounds = array<i64: 4, 1, 88, 128>}, {pipeline_mode = #tpu.pipeline_mode<synchronous>, transform_indices = @transform_1, window_bounds = array<i64: 9, 128, 128>}, {pipeline_mode = #tpu.pipeline_mode<synchronous>, transform_indices = @transform_2, window_bounds = array<i64: 1, 128>}, {transform_indices = @transform_3, window_bounds = array<i64: 1, 72, 128>}]} {
    %c0_i32 = arith.constant 0 : i32
    %0 = arith.cmpi eq, %arg1, %c0_i32 : i32
    %1 = arith.extui %0 : i1 to i32
    %c0_i32_0 = arith.constant 0 : i32
    %2 = arith.cmpi ne, %1, %c0_i32_0 : i32
    scf.if %2 {
      %c0_99 = arith.constant 0 : index
      %c0_100 = arith.constant 0 : index
      %87 = vector.load %arg4[%c0_99, %c0_100] : memref<1x128xf32, #tpu.memory_space<vmem>>, vector<1x128xf32>
      %88 = vector.shape_cast %87 : vector<1x128xf32> to vector<1x128xf32>
      %89 = vector.broadcast %88 : vector<1x128xf32> to vector<72x128xf32>
      %c0_101 = arith.constant 0 : index
      %c0_102 = arith.constant 0 : index
      %90 = vector.load %arg6[%c0_101, %c0_102] : memref<72x128xf32, #tpu.memory_space<vmem>>, vector<72x128xf32>
      tpu.vector_store %arg6[%c0_101, %c0_102], %89 {strides = array<i32>} : memref<72x128xf32, #tpu.memory_space<vmem>>, vector<72x128xf32>,
    } else {
    }
    %c0 = arith.constant 0 : index
    %c0_1 = arith.constant 0 : index
    %c0_2 = arith.constant 0 : index
    %c0_3 = arith.constant 0 : index
    %3 = vector.load %arg2[%c0, %c0_1, %c0_2, %c0_3] : memref<4x1x88x128xf32, #tpu.memory_space<vmem>>, vector<1x1x72x128xf32>
    %4 = vector.shape_cast %3 : vector<1x1x72x128xf32> to vector<1x72x128xf32>
    %5 = vector.shape_cast %4 : vector<1x72x128xf32> to vector<72x128xf32>
    %c0_4 = arith.constant 0 : index
    %c0_5 = arith.constant 0 : index
    %6 = vector.load %arg6[%c0_4, %c0_5] : memref<72x128xf32, #tpu.memory_space<vmem>>, vector<72x128xf32>
    %c0_6 = arith.constant 0 : index
    %c0_7 = arith.constant 0 : index
    %c0_8 = arith.constant 0 : index
    %7 = vector.load %arg3[%c0_6, %c0_7, %c0_8] : memref<9x128x128xf32, #tpu.memory_space<vmem>>, vector<1x128x128xf32>
    %8 = vector.shape_cast %7 : vector<1x128x128xf32> to vector<128x128xf32>
    %cst = arith.constant dense<0.000000e+00> : vector<72x128xf32>
    %9 = tpu.matmul %5, %8, %cst {dimension_numbers = #tpu.dot_dimension_numbers<[1], [0], [0], [1], [0, 0, 1, 1], [], []>} : vector<72x128xf32>, vector<128x128xf32>, vector<72x128xf32> -> vector<72x128xf32>
    %10 = arith.addf %6, %9 : vector<72x128xf32>
    %c0_9 = arith.constant 0 : index
    %c0_10 = arith.constant 0 : index
    %11 = vector.load %arg6[%c0_9, %c0_10] : memref<72x128xf32, #tpu.memory_space<vmem>>, vector<72x128xf32>
    tpu.vector_store %arg6[%c0_9, %c0_10], %10 {strides = array<i32>} : memref<72x128xf32, #tpu.memory_space<vmem>>, vector<72x128xf32>,
    %c1 = arith.constant 1 : index
    %c0_11 = arith.constant 0 : index
    %c0_12 = arith.constant 0 : index
    %c0_13 = arith.constant 0 : index
    %12 = vector.load %arg2[%c1, %c0_11, %c0_12, %c0_13] : memref<4x1x88x128xf32, #tpu.memory_space<vmem>>, vector<1x1x72x128xf32>
    %13 = vector.shape_cast %12 : vector<1x1x72x128xf32> to vector<1x72x128xf32>
    %14 = vector.shape_cast %13 : vector<1x72x128xf32> to vector<72x128xf32>
    %c0_14 = arith.constant 0 : index
    %c0_15 = arith.constant 0 : index
    %15 = vector.load %arg6[%c0_14, %c0_15] : memref<72x128xf32, #tpu.memory_space<vmem>>, vector<72x128xf32>
    %c1_16 = arith.constant 1 : index
    %c0_17 = arith.constant 0 : index
    %c0_18 = arith.constant 0 : index
    %16 = vector.load %arg3[%c1_16, %c0_17, %c0_18] : memref<9x128x128xf32, #tpu.memory_space<vmem>>, vector<1x128x128xf32>
    %17 = vector.shape_cast %16 : vector<1x128x128xf32> to vector<128x128xf32>
    %cst_19 = arith.constant dense<0.000000e+00> : vector<72x128xf32>
    %18 = tpu.matmul %14, %17, %cst_19 {dimension_numbers = #tpu.dot_dimension_numbers<[1], [0], [0], [1], [0, 0, 1, 1], [], []>} : vector<72x128xf32>, vector<128x128xf32>, vector<72x128xf32> -> vector<72x128xf32>
    %19 = arith.addf %15, %18 : vector<72x128xf32>
    %c0_20 = arith.constant 0 : index
    %c0_21 = arith.constant 0 : index
    %20 = vector.load %arg6[%c0_20, %c0_21] : memref<72x128xf32, #tpu.memory_space<vmem>>, vector<72x128xf32>
    tpu.vector_store %arg6[%c0_20, %c0_21], %19 {strides = array<i32>} : memref<72x128xf32, #tpu.memory_space<vmem>>, vector<72x128xf32>,
    %c0_22 = arith.constant 0 : index
    %c0_23 = arith.constant 0 : index
    %c1_24 = arith.constant 1 : index
    %c0_25 = arith.constant 0 : index
    %21 = vector.load %arg2[%c0_22, %c0_23, %c1_24, %c0_25] : memref<4x1x88x128xf32, #tpu.memory_space<vmem>>, vector<1x1x72x128xf32>
    %22 = vector.shape_cast %21 : vector<1x1x72x128xf32> to vector<1x72x128xf32>
    %23 = vector.shape_cast %22 : vector<1x72x128xf32> to vector<72x128xf32>
    %c0_26 = arith.constant 0 : index
    %c0_27 = arith.constant 0 : index
    %24 = vector.load %arg6[%c0_26, %c0_27] : memref<72x128xf32, #tpu.memory_space<vmem>>, vector<72x128xf32>
    %c2 = arith.constant 2 : index
    %c0_28 = arith.constant 0 : index
    %c0_29 = arith.constant 0 : index
    %25 = vector.load %arg3[%c2, %c0_28, %c0_29] : memref<9x128x128xf32, #tpu.memory_space<vmem>>, vector<1x128x128xf32>
    %26 = vector.shape_cast %25 : vector<1x128x128xf32> to vector<128x128xf32>
    %cst_30 = arith.constant dense<0.000000e+00> : vector<72x128xf32>
    %27 = tpu.matmul %23, %26, %cst_30 {dimension_numbers = #tpu.dot_dimension_numbers<[1], [0], [0], [1], [0, 0, 1, 1], [], []>} : vector<72x128xf32>, vector<128x128xf32>, vector<72x128xf32> -> vector<72x128xf32>
    %28 = arith.addf %24, %27 : vector<72x128xf32>
    %c0_31 = arith.constant 0 : index
    %c0_32 = arith.constant 0 : index
    %29 = vector.load %arg6[%c0_31, %c0_32] : memref<72x128xf32, #tpu.memory_space<vmem>>, vector<72x128xf32>
    tpu.vector_store %arg6[%c0_31, %c0_32], %28 {strides = array<i32>} : memref<72x128xf32, #tpu.memory_space<vmem>>, vector<72x128xf32>,
    %c2_33 = arith.constant 2 : index
    %c0_34 = arith.constant 0 : index
    %c0_35 = arith.constant 0 : index
    %c0_36 = arith.constant 0 : index
    %30 = vector.load %arg2[%c2_33, %c0_34, %c0_35, %c0_36] : memref<4x1x88x128xf32, #tpu.memory_space<vmem>>, vector<1x1x72x128xf32>
    %31 = vector.shape_cast %30 : vector<1x1x72x128xf32> to vector<1x72x128xf32>
    %32 = vector.shape_cast %31 : vector<1x72x128xf32> to vector<72x128xf32>
    %c0_37 = arith.constant 0 : index
    %c0_38 = arith.constant 0 : index
    %33 = vector.load %arg6[%c0_37, %c0_38] : memref<72x128xf32, #tpu.memory_space<vmem>>, vector<72x128xf32>
    %c3 = arith.constant 3 : index
    %c0_39 = arith.constant 0 : index
    %c0_40 = arith.constant 0 : index
    %34 = vector.load %arg3[%c3, %c0_39, %c0_40] : memref<9x128x128xf32, #tpu.memory_space<vmem>>, vector<1x128x128xf32>
    %35 = vector.shape_cast %34 : vector<1x128x128xf32> to vector<128x128xf32>
    %cst_41 = arith.constant dense<0.000000e+00> : vector<72x128xf32>
    %36 = tpu.matmul %32, %35, %cst_41 {dimension_numbers = #tpu.dot_dimension_numbers<[1], [0], [0], [1], [0, 0, 1, 1], [], []>} : vector<72x128xf32>, vector<128x128xf32>, vector<72x128xf32> -> vector<72x128xf32>
    %37 = arith.addf %33, %36 : vector<72x128xf32>
    %c0_42 = arith.constant 0 : index
    %c0_43 = arith.constant 0 : index
    %38 = vector.load %arg6[%c0_42, %c0_43] : memref<72x128xf32, #tpu.memory_space<vmem>>, vector<72x128xf32>
    tpu.vector_store %arg6[%c0_42, %c0_43], %37 {strides = array<i32>} : memref<72x128xf32, #tpu.memory_space<vmem>>, vector<72x128xf32>,
    %c3_44 = arith.constant 3 : index
    %c0_45 = arith.constant 0 : index
    %c0_46 = arith.constant 0 : index
    %c0_47 = arith.constant 0 : index
    %39 = vector.load %arg2[%c3_44, %c0_45, %c0_46, %c0_47] : memref<4x1x88x128xf32, #tpu.memory_space<vmem>>, vector<1x1x72x128xf32>
    %40 = vector.shape_cast %39 : vector<1x1x72x128xf32> to vector<1x72x128xf32>
    %41 = vector.shape_cast %40 : vector<1x72x128xf32> to vector<72x128xf32>
    %c0_48 = arith.constant 0 : index
    %c0_49 = arith.constant 0 : index
    %42 = vector.load %arg6[%c0_48, %c0_49] : memref<72x128xf32, #tpu.memory_space<vmem>>, vector<72x128xf32>
    %c4 = arith.constant 4 : index
    %c0_50 = arith.constant 0 : index
    %c0_51 = arith.constant 0 : index
    %43 = vector.load %arg3[%c4, %c0_50, %c0_51] : memref<9x128x128xf32, #tpu.memory_space<vmem>>, vector<1x128x128xf32>
    %44 = vector.shape_cast %43 : vector<1x128x128xf32> to vector<128x128xf32>
    %cst_52 = arith.constant dense<0.000000e+00> : vector<72x128xf32>
    %45 = tpu.matmul %41, %44, %cst_52 {dimension_numbers = #tpu.dot_dimension_numbers<[1], [0], [0], [1], [0, 0, 1, 1], [], []>} : vector<72x128xf32>, vector<128x128xf32>, vector<72x128xf32> -> vector<72x128xf32>
    %46 = arith.addf %42, %45 : vector<72x128xf32>
    %c0_53 = arith.constant 0 : index
    %c0_54 = arith.constant 0 : index
    %47 = vector.load %arg6[%c0_53, %c0_54] : memref<72x128xf32, #tpu.memory_space<vmem>>, vector<72x128xf32>
    tpu.vector_store %arg6[%c0_53, %c0_54], %46 {strides = array<i32>} : memref<72x128xf32, #tpu.memory_space<vmem>>, vector<72x128xf32>,
    %c2_55 = arith.constant 2 : index
    %c0_56 = arith.constant 0 : index
    %c1_57 = arith.constant 1 : index
    %c0_58 = arith.constant 0 : index
    %48 = vector.load %arg2[%c2_55, %c0_56, %c1_57, %c0_58] : memref<4x1x88x128xf32, #tpu.memory_space<vmem>>, vector<1x1x72x128xf32>
    %49 = vector.shape_cast %48 : vector<1x1x72x128xf32> to vector<1x72x128xf32>
    %50 = vector.shape_cast %49 : vector<1x72x128xf32> to vector<72x128xf32>
    %c0_59 = arith.constant 0 : index
    %c0_60 = arith.constant 0 : index
    %51 = vector.load %arg6[%c0_59, %c0_60] : memref<72x128xf32, #tpu.memory_space<vmem>>, vector<72x128xf32>
    %c5 = arith.constant 5 : index
    %c0_61 = arith.constant 0 : index
    %c0_62 = arith.constant 0 : index
    %52 = vector.load %arg3[%c5, %c0_61, %c0_62] : memref<9x128x128xf32, #tpu.memory_space<vmem>>, vector<1x128x128xf32>
    %53 = vector.shape_cast %52 : vector<1x128x128xf32> to vector<128x128xf32>
    %cst_63 = arith.constant dense<0.000000e+00> : vector<72x128xf32>
    %54 = tpu.matmul %50, %53, %cst_63 {dimension_numbers = #tpu.dot_dimension_numbers<[1], [0], [0], [1], [0, 0, 1, 1], [], []>} : vector<72x128xf32>, vector<128x128xf32>, vector<72x128xf32> -> vector<72x128xf32>
    %55 = arith.addf %51, %54 : vector<72x128xf32>
    %c0_64 = arith.constant 0 : index
    %c0_65 = arith.constant 0 : index
    %56 = vector.load %arg6[%c0_64, %c0_65] : memref<72x128xf32, #tpu.memory_space<vmem>>, vector<72x128xf32>
    tpu.vector_store %arg6[%c0_64, %c0_65], %55 {strides = array<i32>} : memref<72x128xf32, #tpu.memory_space<vmem>>, vector<72x128xf32>,
    %c0_66 = arith.constant 0 : index
    %c0_67 = arith.constant 0 : index
    %c9 = arith.constant 9 : index
    %c0_68 = arith.constant 0 : index
    %57 = vector.load %arg2[%c0_66, %c0_67, %c9, %c0_68] : memref<4x1x88x128xf32, #tpu.memory_space<vmem>>, vector<1x1x72x128xf32>
    %58 = vector.shape_cast %57 : vector<1x1x72x128xf32> to vector<1x72x128xf32>
    %59 = vector.shape_cast %58 : vector<1x72x128xf32> to vector<72x128xf32>
    %c0_69 = arith.constant 0 : index
    %c0_70 = arith.constant 0 : index
    %60 = vector.load %arg6[%c0_69, %c0_70] : memref<72x128xf32, #tpu.memory_space<vmem>>, vector<72x128xf32>
    %c6 = arith.constant 6 : index
    %c0_71 = arith.constant 0 : index
    %c0_72 = arith.constant 0 : index
    %61 = vector.load %arg3[%c6, %c0_71, %c0_72] : memref<9x128x128xf32, #tpu.memory_space<vmem>>, vector<1x128x128xf32>
    %62 = vector.shape_cast %61 : vector<1x128x128xf32> to vector<128x128xf32>
    %cst_73 = arith.constant dense<0.000000e+00> : vector<72x128xf32>
    %63 = tpu.matmul %59, %62, %cst_73 {dimension_numbers = #tpu.dot_dimension_numbers<[1], [0], [0], [1], [0, 0, 1, 1], [], []>} : vector<72x128xf32>, vector<128x128xf32>, vector<72x128xf32> -> vector<72x128xf32>
    %64 = arith.addf %60, %63 : vector<72x128xf32>
    %c0_74 = arith.constant 0 : index
    %c0_75 = arith.constant 0 : index
    %65 = vector.load %arg6[%c0_74, %c0_75] : memref<72x128xf32, #tpu.memory_space<vmem>>, vector<72x128xf32>
    tpu.vector_store %arg6[%c0_74, %c0_75], %64 {strides = array<i32>} : memref<72x128xf32, #tpu.memory_space<vmem>>, vector<72x128xf32>,
    %c1_76 = arith.constant 1 : index
    %c0_77 = arith.constant 0 : index
    %c9_78 = arith.constant 9 : index
    %c0_79 = arith.constant 0 : index
    %66 = vector.load %arg2[%c1_76, %c0_77, %c9_78, %c0_79] : memref<4x1x88x128xf32, #tpu.memory_space<vmem>>, vector<1x1x72x128xf32>
    %67 = vector.shape_cast %66 : vector<1x1x72x128xf32> to vector<1x72x128xf32>
    %68 = vector.shape_cast %67 : vector<1x72x128xf32> to vector<72x128xf32>
    %c0_80 = arith.constant 0 : index
    %c0_81 = arith.constant 0 : index
    %69 = vector.load %arg6[%c0_80, %c0_81] : memref<72x128xf32, #tpu.memory_space<vmem>>, vector<72x128xf32>
    %c7 = arith.constant 7 : index
    %c0_82 = arith.constant 0 : index
    %c0_83 = arith.constant 0 : index
    %70 = vector.load %arg3[%c7, %c0_82, %c0_83] : memref<9x128x128xf32, #tpu.memory_space<vmem>>, vector<1x128x128xf32>
    %71 = vector.shape_cast %70 : vector<1x128x128xf32> to vector<128x128xf32>
    %cst_84 = arith.constant dense<0.000000e+00> : vector<72x128xf32>
    %72 = tpu.matmul %68, %71, %cst_84 {dimension_numbers = #tpu.dot_dimension_numbers<[1], [0], [0], [1], [0, 0, 1, 1], [], []>} : vector<72x128xf32>, vector<128x128xf32>, vector<72x128xf32> -> vector<72x128xf32>
    %73 = arith.addf %69, %72 : vector<72x128xf32>
    %c0_85 = arith.constant 0 : index
    %c0_86 = arith.constant 0 : index
    %74 = vector.load %arg6[%c0_85, %c0_86] : memref<72x128xf32, #tpu.memory_space<vmem>>, vector<72x128xf32>
    tpu.vector_store %arg6[%c0_85, %c0_86], %73 {strides = array<i32>} : memref<72x128xf32, #tpu.memory_space<vmem>>, vector<72x128xf32>,
    %c0_87 = arith.constant 0 : index
    %c0_88 = arith.constant 0 : index
    %c10 = arith.constant 10 : index
    %c0_89 = arith.constant 0 : index
    %75 = vector.load %arg2[%c0_87, %c0_88, %c10, %c0_89] : memref<4x1x88x128xf32, #tpu.memory_space<vmem>>, vector<1x1x72x128xf32>
    %76 = vector.shape_cast %75 : vector<1x1x72x128xf32> to vector<1x72x128xf32>
    %77 = vector.shape_cast %76 : vector<1x72x128xf32> to vector<72x128xf32>
    %c0_90 = arith.constant 0 : index
    %c0_91 = arith.constant 0 : index
    %78 = vector.load %arg6[%c0_90, %c0_91] : memref<72x128xf32, #tpu.memory_space<vmem>>, vector<72x128xf32>
    %c8 = arith.constant 8 : index
    %c0_92 = arith.constant 0 : index
    %c0_93 = arith.constant 0 : index
    %79 = vector.load %arg3[%c8, %c0_92, %c0_93] : memref<9x128x128xf32, #tpu.memory_space<vmem>>, vector<1x128x128xf32>
    %80 = vector.shape_cast %79 : vector<1x128x128xf32> to vector<128x128xf32>
    %cst_94 = arith.constant dense<0.000000e+00> : vector<72x128xf32>
    %81 = tpu.matmul %77, %80, %cst_94 {dimension_numbers = #tpu.dot_dimension_numbers<[1], [0], [0], [1], [0, 0, 1, 1], [], []>} : vector<72x128xf32>, vector<128x128xf32>, vector<72x128xf32> -> vector<72x128xf32>
    %82 = arith.addf %78, %81 : vector<72x128xf32>
    %c0_95 = arith.constant 0 : index
    %c0_96 = arith.constant 0 : index
    %83 = vector.load %arg6[%c0_95, %c0_96] : memref<72x128xf32, #tpu.memory_space<vmem>>, vector<72x128xf32>
    tpu.vector_store %arg6[%c0_95, %c0_96], %82 {strides = array<i32>} : memref<72x128xf32, #tpu.memory_space<vmem>>, vector<72x128xf32>,
    %c0_i32_97 = arith.constant 0 : i32
    %84 = arith.cmpi eq, %arg1, %c0_i32_97 : i32
    %85 = arith.extui %84 : i1 to i32
    %c0_i32_98 = arith.constant 0 : i32
    %86 = arith.cmpi ne, %85, %c0_i32_98 : i32
    scf.if %86 {
      %c0_99 = arith.constant 0 : index
      %c0_100 = arith.constant 0 : index
      %87 = vector.load %arg6[%c0_99, %c0_100] : memref<72x128xf32, #tpu.memory_space<vmem>>, vector<72x128xf32>
      %88 = vector.shape_cast %87 : vector<72x128xf32> to vector<1x72x128xf32>
      %c0_101 = arith.constant 0 : index
      %c0_102 = arith.constant 0 : index
      %c0_103 = arith.constant 0 : index
      %89 = vector.load %arg5[%c0_101, %c0_102, %c0_103] : memref<1x72x128xf32, #tpu.memory_space<vmem>>, vector<1x72x128xf32>
      tpu.vector_store %arg5[%c0_101, %c0_102, %c0_103], %88 {strides = array<i32>} : memref<1x72x128xf32, #tpu.memory_space<vmem>>, vector<1x72x128xf32>,
    } else {
    }
    return
  }
  func.func @transform_0(%arg0: i32, %arg1: i32) -> (i32, i32, i32, i32) {
    %c0_i32 = arith.constant 0 : i32
    %c0_i32_0 = arith.constant 0 : i32
    %c0_i32_1 = arith.constant 0 : i32
    return %c0_i32, %arg0, %c0_i32_0, %arg1 : i32, i32, i32, i32
  }
  func.func @transform_1(%arg0: i32, %arg1: i32) -> (i32, i32, i32) {
    %c0_i32 = arith.constant 0 : i32
    %c0_i32_0 = arith.constant 0 : i32
    %c0_i32_1 = arith.constant 0 : i32
    return %c0_i32, %arg1, %c0_i32_0 : i32, i32, i32
  }
  func.func @transform_2(%arg0: i32, %arg1: i32) -> (i32, i32) {
    %c0_i32 = arith.constant 0 : i32
    %c0_i32_0 = arith.constant 0 : i32
    %c0_i32_1 = arith.constant 0 : i32
    return %c0_i32, %c0_i32_0 : i32, i32
  }
  func.func @transform_3(%arg0: i32, %arg1: i32) -> (i32, i32, i32) {
    %c0_i32 = arith.constant 0 : i32
    %c0_i32_0 = arith.constant 0 : i32
    %c0_i32_1 = arith.constant 0 : i32
    return %arg0, %c0_i32, %c0_i32_0 : i32, i32, i32
  }
}

module attributes {stable_mosaic.version = 11 : i64} {
  func.func @_conv3x3s2_kernel(%arg0: i32, %arg1: i32, %arg2: memref<4x1x32x128xf32, #tpu.memory_space<vmem>>, %arg3: memref<9x128x128xf32, #tpu.memory_space<vmem>>, %arg4: memref<1x128xf32, #tpu.memory_space<vmem>>, %arg5: memref<1x24x128xf32, #tpu.memory_space<vmem>>, %arg6: memref<24x128xf32, #tpu.memory_space<vmem>>) attributes {dimension_semantics = [#tpu.dimension_semantics<parallel>, #tpu.dimension_semantics<arbitrary>], iteration_bounds = array<i64: 2, 1>, scalar_prefetch = 0 : i64, scratch_operands = 1 : i64, tpu.core_type = #tpu.core_type<tc>, window_params = [{transform_indices = @transform_0, window_bounds = array<i64: 4, 1, 32, 128>}, {pipeline_mode = #tpu.pipeline_mode<synchronous>, transform_indices = @transform_1, window_bounds = array<i64: 9, 128, 128>}, {pipeline_mode = #tpu.pipeline_mode<synchronous>, transform_indices = @transform_2, window_bounds = array<i64: 1, 128>}, {transform_indices = @transform_3, window_bounds = array<i64: 1, 24, 128>}]} {
    %c0_i32 = arith.constant 0 : i32
    %0 = arith.cmpi eq, %arg1, %c0_i32 : i32
    %1 = arith.extui %0 : i1 to i32
    %c0_i32_0 = arith.constant 0 : i32
    %2 = arith.cmpi ne, %1, %c0_i32_0 : i32
    scf.if %2 {
      %c0_101 = arith.constant 0 : index
      %c0_102 = arith.constant 0 : index
      %87 = vector.load %arg4[%c0_101, %c0_102] : memref<1x128xf32, #tpu.memory_space<vmem>>, vector<1x128xf32>
      %88 = vector.shape_cast %87 : vector<1x128xf32> to vector<1x128xf32>
      %89 = vector.broadcast %88 : vector<1x128xf32> to vector<24x128xf32>
      %c0_103 = arith.constant 0 : index
      %c0_104 = arith.constant 0 : index
      %90 = vector.load %arg6[%c0_103, %c0_104] : memref<24x128xf32, #tpu.memory_space<vmem>>, vector<24x128xf32>
      tpu.vector_store %arg6[%c0_103, %c0_104], %89 {strides = array<i32>} : memref<24x128xf32, #tpu.memory_space<vmem>>, vector<24x128xf32>,
    } else {
    }
    %c0 = arith.constant 0 : index
    %c0_1 = arith.constant 0 : index
    %c0_2 = arith.constant 0 : index
    %c0_3 = arith.constant 0 : index
    %3 = vector.load %arg2[%c0, %c0_1, %c0_2, %c0_3] : memref<4x1x32x128xf32, #tpu.memory_space<vmem>>, vector<1x1x24x128xf32>
    %4 = vector.shape_cast %3 : vector<1x1x24x128xf32> to vector<1x24x128xf32>
    %5 = vector.shape_cast %4 : vector<1x24x128xf32> to vector<24x128xf32>
    %c0_4 = arith.constant 0 : index
    %c0_5 = arith.constant 0 : index
    %6 = vector.load %arg6[%c0_4, %c0_5] : memref<24x128xf32, #tpu.memory_space<vmem>>, vector<24x128xf32>
    %c0_6 = arith.constant 0 : index
    %c0_7 = arith.constant 0 : index
    %c0_8 = arith.constant 0 : index
    %7 = vector.load %arg3[%c0_6, %c0_7, %c0_8] : memref<9x128x128xf32, #tpu.memory_space<vmem>>, vector<1x128x128xf32>
    %8 = vector.shape_cast %7 : vector<1x128x128xf32> to vector<128x128xf32>
    %cst = arith.constant dense<0.000000e+00> : vector<24x128xf32>
    %9 = tpu.matmul %5, %8, %cst {dimension_numbers = #tpu.dot_dimension_numbers<[1], [0], [0], [1], [0, 0, 1, 1], [], []>} : vector<24x128xf32>, vector<128x128xf32>, vector<24x128xf32> -> vector<24x128xf32>
    %10 = arith.addf %6, %9 : vector<24x128xf32>
    %c0_9 = arith.constant 0 : index
    %c0_10 = arith.constant 0 : index
    %11 = vector.load %arg6[%c0_9, %c0_10] : memref<24x128xf32, #tpu.memory_space<vmem>>, vector<24x128xf32>
    tpu.vector_store %arg6[%c0_9, %c0_10], %10 {strides = array<i32>} : memref<24x128xf32, #tpu.memory_space<vmem>>, vector<24x128xf32>,
    %c1 = arith.constant 1 : index
    %c0_11 = arith.constant 0 : index
    %c0_12 = arith.constant 0 : index
    %c0_13 = arith.constant 0 : index
    %12 = vector.load %arg2[%c1, %c0_11, %c0_12, %c0_13] : memref<4x1x32x128xf32, #tpu.memory_space<vmem>>, vector<1x1x24x128xf32>
    %13 = vector.shape_cast %12 : vector<1x1x24x128xf32> to vector<1x24x128xf32>
    %14 = vector.shape_cast %13 : vector<1x24x128xf32> to vector<24x128xf32>
    %c0_14 = arith.constant 0 : index
    %c0_15 = arith.constant 0 : index
    %15 = vector.load %arg6[%c0_14, %c0_15] : memref<24x128xf32, #tpu.memory_space<vmem>>, vector<24x128xf32>
    %c1_16 = arith.constant 1 : index
    %c0_17 = arith.constant 0 : index
    %c0_18 = arith.constant 0 : index
    %16 = vector.load %arg3[%c1_16, %c0_17, %c0_18] : memref<9x128x128xf32, #tpu.memory_space<vmem>>, vector<1x128x128xf32>
    %17 = vector.shape_cast %16 : vector<1x128x128xf32> to vector<128x128xf32>
    %cst_19 = arith.constant dense<0.000000e+00> : vector<24x128xf32>
    %18 = tpu.matmul %14, %17, %cst_19 {dimension_numbers = #tpu.dot_dimension_numbers<[1], [0], [0], [1], [0, 0, 1, 1], [], []>} : vector<24x128xf32>, vector<128x128xf32>, vector<24x128xf32> -> vector<24x128xf32>
    %19 = arith.addf %15, %18 : vector<24x128xf32>
    %c0_20 = arith.constant 0 : index
    %c0_21 = arith.constant 0 : index
    %20 = vector.load %arg6[%c0_20, %c0_21] : memref<24x128xf32, #tpu.memory_space<vmem>>, vector<24x128xf32>
    tpu.vector_store %arg6[%c0_20, %c0_21], %19 {strides = array<i32>} : memref<24x128xf32, #tpu.memory_space<vmem>>, vector<24x128xf32>,
    %c0_22 = arith.constant 0 : index
    %c0_23 = arith.constant 0 : index
    %c1_24 = arith.constant 1 : index
    %c0_25 = arith.constant 0 : index
    %21 = vector.load %arg2[%c0_22, %c0_23, %c1_24, %c0_25] : memref<4x1x32x128xf32, #tpu.memory_space<vmem>>, vector<1x1x24x128xf32>
    %22 = vector.shape_cast %21 : vector<1x1x24x128xf32> to vector<1x24x128xf32>
    %23 = vector.shape_cast %22 : vector<1x24x128xf32> to vector<24x128xf32>
    %c0_26 = arith.constant 0 : index
    %c0_27 = arith.constant 0 : index
    %24 = vector.load %arg6[%c0_26, %c0_27] : memref<24x128xf32, #tpu.memory_space<vmem>>, vector<24x128xf32>
    %c2 = arith.constant 2 : index
    %c0_28 = arith.constant 0 : index
    %c0_29 = arith.constant 0 : index
    %25 = vector.load %arg3[%c2, %c0_28, %c0_29] : memref<9x128x128xf32, #tpu.memory_space<vmem>>, vector<1x128x128xf32>
    %26 = vector.shape_cast %25 : vector<1x128x128xf32> to vector<128x128xf32>
    %cst_30 = arith.constant dense<0.000000e+00> : vector<24x128xf32>
    %27 = tpu.matmul %23, %26, %cst_30 {dimension_numbers = #tpu.dot_dimension_numbers<[1], [0], [0], [1], [0, 0, 1, 1], [], []>} : vector<24x128xf32>, vector<128x128xf32>, vector<24x128xf32> -> vector<24x128xf32>
    %28 = arith.addf %24, %27 : vector<24x128xf32>
    %c0_31 = arith.constant 0 : index
    %c0_32 = arith.constant 0 : index
    %29 = vector.load %arg6[%c0_31, %c0_32] : memref<24x128xf32, #tpu.memory_space<vmem>>, vector<24x128xf32>
    tpu.vector_store %arg6[%c0_31, %c0_32], %28 {strides = array<i32>} : memref<24x128xf32, #tpu.memory_space<vmem>>, vector<24x128xf32>,
    %c2_33 = arith.constant 2 : index
    %c0_34 = arith.constant 0 : index
    %c0_35 = arith.constant 0 : index
    %c0_36 = arith.constant 0 : index
    %30 = vector.load %arg2[%c2_33, %c0_34, %c0_35, %c0_36] : memref<4x1x32x128xf32, #tpu.memory_space<vmem>>, vector<1x1x24x128xf32>
    %31 = vector.shape_cast %30 : vector<1x1x24x128xf32> to vector<1x24x128xf32>
    %32 = vector.shape_cast %31 : vector<1x24x128xf32> to vector<24x128xf32>
    %c0_37 = arith.constant 0 : index
    %c0_38 = arith.constant 0 : index
    %33 = vector.load %arg6[%c0_37, %c0_38] : memref<24x128xf32, #tpu.memory_space<vmem>>, vector<24x128xf32>
    %c3 = arith.constant 3 : index
    %c0_39 = arith.constant 0 : index
    %c0_40 = arith.constant 0 : index
    %34 = vector.load %arg3[%c3, %c0_39, %c0_40] : memref<9x128x128xf32, #tpu.memory_space<vmem>>, vector<1x128x128xf32>
    %35 = vector.shape_cast %34 : vector<1x128x128xf32> to vector<128x128xf32>
    %cst_41 = arith.constant dense<0.000000e+00> : vector<24x128xf32>
    %36 = tpu.matmul %32, %35, %cst_41 {dimension_numbers = #tpu.dot_dimension_numbers<[1], [0], [0], [1], [0, 0, 1, 1], [], []>} : vector<24x128xf32>, vector<128x128xf32>, vector<24x128xf32> -> vector<24x128xf32>
    %37 = arith.addf %33, %36 : vector<24x128xf32>
    %c0_42 = arith.constant 0 : index
    %c0_43 = arith.constant 0 : index
    %38 = vector.load %arg6[%c0_42, %c0_43] : memref<24x128xf32, #tpu.memory_space<vmem>>, vector<24x128xf32>
    tpu.vector_store %arg6[%c0_42, %c0_43], %37 {strides = array<i32>} : memref<24x128xf32, #tpu.memory_space<vmem>>, vector<24x128xf32>,
    %c3_44 = arith.constant 3 : index
    %c0_45 = arith.constant 0 : index
    %c0_46 = arith.constant 0 : index
    %c0_47 = arith.constant 0 : index
    %39 = vector.load %arg2[%c3_44, %c0_45, %c0_46, %c0_47] : memref<4x1x32x128xf32, #tpu.memory_space<vmem>>, vector<1x1x24x128xf32>
    %40 = vector.shape_cast %39 : vector<1x1x24x128xf32> to vector<1x24x128xf32>
    %41 = vector.shape_cast %40 : vector<1x24x128xf32> to vector<24x128xf32>
    %c0_48 = arith.constant 0 : index
    %c0_49 = arith.constant 0 : index
    %42 = vector.load %arg6[%c0_48, %c0_49] : memref<24x128xf32, #tpu.memory_space<vmem>>, vector<24x128xf32>
    %c4 = arith.constant 4 : index
    %c0_50 = arith.constant 0 : index
    %c0_51 = arith.constant 0 : index
    %43 = vector.load %arg3[%c4, %c0_50, %c0_51] : memref<9x128x128xf32, #tpu.memory_space<vmem>>, vector<1x128x128xf32>
    %44 = vector.shape_cast %43 : vector<1x128x128xf32> to vector<128x128xf32>
    %cst_52 = arith.constant dense<0.000000e+00> : vector<24x128xf32>
    %45 = tpu.matmul %41, %44, %cst_52 {dimension_numbers = #tpu.dot_dimension_numbers<[1], [0], [0], [1], [0, 0, 1, 1], [], []>} : vector<24x128xf32>, vector<128x128xf32>, vector<24x128xf32> -> vector<24x128xf32>
    %46 = arith.addf %42, %45 : vector<24x128xf32>
    %c0_53 = arith.constant 0 : index
    %c0_54 = arith.constant 0 : index
    %47 = vector.load %arg6[%c0_53, %c0_54] : memref<24x128xf32, #tpu.memory_space<vmem>>, vector<24x128xf32>
    tpu.vector_store %arg6[%c0_53, %c0_54], %46 {strides = array<i32>} : memref<24x128xf32, #tpu.memory_space<vmem>>, vector<24x128xf32>,
    %c2_55 = arith.constant 2 : index
    %c0_56 = arith.constant 0 : index
    %c1_57 = arith.constant 1 : index
    %c0_58 = arith.constant 0 : index
    %48 = vector.load %arg2[%c2_55, %c0_56, %c1_57, %c0_58] : memref<4x1x32x128xf32, #tpu.memory_space<vmem>>, vector<1x1x24x128xf32>
    %49 = vector.shape_cast %48 : vector<1x1x24x128xf32> to vector<1x24x128xf32>
    %50 = vector.shape_cast %49 : vector<1x24x128xf32> to vector<24x128xf32>
    %c0_59 = arith.constant 0 : index
    %c0_60 = arith.constant 0 : index
    %51 = vector.load %arg6[%c0_59, %c0_60] : memref<24x128xf32, #tpu.memory_space<vmem>>, vector<24x128xf32>
    %c5 = arith.constant 5 : index
    %c0_61 = arith.constant 0 : index
    %c0_62 = arith.constant 0 : index
    %52 = vector.load %arg3[%c5, %c0_61, %c0_62] : memref<9x128x128xf32, #tpu.memory_space<vmem>>, vector<1x128x128xf32>
    %53 = vector.shape_cast %52 : vector<1x128x128xf32> to vector<128x128xf32>
    %cst_63 = arith.constant dense<0.000000e+00> : vector<24x128xf32>
    %54 = tpu.matmul %50, %53, %cst_63 {dimension_numbers = #tpu.dot_dimension_numbers<[1], [0], [0], [1], [0, 0, 1, 1], [], []>} : vector<24x128xf32>, vector<128x128xf32>, vector<24x128xf32> -> vector<24x128xf32>
    %55 = arith.addf %51, %54 : vector<24x128xf32>
    %c0_64 = arith.constant 0 : index
    %c0_65 = arith.constant 0 : index
    %56 = vector.load %arg6[%c0_64, %c0_65] : memref<24x128xf32, #tpu.memory_space<vmem>>, vector<24x128xf32>
    tpu.vector_store %arg6[%c0_64, %c0_65], %55 {strides = array<i32>} : memref<24x128xf32, #tpu.memory_space<vmem>>, vector<24x128xf32>,
    %c0_66 = arith.constant 0 : index
    %c0_67 = arith.constant 0 : index
    %c5_68 = arith.constant 5 : index
    %c0_69 = arith.constant 0 : index
    %57 = vector.load %arg2[%c0_66, %c0_67, %c5_68, %c0_69] : memref<4x1x32x128xf32, #tpu.memory_space<vmem>>, vector<1x1x24x128xf32>
    %58 = vector.shape_cast %57 : vector<1x1x24x128xf32> to vector<1x24x128xf32>
    %59 = vector.shape_cast %58 : vector<1x24x128xf32> to vector<24x128xf32>
    %c0_70 = arith.constant 0 : index
    %c0_71 = arith.constant 0 : index
    %60 = vector.load %arg6[%c0_70, %c0_71] : memref<24x128xf32, #tpu.memory_space<vmem>>, vector<24x128xf32>
    %c6 = arith.constant 6 : index
    %c0_72 = arith.constant 0 : index
    %c0_73 = arith.constant 0 : index
    %61 = vector.load %arg3[%c6, %c0_72, %c0_73] : memref<9x128x128xf32, #tpu.memory_space<vmem>>, vector<1x128x128xf32>
    %62 = vector.shape_cast %61 : vector<1x128x128xf32> to vector<128x128xf32>
    %cst_74 = arith.constant dense<0.000000e+00> : vector<24x128xf32>
    %63 = tpu.matmul %59, %62, %cst_74 {dimension_numbers = #tpu.dot_dimension_numbers<[1], [0], [0], [1], [0, 0, 1, 1], [], []>} : vector<24x128xf32>, vector<128x128xf32>, vector<24x128xf32> -> vector<24x128xf32>
    %64 = arith.addf %60, %63 : vector<24x128xf32>
    %c0_75 = arith.constant 0 : index
    %c0_76 = arith.constant 0 : index
    %65 = vector.load %arg6[%c0_75, %c0_76] : memref<24x128xf32, #tpu.memory_space<vmem>>, vector<24x128xf32>
    tpu.vector_store %arg6[%c0_75, %c0_76], %64 {strides = array<i32>} : memref<24x128xf32, #tpu.memory_space<vmem>>, vector<24x128xf32>,
    %c1_77 = arith.constant 1 : index
    %c0_78 = arith.constant 0 : index
    %c5_79 = arith.constant 5 : index
    %c0_80 = arith.constant 0 : index
    %66 = vector.load %arg2[%c1_77, %c0_78, %c5_79, %c0_80] : memref<4x1x32x128xf32, #tpu.memory_space<vmem>>, vector<1x1x24x128xf32>
    %67 = vector.shape_cast %66 : vector<1x1x24x128xf32> to vector<1x24x128xf32>
    %68 = vector.shape_cast %67 : vector<1x24x128xf32> to vector<24x128xf32>
    %c0_81 = arith.constant 0 : index
    %c0_82 = arith.constant 0 : index
    %69 = vector.load %arg6[%c0_81, %c0_82] : memref<24x128xf32, #tpu.memory_space<vmem>>, vector<24x128xf32>
    %c7 = arith.constant 7 : index
    %c0_83 = arith.constant 0 : index
    %c0_84 = arith.constant 0 : index
    %70 = vector.load %arg3[%c7, %c0_83, %c0_84] : memref<9x128x128xf32, #tpu.memory_space<vmem>>, vector<1x128x128xf32>
    %71 = vector.shape_cast %70 : vector<1x128x128xf32> to vector<128x128xf32>
    %cst_85 = arith.constant dense<0.000000e+00> : vector<24x128xf32>
    %72 = tpu.matmul %68, %71, %cst_85 {dimension_numbers = #tpu.dot_dimension_numbers<[1], [0], [0], [1], [0, 0, 1, 1], [], []>} : vector<24x128xf32>, vector<128x128xf32>, vector<24x128xf32> -> vector<24x128xf32>
    %73 = arith.addf %69, %72 : vector<24x128xf32>
    %c0_86 = arith.constant 0 : index
    %c0_87 = arith.constant 0 : index
    %74 = vector.load %arg6[%c0_86, %c0_87] : memref<24x128xf32, #tpu.memory_space<vmem>>, vector<24x128xf32>
    tpu.vector_store %arg6[%c0_86, %c0_87], %73 {strides = array<i32>} : memref<24x128xf32, #tpu.memory_space<vmem>>, vector<24x128xf32>,
    %c0_88 = arith.constant 0 : index
    %c0_89 = arith.constant 0 : index
    %c6_90 = arith.constant 6 : index
    %c0_91 = arith.constant 0 : index
    %75 = vector.load %arg2[%c0_88, %c0_89, %c6_90, %c0_91] : memref<4x1x32x128xf32, #tpu.memory_space<vmem>>, vector<1x1x24x128xf32>
    %76 = vector.shape_cast %75 : vector<1x1x24x128xf32> to vector<1x24x128xf32>
    %77 = vector.shape_cast %76 : vector<1x24x128xf32> to vector<24x128xf32>
    %c0_92 = arith.constant 0 : index
    %c0_93 = arith.constant 0 : index
    %78 = vector.load %arg6[%c0_92, %c0_93] : memref<24x128xf32, #tpu.memory_space<vmem>>, vector<24x128xf32>
    %c8 = arith.constant 8 : index
    %c0_94 = arith.constant 0 : index
    %c0_95 = arith.constant 0 : index
    %79 = vector.load %arg3[%c8, %c0_94, %c0_95] : memref<9x128x128xf32, #tpu.memory_space<vmem>>, vector<1x128x128xf32>
    %80 = vector.shape_cast %79 : vector<1x128x128xf32> to vector<128x128xf32>
    %cst_96 = arith.constant dense<0.000000e+00> : vector<24x128xf32>
    %81 = tpu.matmul %77, %80, %cst_96 {dimension_numbers = #tpu.dot_dimension_numbers<[1], [0], [0], [1], [0, 0, 1, 1], [], []>} : vector<24x128xf32>, vector<128x128xf32>, vector<24x128xf32> -> vector<24x128xf32>
    %82 = arith.addf %78, %81 : vector<24x128xf32>
    %c0_97 = arith.constant 0 : index
    %c0_98 = arith.constant 0 : index
    %83 = vector.load %arg6[%c0_97, %c0_98] : memref<24x128xf32, #tpu.memory_space<vmem>>, vector<24x128xf32>
    tpu.vector_store %arg6[%c0_97, %c0_98], %82 {strides = array<i32>} : memref<24x128xf32, #tpu.memory_space<vmem>>, vector<24x128xf32>,
    %c0_i32_99 = arith.constant 0 : i32
    %84 = arith.cmpi eq, %arg1, %c0_i32_99 : i32
    %85 = arith.extui %84 : i1 to i32
    %c0_i32_100 = arith.constant 0 : i32
    %86 = arith.cmpi ne, %85, %c0_i32_100 : i32
    scf.if %86 {
      %c0_101 = arith.constant 0 : index
      %c0_102 = arith.constant 0 : index
      %87 = vector.load %arg6[%c0_101, %c0_102] : memref<24x128xf32, #tpu.memory_space<vmem>>, vector<24x128xf32>
      %88 = vector.shape_cast %87 : vector<24x128xf32> to vector<1x24x128xf32>
      %c0_103 = arith.constant 0 : index
      %c0_104 = arith.constant 0 : index
      %c0_105 = arith.constant 0 : index
      %89 = vector.load %arg5[%c0_103, %c0_104, %c0_105] : memref<1x24x128xf32, #tpu.memory_space<vmem>>, vector<1x24x128xf32>
      tpu.vector_store %arg5[%c0_103, %c0_104, %c0_105], %88 {strides = array<i32>} : memref<1x24x128xf32, #tpu.memory_space<vmem>>, vector<1x24x128xf32>,
    } else {
    }
    return
  }
  func.func @transform_0(%arg0: i32, %arg1: i32) -> (i32, i32, i32, i32) {
    %c0_i32 = arith.constant 0 : i32
    %c0_i32_0 = arith.constant 0 : i32
    %c0_i32_1 = arith.constant 0 : i32
    return %c0_i32, %arg0, %c0_i32_0, %arg1 : i32, i32, i32, i32
  }
  func.func @transform_1(%arg0: i32, %arg1: i32) -> (i32, i32, i32) {
    %c0_i32 = arith.constant 0 : i32
    %c0_i32_0 = arith.constant 0 : i32
    %c0_i32_1 = arith.constant 0 : i32
    return %c0_i32, %arg1, %c0_i32_0 : i32, i32, i32
  }
  func.func @transform_2(%arg0: i32, %arg1: i32) -> (i32, i32) {
    %c0_i32 = arith.constant 0 : i32
    %c0_i32_0 = arith.constant 0 : i32
    %c0_i32_1 = arith.constant 0 : i32
    return %c0_i32, %c0_i32_0 : i32, i32
  }
  func.func @transform_3(%arg0: i32, %arg1: i32) -> (i32, i32, i32) {
    %c0_i32 = arith.constant 0 : i32
    %c0_i32_0 = arith.constant 0 : i32
    %c0_i32_1 = arith.constant 0 : i32
    return %arg0, %c0_i32, %c0_i32_0 : i32, i32, i32
  }
}

</mosaic_0001>

<llo_original>
// kernel: _lambda_.2
$region0: #{_lambda_.2}
  #allocation0 [shape = 'u32[]', space=smem, size = 0x4, offset = 0x4, fixed_abs, tag = 'smem constant byte address 0x4 - core index']
  #allocation1 [shape = 'u32[144,128]{1,0:T(1,128)}', space=vmem, size = 0x12000, scoped, tag = 'internal scratch']
  #allocation2 [shape = 'f32[72,128]{1,0:T(8,128)}', space=vmem, size = 0x9000, scoped, tag = 'scratch operand']
  %s0 = inlined_call_operand.vmem [shape: f32[4,2,88,128], index: 0, kind: input, shape index: {}]
  %s1 = inlined_call_operand.vmem [shape: f32[9,128,128], index: 1, kind: input, shape index: {}]
  %s2 = inlined_call_operand.vmem [shape: f32[1,128], index: 2, kind: input, shape index: {}]
  %s3 = inlined_call_operand.vmem [shape: f32[2,72,128], index: 3, kind: output, shape index: {}]
  %s4 = sld [smem:[#allocation0]]
  $region91: #{_lambda_.2} parent=0
    _
  %s6 = ssub.s32 1, %s4
  %s7 = scalar_select 0, %s6, %s4
  $region1: #{_lambda_.2} parent=0
    #allocation3 [shape = 'u8[360448]{0}', space=vmem, size = 0x58000, scoped, tag = 'input window, operand 0']
    loop: start=0, step=1, limit=4
    $region2: #{_lambda_.2} parent=1 // loop_pre_header
      _
    $region3: #{_lambda_.2} parent=1 // loop_header
      %s9 = sphi 0, %s13
      %p10 = scmp.ge.s32.totalorder %s9, 4
      %s16 = sphi 0, %s28
      %s17 = sphi 0, %s24
      %s18 = sphi 0, %s16
      %s19 = sphi 0, %s17
      %s20 = sphi 0, %s18
      %s21 = sphi 0, %s19
      %s33 = sphi 0, %s35
      %s36 = sphi 0, %s33
      %s37 = sphi 0, %s36
      %s53 = sphi 0, %s37
      %s59 = sphi 0, %s61
      %s62 = sphi 0, %s59
      %s63 = sphi 0, %s62
      %s79 = sphi 0, %s63
      %s83 = sphi 0, %s83
      %s85 = sphi 0, %s83
      %s86 = sphi 0, %s85
      %s100 = sphi 0, %s86
      %s106 = sphi 0, %s108
      %s109 = sphi 0, %s106
      %s110 = sphi 0, %s109
      %s126 = sphi 0, %s110
    $region4: #{_lambda_.2} parent=1 // loop_header_branch
      %12 = sbr.rel (%p10) target = $region8
    $region5: #{_lambda_.2} parent=1 // loop_body
      %s14 = ssub.s32 %s9, 1
      %s15 = ssub.s32 %s9, 2
      %s22 = sadd.s32 1, %s17
      %p23 = scmp.ge.s32.totalorder %s22, 1
      %s24 = scalar_select %p23, 0, %s22
      %s25 = sadd.s32 1, %s16
      %s26 = scalar_select %p23, %s25, %s16
      %p27 = scmp.ge.s32.totalorder %s26, 2
      %s28 = scalar_select %p27, 0, %s26
      %s29 = ssub.s32 %s16, %s28
      %s30 = ssub.s32 %s17, %s24
      %s31 = sor.u32 %s29, %s30
      %p32 = scmp.eq.s32.totalorder %s31, 0
      %s34 = sadd.s32 %s33, 1
      %s35 = scalar_select %p32, %s33, %s34
      %p38 = pneg %p32
      %p39 = scmp.eq.s32.totalorder %s9, 1
      %p40 = por %p38, %p39
      %p41 = scmp.ne.s32.totalorder %s33, %s36
      %p42 = scmp.eq.s32.totalorder %s9, 0
      %p43 = por %p41, %p42
      %p44 = scmp.ne.s32.totalorder %s33, %s36
      %p45 = scmp.eq.s32.totalorder %s14, 1
      %p46 = por %p44, %p45
      %p47 = scmp.ne.s32.totalorder %s36, %s37
      %p48 = scmp.eq.s32.totalorder %s14, 0
      %p49 = por %p47, %p48
      %p50 = scmp.ne.s32.totalorder %s36, %s37
      %p51 = scmp.eq.s32.totalorder %s15, 1
      %p52 = por %p50, %p51
      %p54 = scmp.ne.s32.totalorder %s37, %s53
      %p55 = scmp.eq.s32.totalorder %s15, 0
      %p56 = por %p54, %p55
      %s57 = ssub.s32 %s17, %s24
      %p58 = scmp.eq.s32.totalorder %s57, 0
      %s60 = sadd.s32 %s59, 1
      %s61 = scalar_select %p58, %s59, %s60
      %p64 = pneg %p58
      %p65 = scmp.eq.s32.totalorder %s9, 1
      %p66 = por %p64, %p65
      %p67 = scmp.ne.s32.totalorder %s59, %s62
      %p68 = scmp.eq.s32.totalorder %s9, 0
      %p69 = por %p67, %p68
      %p70 = scmp.ne.s32.totalorder %s59, %s62
      %p71 = scmp.eq.s32.totalorder %s14, 1
      %p72 = por %p70, %p71
      %p73 = scmp.ne.s32.totalorder %s62, %s63
      %p74 = scmp.eq.s32.totalorder %s14, 0
      %p75 = por %p73, %p74
      %p76 = scmp.ne.s32.totalorder %s62, %s63
      %p77 = scmp.eq.s32.totalorder %s15, 1
      %p78 = por %p76, %p77
      %p80 = scmp.ne.s32.totalorder %s63, %s79
      %p81 = scmp.eq.s32.totalorder %s15, 0
      %p82 = por %p80, %p81
      %s84 = sadd.s32 %s83, 1
      %p87 = scmp.eq.s32.totalorder %s9, 1
      %p88 = scmp.ne.s32.totalorder %s83, %s85
      %p89 = scmp.eq.s32.totalorder %s9, 0
      %p90 = por %p88, %p89
      %p91 = scmp.ne.s32.totalorder %s83, %s85
      %p92 = scmp.eq.s32.totalorder %s14, 1
      %p93 = por %p91, %p92
      %p94 = scmp.ne.s32.totalorder %s85, %s86
      %p95 = scmp.eq.s32.totalorder %s14, 0
      %p96 = por %p94, %p95
      %p97 = scmp.ne.s32.totalorder %s85, %s86
      %p98 = scmp.eq.s32.totalorder %s15, 1
      %p99 = por %p97, %p98
      %p101 = scmp.ne.s32.totalorder %s86, %s100
      %p102 = scmp.eq.s32.totalorder %s15, 0
      %p103 = por %p101, %p102
      %s104 = ssub.s32 %s16, %s28
      %p105 = scmp.eq.s32.totalorder %s104, 0
      %s107 = sadd.s32 %s106, 1
      %s108 = scalar_select %p105, %s106, %s107
      %p111 = pneg %p105
      %p112 = scmp.eq.s32.totalorder %s9, 1
      %p113 = por %p111, %p112
      %p114 = scmp.ne.s32.totalorder %s106, %s109
      %p115 = scmp.eq.s32.totalorder %s9, 0
      %p116 = por %p114, %p115
      %p117 = scmp.ne.s32.totalorder %s106, %s109
      %p118 = scmp.eq.s32.totalorder %s14, 1
      %p119 = por %p117, %p118
      %p120 = scmp.ne.s32.totalorder %s109, %s110
      %p121 = scmp.eq.s32.totalorder %s14, 0
      %p122 = por %p120, %p121
      %p123 = scmp.ne.s32.totalorder %s109, %s110
      %p124 = scmp.eq.s32.totalorder %s15, 1
      %p125 = por %p123, %p124
      %p127 = scmp.ne.s32.totalorder %s110, %s126
      %p128 = scmp.eq.s32.totalorder %s15, 0
      %p129 = por %p127, %p128
      %p130 = scmp.le.s32.totalorder 1, %s9
      %p131 = scmp.lt.s32.totalorder %s9, 3
      %p132 = pnand %p130, %p131
      %p133 = pneg %p132
      // Predicated region
      $region9: #{_lambda_.2} parent=5 // pred_check
        _
      $region10: #{_lambda_.2} parent=5 // pred_check_branch
        %135 = sbr.rel (%p132) target = $region12
      $region11: #{_lambda_.2} parent=5 // pred_region
        %s136 = ssub.s32 %s9, 1
        // Predicated region
        $region13: #{_lambda_.2} parent=11 // pred_check
          %p137 = pneg %p75
        $region14: #{_lambda_.2} parent=11 // pred_check_branch
          %139 = sbr.rel (%p137) target = $region16
        $region15: #{_lambda_.2} parent=11 // pred_region
          %s140 = smul.u32 16, %s19
          %p141 = scmp.lt.s32.totalorder %s140, 15
          %s142 = scalar_select %p141, %s140, 15
          %s143 = smul.addr %s142, 8
          %s144 = scalar_lea.vmem %s1, %s143
          %s145 = smul.u32 16, %s19
        $region16: #{_lambda_.2} parent=11 // pred_fallthru
          _
        // Predicated region
        $region17: #{_lambda_.2} parent=11 // pred_check
          %p146 = pneg %p96
        $region18: #{_lambda_.2} parent=11 // pred_check_branch
          %148 = sbr.rel (%p146) target = $region20
        $region19: #{_lambda_.2} parent=11 // pred_region
          _
        $region20: #{_lambda_.2} parent=11 // pred_fallthru
          _
      $region12: #{_lambda_.2} parent=5 // pred_fallthru
        _
      %p149 = scmp.lt.s32.totalorder %s9, 2
      // Predicated region
      $region21: #{_lambda_.2} parent=5 // pred_check
        %p150 = pneg %p149
      $region22: #{_lambda_.2} parent=5 // pred_check_branch
        %152 = sbr.rel (%p150) target = $region24
      $region23: #{_lambda_.2} parent=5 // pred_region
        // Predicated region
        $region25: #{_lambda_.2} parent=23 // pred_check
          %p153 = pneg %p43
        $region26: #{_lambda_.2} parent=23 // pred_check_branch
          %155 = sbr.rel (%p153) target = $region28
        $region27: #{_lambda_.2} parent=23 // pred_region
          %s156 = sand.u32 %s33, 1
          %s157 = sand.u32 %s33, 1
          %s158 = smul.addr %s157, 352
          %s159 = scalar_lea.vmem [#allocation3], %s158
          %s160 = smul.addr %s16, 11
          %s161 = sadd.s32 %s17, %s160
          %s162 = smul.addr %s161, 8
          %s163 = scalar_lea.vmem %s0, %s162
          // Predicated region
          $region29: #{_lambda_.2} parent=27 // pred_check
            _
          $region30: #{_lambda_.2} parent=27 // pred_check_branch
            %165 = sbr.rel (0) target = $region32
          $region31: #{_lambda_.2} parent=27 // pred_region
            // Predicated region
            $region33: #{_lambda_.2} parent=31 // pred_check
              _
            $region34: #{_lambda_.2} parent=31 // pred_check_branch
              %167 = sbr.rel (0) target = $region36
            $region35: #{_lambda_.2} parent=31 // pred_region
              // Predicated region
              $region48: #{_lambda_.2} parent=35 // pred_check
                _
              $region49: #{_lambda_.2} parent=35 // pred_check_branch
                %269 = sbr.rel (0) target = $region51
              $region50: #{_lambda_.2} parent=35 // pred_region
                loop: start=0, step=1, limit=1
                $region52: #{_lambda_.2} parent=50 // loop_pre_header
                  _
                $region53: #{_lambda_.2} parent=50 // loop_header
                  %s271 = sphi 0, %s275
                  %p272 = scmp.ge.s32.totalorder %s271, 1
                  %s276 = sphi %s163, %s163
                  %s277 = sphi %s159, %s159
                $region54: #{_lambda_.2} parent=50 // loop_header_branch
                  %274 = sbr.rel (%p272) target = $region58
                $region55: #{_lambda_.2} parent=50 // loop_body
                  %v278 = vld [vmem:[%s276] sm:$0xff]
                  %279 = vst [vmem:[%s277] sm:$0xff] %v278
                  %v280 = vld [vmem:[%s276 + $0x8] sm:$0xff]
                  %281 = vst [vmem:[%s277 + $0x8] sm:$0xff] %v280
                  %v282 = vld [vmem:[%s276 + $0x10] sm:$0xff]
                  %283 = vst [vmem:[%s277 + $0x10] sm:$0xff] %v282
                  %v284 = vld [vmem:[%s276 + $0x18] sm:$0xff]
                  %285 = vst [vmem:[%s277 + $0x18] sm:$0xff] %v284
                  %v286 = vld [vmem:[%s276 + $0x20] sm:$0xff]
                  %287 = vst [vmem:[%s277 + $0x20] sm:$0xff] %v286
                  %v288 = vld [vmem:[%s276 + $0x28] sm:$0xff]
                  %289 = vst [vmem:[%s277 + $0x28] sm:$0xff] %v288
                  %v290 = vld [vmem:[%s276 + $0x30] sm:$0xff]
                  %291 = vst [vmem:[%s277 + $0x30] sm:$0xff] %v290
                  %v292 = vld [vmem:[%s276 + $0x38] sm:$0xff]
                  %293 = vst [vmem:[%s277 + $0x38] sm:$0xff] %v292
                  %v294 = vld [vmem:[%s276 + $0x40] sm:$0xff]
                  %295 = vst [vmem:[%s277 + $0x40] sm:$0xff] %v294
                  %v296 = vld [vmem:[%s276 + $0x48] sm:$0xff]
                  %297 = vst [vmem:[%s277 + $0x48] sm:$0xff] %v296
                  %v298 = vld [vmem:[%s276 + $0x50] sm:$0xff]
                  %299 = vst [vmem:[%s277 + $0x50] sm:$0xff] %v298
                  %v300 = vld [vmem:[%s276 + $0xb0] sm:$0xff]
                  %301 = vst [vmem:[%s277 + $0x58] sm:$0xff] %v300
                  %v302 = vld [vmem:[%s276 + $0xb8] sm:$0xff]
                  %303 = vst [vmem:[%s277 + $0x60] sm:$0xff] %v302
                  %v304 = vld [vmem:[%s276 + $0xc0] sm:$0xff]
                  %305 = vst [vmem:[%s277 + $0x68] sm:$0xff] %v304
                  %v306 = vld [vmem:[%s276 + $0xc8] sm:$0xff]
                  %307 = vst [vmem:[%s277 + $0x70] sm:$0xff] %v306
                  %v308 = vld [vmem:[%s276 + $0xd0] sm:$0xff]
                  %309 = vst [vmem:[%s277 + $0x78] sm:$0xff] %v308
                  %v310 = vld [vmem:[%s276 + $0xd8] sm:$0xff]
                  %311 = vst [vmem:[%s277 + $0x80] sm:$0xff] %v310
                  %v312 = vld [vmem:[%s276 + $0xe0] sm:$0xff]
                  %313 = vst [vmem:[%s277 + $0x88] sm:$0xff] %v312
                  %v314 = vld [vmem:[%s276 + $0xe8] sm:$0xff]
                  %315 = vst [vmem:[%s277 + $0x90] sm:$0xff] %v314
                  %v316 = vld [vmem:[%s276 + $0xf0] sm:$0xff]
                  %317 = vst [vmem:[%s277 + $0x98] sm:$0xff] %v316
                  %v318 = vld [vmem:[%s276 + $0xf8] sm:$0xff]
                  %319 = vst [vmem:[%s277 + $0xa0] sm:$0xff] %v318
                  %v320 = vld [vmem:[%s276 + $0x100] sm:$0xff]
                  %321 = vst [vmem:[%s277 + $0xa8] sm:$0xff] %v320
                  %v322 = vld [vmem:[%s276 + $0x160] sm:$0xff]
                  %323 = vst [vmem:[%s277 + $0xb0] sm:$0xff] %v322
                  %v324 = vld [vmem:[%s276 + $0x168] sm:$0xff]
                  %325 = vst [vmem:[%s277 + $0xb8] sm:$0xff] %v324
                  %v326 = vld [vmem:[%s276 + $0x170] sm:$0xff]
                  %327 = vst [vmem:[%s277 + $0xc0] sm:$0xff] %v326
                  %v328 = vld [vmem:[%s276 + $0x178] sm:$0xff]
                  %329 = vst [vmem:[%s277 + $0xc8] sm:$0xff] %v328
                  %v330 = vld [vmem:[%s276 + $0x180] sm:$0xff]
                  %331 = vst [vmem:[%s277 + $0xd0] sm:$0xff] %v330
                  %v332 = vld [vmem:[%s276 + $0x188] sm:$0xff]
                  %333 = vst [vmem:[%s277 + $0xd8] sm:$0xff] %v332
                  %v334 = vld [vmem:[%s276 + $0x190] sm:$0xff]
                  %335 = vst [vmem:[%s277 + $0xe0] sm:$0xff] %v334
                  %v336 = vld [vmem:[%s276 + $0x198] sm:$0xff]
                  %337 = vst [vmem:[%s277 + $0xe8] sm:$0xff] %v336
                  %v338 = vld [vmem:[%s276 + $0x1a0] sm:$0xff]
                  %339 = vst [vmem:[%s277 + $0xf0] sm:$0xff] %v338
                  %v340 = vld [vmem:[%s276 + $0x1a8] sm:$0xff]
                  %341 = vst [vmem:[%s277 + $0xf8] sm:$0xff] %v340
                  %v342 = vld [vmem:[%s276 + $0x1b0] sm:$0xff]
                  %343 = vst [vmem:[%s277 + $0x100] sm:$0xff] %v342
                  %v344 = vld [vmem:[%s276 + $0x210] sm:$0xff]
                  %345 = vst [vmem:[%s277 + $0x108] sm:$0xff] %v344
                  %v346 = vld [vmem:[%s276 + $0x218] sm:$0xff]
                  %347 = vst [vmem:[%s277 + $0x110] sm:$0xff] %v346
                  %v348 = vld [vmem:[%s276 + $0x220] sm:$0xff]
                  %349 = vst [vmem:[%s277 + $0x118] sm:$0xff] %v348
                  %v350 = vld [vmem:[%s276 + $0x228] sm:$0xff]
                  %351 = vst [vmem:[%s277 + $0x120] sm:$0xff] %v350
                  %v352 = vld [vmem:[%s276 + $0x230] sm:$0xff]
                  %353 = vst [vmem:[%s277 + $0x128] sm:$0xff] %v352
                  %v354 = vld [vmem:[%s276 + $0x238] sm:$0xff]
                  %355 = vst [vmem:[%s277 + $0x130] sm:$0xff] %v354
                  %v356 = vld [vmem:[%s276 + $0x240] sm:$0xff]
                  %357 = vst [vmem:[%s277 + $0x138] sm:$0xff] %v356
                  %v358 = vld [vmem:[%s276 + $0x248] sm:$0xff]
                  %359 = vst [vmem:[%s277 + $0x140] sm:$0xff] %v358
                  %v360 = vld [vmem:[%s276 + $0x250] sm:$0xff]
                  %361 = vst [vmem:[%s277 + $0x148] sm:$0xff] %v360
                  %v362 = vld [vmem:[%s276 + $0x258] sm:$0xff]
                  %363 = vst [vmem:[%s277 + $0x150] sm:$0xff] %v362
                  %v364 = vld [vmem:[%s276 + $0x260] sm:$0xff]
                  %365 = vst [vmem:[%s277 + $0x158] sm:$0xff] %v364
                $region56: #{_lambda_.2} parent=50 // loop_footer
                  %s275 = sadd.s32 1, %s271
                $region57: #{_lambda_.2} parent=50 // loop_footer_branch
                  %270 = sbr.rel target = $region53
                $region58: #{_lambda_.2} parent=50 // loop_exit
                  _
              $region51: #{_lambda_.2} parent=35 // pred_fallthru
                _
              // Predicated region
              $region59: #{_lambda_.2} parent=35 // pred_check
                _
              $region60: #{_lambda_.2} parent=35 // pred_check_branch
                %367 = sbr.rel target = $region62
              $region61: #{_lambda_.2} parent=35 // pred_region
                _
              $region62: #{_lambda_.2} parent=35 // pred_fallthru
                _
            $region36: #{_lambda_.2} parent=31 // pred_fallthru
              _
            // Predicated region
            $region37: #{_lambda_.2} parent=31 // pred_check
              _
            $region38: #{_lambda_.2} parent=31 // pred_check_branch
              %169 = sbr.rel target = $region40
            $region39: #{_lambda_.2} parent=31 // pred_region
              %s171 = ssub.s32 256, 1
              loop: start=0, step=1, limit=1
              $region41: #{_lambda_.2} parent=39 // loop_pre_header
                _
              $region42: #{_lambda_.2} parent=39 // loop_header
                %s173 = sphi 0, %s177
                %p174 = scmp.ge.s32.totalorder %s173, 1
                %s178 = sphi %s163, %s163
                %s179 = sphi %s159, %s159
              $region43: #{_lambda_.2} parent=39 // loop_header_branch
                %176 = sbr.rel (%p174) target = $region47
              $region44: #{_lambda_.2} parent=39 // loop_body
                %v180 = vld [vmem:[%s178] sm:%s171]
                %181 = vst [vmem:[%s179] sm:%s171] %v180
                %v182 = vld [vmem:[%s178 + $0x8] sm:%s171]
                %183 = vst [vmem:[%s179 + $0x8] sm:%s171] %v182
                %v184 = vld [vmem:[%s178 + $0x10] sm:%s171]
                %185 = vst [vmem:[%s179 + $0x10] sm:%s171] %v184
                %v186 = vld [vmem:[%s178 + $0x18] sm:%s171]
                %187 = vst [vmem:[%s179 + $0x18] sm:%s171] %v186
                %v188 = vld [vmem:[%s178 + $0x20] sm:%s171]
                %189 = vst [vmem:[%s179 + $0x20] sm:%s171] %v188
                %v190 = vld [vmem:[%s178 + $0x28] sm:%s171]
                %191 = vst [vmem:[%s179 + $0x28] sm:%s171] %v190
                %v192 = vld [vmem:[%s178 + $0x30] sm:%s171]
                %193 = vst [vmem:[%s179 + $0x30] sm:%s171] %v192
                %v194 = vld [vmem:[%s178 + $0x38] sm:%s171]
                %195 = vst [vmem:[%s179 + $0x38] sm:%s171] %v194
                %v196 = vld [vmem:[%s178 + $0x40] sm:%s171]
                %197 = vst [vmem:[%s179 + $0x40] sm:%s171] %v196
                %v198 = vld [vmem:[%s178 + $0x48] sm:%s171]
                %199 = vst [vmem:[%s179 + $0x48] sm:%s171] %v198
                %v200 = vld [vmem:[%s178 + $0x50] sm:%s171]
                %201 = vst [vmem:[%s179 + $0x50] sm:%s171] %v200
                %v202 = vld [vmem:[%s178 + $0xb0] sm:%s171]
                %203 = vst [vmem:[%s179 + $0x58] sm:%s171] %v202
                %v204 = vld [vmem:[%s178 + $0xb8] sm:%s171]
                %205 = vst [vmem:[%s179 + $0x60] sm:%s171] %v204
                %v206 = vld [vmem:[%s178 + $0xc0] sm:%s171]
                %207 = vst [vmem:[%s179 + $0x68] sm:%s171] %v206
                %v208 = vld [vmem:[%s178 + $0xc8] sm:%s171]
                %209 = vst [vmem:[%s179 + $0x70] sm:%s171] %v208
                %v210 = vld [vmem:[%s178 + $0xd0] sm:%s171]
                %211 = vst [vmem:[%s179 + $0x78] sm:%s171] %v210
                %v212 = vld [vmem:[%s178 + $0xd8] sm:%s171]
                %213 = vst [vmem:[%s179 + $0x80] sm:%s171] %v212
                %v214 = vld [vmem:[%s178 + $0xe0] sm:%s171]
                %215 = vst [vmem:[%s179 + $0x88] sm:%s171] %v214
                %v216 = vld [vmem:[%s178 + $0xe8] sm:%s171]
                %217 = vst [vmem:[%s179 + $0x90] sm:%s171] %v216
                %v218 = vld [vmem:[%s178 + $0xf0] sm:%s171]
                %219 = vst [vmem:[%s179 + $0x98] sm:%s171] %v218
                %v220 = vld [vmem:[%s178 + $0xf8] sm:%s171]
                %221 = vst [vmem:[%s179 + $0xa0] sm:%s171] %v220
                %v222 = vld [vmem:[%s178 + $0x100] sm:%s171]
                %223 = vst [vmem:[%s179 + $0xa8] sm:%s171] %v222
                %v224 = vld [vmem:[%s178 + $0x160] sm:%s171]
                %225 = vst [vmem:[%s179 + $0xb0] sm:%s171] %v224
                %v226 = vld [vmem:[%s178 + $0x168] sm:%s171]
                %227 = vst [vmem:[%s179 + $0xb8] sm:%s171] %v226
                %v228 = vld [vmem:[%s178 + $0x170] sm:%s171]
                %229 = vst [vmem:[%s179 + $0xc0] sm:%s171] %v228
                %v230 = vld [vmem:[%s178 + $0x178] sm:%s171]
                %231 = vst [vmem:[%s179 + $0xc8] sm:%s171] %v230
                %v232 = vld [vmem:[%s178 + $0x180] sm:%s171]
                %233 = vst [vmem:[%s179 + $0xd0] sm:%s171] %v232
                %v234 = vld [vmem:[%s178 + $0x188] sm:%s171]
                %235 = vst [vmem:[%s179 + $0xd8] sm:%s171] %v234
                %v236 = vld [vmem:[%s178 + $0x190] sm:%s171]
                %237 = vst [vmem:[%s179 + $0xe0] sm:%s171] %v236
                %v238 = vld [vmem:[%s178 + $0x198] sm:%s171]
                %239 = vst [vmem:[%s179 + $0xe8] sm:%s171] %v238
                %v240 = vld [vmem:[%s178 + $0x1a0] sm:%s171]
                %241 = vst [vmem:[%s179 + $0xf0] sm:%s171] %v240
                %v242 = vld [vmem:[%s178 + $0x1a8] sm:%s171]
                %243 = vst [vmem:[%s179 + $0xf8] sm:%s171] %v242
                %v244 = vld [vmem:[%s178 + $0x1b0] sm:%s171]
                %245 = vst [vmem:[%s179 + $0x100] sm:%s171] %v244
                %v246 = vld [vmem:[%s178 + $0x210] sm:%s171]
                %247 = vst [vmem:[%s179 + $0x108] sm:%s171] %v246
                %v248 = vld [vmem:[%s178 + $0x218] sm:%s171]
                %249 = vst [vmem:[%s179 + $0x110] sm:%s171] %v248
                %v250 = vld [vmem:[%s178 + $0x220] sm:%s171]
                %251 = vst [vmem:[%s179 + $0x118] sm:%s171] %v250
                %v252 = vld [vmem:[%s178 + $0x228] sm:%s171]
                %253 = vst [vmem:[%s179 + $0x120] sm:%s171] %v252
                %v254 = vld [vmem:[%s178 + $0x230] sm:%s171]
                %255 = vst [vmem:[%s179 + $0x128] sm:%s171] %v254
                %v256 = vld [vmem:[%s178 + $0x238] sm:%s171]
                %257 = vst [vmem:[%s179 + $0x130] sm:%s171] %v256
                %v258 = vld [vmem:[%s178 + $0x240] sm:%s171]
                %259 = vst [vmem:[%s179 + $0x138] sm:%s171] %v258
                %v260 = vld [vmem:[%s178 + $0x248] sm:%s171]
                %261 = vst [vmem:[%s179 + $0x140] sm:%s171] %v260
                %v262 = vld [vmem:[%s178 + $0x250] sm:%s171]
                %263 = vst [vmem:[%s179 + $0x148] sm:%s171] %v262
                %v264 = vld [vmem:[%s178 + $0x258] sm:%s171]
                %265 = vst [vmem:[%s179 + $0x150] sm:%s171] %v264
                %v266 = vld [vmem:[%s178 + $0x260] sm:%s171]
                %267 = vst [vmem:[%s179 + $0x158] sm:%s171] %v266
              $region45: #{_lambda_.2} parent=39 // loop_footer
                %s177 = sadd.s32 1, %s173
              $region46: #{_lambda_.2} parent=39 // loop_footer_branch
                %172 = sbr.rel target = $region42
              $region47: #{_lambda_.2} parent=39 // loop_exit
                _
            $region40: #{_lambda_.2} parent=31 // pred_fallthru
              _
          $region32: #{_lambda_.2} parent=27 // pred_fallthru
            _
          %368 = vnop
        $region28: #{_lambda_.2} parent=23 // pred_fallthru
          _
      $region24: #{_lambda_.2} parent=5 // pred_fallthru
        _
      %p369 = scmp.le.s32.totalorder 1, %s9
      %p370 = scmp.lt.s32.totalorder %s9, 3
      %p371 = pnand %p369, %p370
      %p372 = pneg %p371
      // Predicated region
      $region63: #{_lambda_.2} parent=5 // pred_check
        _
      $region64: #{_lambda_.2} parent=5 // pred_check_branch
        %374 = sbr.rel (%p371) target = $region66
      $region65: #{_lambda_.2} parent=5 // pred_region
        %s375 = ssub.s32 %s9, 1
        %s376 = sand.u32 %s36, 1
        %s377 = sand.u32 %s36, 1
        %s378 = smul.addr %s377, 352
        %s379 = scalar_lea.vmem [#allocation3], %s378
        // Predicated region
        $region67: #{_lambda_.2} parent=65 // pred_check
          %p380 = pneg %p49
        $region68: #{_lambda_.2} parent=65 // pred_check_branch
          %382 = sbr.rel (%p380) target = $region70
        $region69: #{_lambda_.2} parent=65 // pred_region
          _
        $region70: #{_lambda_.2} parent=65 // pred_fallthru
          _
        %s383 = sand.u32 %s36, 1
        %s384 = sand.u32 %s36, 1
        %s385 = smul.addr %s384, 352
        %s386 = scalar_lea.vmem [#allocation3], %s385
        %p387 = pneg %p49
        %p388 = pneg %p46
        %s389 = smul.u32 16, %s19
        %p390 = scmp.lt.s32.totalorder %s389, 15
        %s391 = scalar_select %p390, %s389, 15
        %s392 = smul.addr %s391, 8
        %s393 = scalar_lea.vmem %s1, %s392
        %p394 = pneg %p75
        %p395 = pneg %p72
        %p396 = pneg %p96
        %p397 = pneg %p93
        %p398 = pneg %p122
        %p399 = pneg %p119
        %p400 = scmp.lt.s32.totalorder %s18, 1
        %s401 = scalar_select %p400, %s18, 1
        %s402 = smul.addr %s401, 9
        %s403 = smul.addr %s402, 8
        %s404 = scalar_lea.vmem %s3, %s403
        %s405 = smul.u32 16, %s19
        %p406 = scmp.lt.s32.totalorder %s405, 15
        %s407 = scalar_select %p406, %s405, 15
        %s408 = smul.addr %s407, 8
        %s409 = scalar_lea.vmem %s1, %s408
        %s410 = smul.u32 16, %s19
        %p411 = scmp.lt.s32.totalorder %s18, 1
        %s412 = scalar_select %p411, %s18, 1
        %s413 = smul.addr %s412, 9
        %s414 = smul.addr %s413, 8
        %s415 = scalar_lea.vmem %s3, %s414
        %p416 = scmp.eq.s32.totalorder %s19, 0
        // Predicated region
        $region71: #{_lambda_.2} parent=65 // pred_check
          %p417 = pneg %p416
        $region72: #{_lambda_.2} parent=65 // pred_check_branch
          %419 = sbr.rel (%p417) target = $region74
        $region73: #{_lambda_.2} parent=65 // pred_region
          %v420 = vld [vmem:[%s2] sm:$0x1]
          %v422 = vlaneseq
          %v423 = vshrl.u32 %v422, 7
          %v424 = vsub.s32 0, %v423
          %v425 = vrot.slane %v420, %v424
          %427 = vst [vmem:[#allocation2] sm:$0xff] %v425
          %428 = vst [vmem:[#allocation2 + $0x8] sm:$0xff] %v425
          %429 = vst [vmem:[#allocation2 + $0x10] sm:$0xff] %v425
          %430 = vst [vmem:[#allocation2 + $0x18] sm:$0xff] %v425
          %431 = vst [vmem:[#allocation2 + $0x20] sm:$0xff] %v425
          %432 = vst [vmem:[#allocation2 + $0x28] sm:$0xff] %v425
          %433 = vst [vmem:[#allocation2 + $0x30] sm:$0xff] %v425
          %434 = vst [vmem:[#allocation2 + $0x38] sm:$0xff] %v425
          %435 = vst [vmem:[#allocation2 + $0x40] sm:$0xff] %v425
        $region74: #{_lambda_.2} parent=65 // pred_fallthru
          _
        %v436 = vld [vmem:[%s379] sm:$0xff]
        %v437 = vld [vmem:[%s379 + $0x8] sm:$0xff]
        %v438 = vld [vmem:[%s379 + $0x10] sm:$0xff]
        %v439 = vld [vmem:[%s379 + $0x18] sm:$0xff]
        %v440 = vld [vmem:[%s379 + $0x20] sm:$0xff]
        %v441 = vld [vmem:[%s379 + $0x28] sm:$0xff]
        %v442 = vld [vmem:[%s379 + $0x30] sm:$0xff]
        %v443 = vld [vmem:[%s379 + $0x38] sm:$0xff]
        %v444 = vld [vmem:[%s379 + $0x40] sm:$0xff]
        %v445 = vld [vmem:[#allocation2] sm:$0xff]
        %v446 = vld [vmem:[#allocation2 + $0x8] sm:$0xff]
        %v447 = vld [vmem:[#allocation2 + $0x10] sm:$0xff]
        %v448 = vld [vmem:[#allocation2 + $0x18] sm:$0xff]
        %v449 = vld [vmem:[#allocation2 + $0x20] sm:$0xff]
        %v450 = vld [vmem:[#allocation2 + $0x28] sm:$0xff]
        %v451 = vld [vmem:[#allocation2 + $0x30] sm:$0xff]
        %v452 = vld [vmem:[#allocation2 + $0x38] sm:$0xff]
        %v453 = vld [vmem:[#allocation2 + $0x40] sm:$0xff]
        %v454 = vld [vmem:[%s409] sm:$0xff]
        %v455 = vld [vmem:[%s409 + $0x8] sm:$0xff]
        %v456 = vld [vmem:[%s409 + $0x10] sm:$0xff]
        %v457 = vld [vmem:[%s409 + $0x18] sm:$0xff]
        %v458 = vld [vmem:[%s409 + $0x20] sm:$0xff]
        %v459 = vld [vmem:[%s409 + $0x28] sm:$0xff]
        %v460 = vld [vmem:[%s409 + $0x30] sm:$0xff]
        %v461 = vld [vmem:[%s409 + $0x38] sm:$0xff]
        %v462 = vld [vmem:[%s409 + $0x40] sm:$0xff]
        %v463 = vld [vmem:[%s409 + $0x48] sm:$0xff]
        %v464 = vld [vmem:[%s409 + $0x50] sm:$0xff]
        %v465 = vld [vmem:[%s409 + $0x58] sm:$0xff]
        %v466 = vld [vmem:[%s409 + $0x60] sm:$0xff]
        %v467 = vld [vmem:[%s409 + $0x68] sm:$0xff]
        %v468 = vld [vmem:[%s409 + $0x70] sm:$0xff]
        %v469 = vld [vmem:[%s409 + $0x78] sm:$0xff]
        %470 = vmatprep.subr.mxu0 0.0
        %471 = vmatpush1.msra.mxu0 %v469
        %472 = vmatprep.subr.mxu0 0.0
        %473 = vmatpush1.msra.mxu0 %v468
        %474 = vmatprep.subr.mxu0 0.0
        %475 = vmatpush1.msra.mxu0 %v467
        %476 = vmatprep.subr.mxu0 0.0
        %477 = vmatpush1.msra.mxu0 %v466
        %478 = vmatprep.subr.mxu0 0.0
        %479 = vmatpush1.msra.mxu0 %v465
        %480 = vmatprep.subr.mxu0 0.0
        %481 = vmatpush1.msra.mxu0 %v464
        %482 = vmatprep.subr.mxu0 0.0
        %483 = vmatpush1.msra.mxu0 %v463
        %484 = vmatprep.subr.mxu0 0.0
        %485 = vmatpush1.msra.mxu0 %v462
        %486 = vmatprep.subr.mxu0 0.0
        %487 = vmatpush1.msra.mxu0 %v461
        %488 = vmatprep.subr.mxu0 0.0
        %489 = vmatpush1.msra.mxu0 %v460
        %490 = vmatprep.subr.mxu0 0.0
        %491 = vmatpush1.msra.mxu0 %v459
        %492 = vmatprep.subr.mxu0 0.0
        %493 = vmatpush1.msra.mxu0 %v458
        %494 = vmatprep.subr.mxu0 0.0
        %495 = vmatpush1.msra.mxu0 %v457
        %496 = vmatprep.subr.mxu0 0.0
        %497 = vmatpush1.msra.mxu0 %v456
        %498 = vmatprep.subr.mxu0 0.0
        %499 = vmatpush1.msra.mxu0 %v455
        %500 = vmatprep.subr.mxu0 0.0
        %501 = vmatpush1.msra.mxu0 %v454
        %502 = vmatprep.subr.mxu0 0.0
        %503 = vmatpush2.msra.mxu0 0.0
        %504 = vmatprep.subr.mxu0 0.0
        %505 = vmatpush2.msra.mxu0 0.0
        %506 = vmatprep.subr.mxu0 0.0
        %507 = vmatpush2.msra.mxu0 0.0
        %508 = vmatprep.subr.mxu0 0.0
        %509 = vmatpush2.msra.mxu0 0.0
        %510 = vmatprep.subr.mxu0 0.0
        %511 = vmatpush2.msra.mxu0 0.0
        %512 = vmatprep.subr.mxu0 0.0
        %513 = vmatpush2.msra.mxu0 0.0
        %514 = vmatprep.subr.mxu0 0.0
        %515 = vmatpush2.msra.mxu0 0.0
        %516 = vmatprep.subr.mxu0 0.0
        %517 = vmatpush2.msra.mxu0 0.0
        %518 = vmatprep.subr.mxu0 0.0
        %519 = vmatpush2.msra.mxu0 0.0
        %520 = vmatprep.subr.mxu0 0.0
        %521 = vmatpush2.msra.mxu0 0.0
        %522 = vmatprep.subr.mxu0 0.0
        %523 = vmatpush2.msra.mxu0 0.0
        %524 = vmatprep.subr.mxu0 0.0
        %525 = vmatpush2.msra.mxu0 0.0
        %526 = vmatprep.subr.mxu0 0.0
        %527 = vmatpush2.msra.mxu0 0.0
        %528 = vmatprep.subr.mxu0 0.0
        %529 = vmatpush2.msra.mxu0 0.0
        %530 = vmatprep.subr.mxu0 0.0
        %531 = vmatpush2.msra.mxu0 0.0
        %532 = vmatprep.subr.mxu0 0.0
        %533 = vmatpush2.msra.mxu0 0.0
        %534 = vmatprep.mubr.f32.mxu0 0.0
        %535 = vmatmul.mubr.f32.gmra.mxu0 %v436
        %v536 = vpop.f32.mrf.mxu0
        %v537 = vadd.f32 0.0, %v536
        %v538 = vpop.f32.mrf.mxu0
        %539 = vmatprep.mubr.f32.mxu0 0.0
        %540 = vmatmul.mubr.f32.gmra.mxu0 %v437
        %v541 = vpop.f32.mrf.mxu0
        %v542 = vadd.f32 0.0, %v541
        %v543 = vpop.f32.mrf.mxu0
        %544 = vmatprep.mubr.f32.mxu0 0.0
        %545 = vmatmul.mubr.f32.gmra.mxu0 %v438
        %v546 = vpop.f32.mrf.mxu0
        %v547 = vadd.f32 0.0, %v546
        %v548 = vpop.f32.mrf.mxu0
        %549 = vmatprep.mubr.f32.mxu0 0.0
        %550 = vmatmul.mubr.f32.gmra.mxu0 %v439
        %v551 = vpop.f32.mrf.mxu0
        %v552 = vadd.f32 0.0, %v551
        %v553 = vpop.f32.mrf.mxu0
        %554 = vmatprep.mubr.f32.mxu0 0.0
        %555 = vmatmul.mubr.f32.gmra.mxu0 %v440
        %v556 = vpop.f32.mrf.mxu0
        %v557 = vadd.f32 0.0, %v556
        %v558 = vpop.f32.mrf.mxu0
        %559 = vmatprep.mubr.f32.mxu0 0.0
        %560 = vmatmul.mubr.f32.gmra.mxu0 %v441
        %v561 = vpop.f32.mrf.mxu0
        %v562 = vadd.f32 0.0, %v561
        %v563 = vpop.f32.mrf.mxu0
        %564 = vmatprep.mubr.f32.mxu0 0.0
        %565 = vmatmul.mubr.f32.gmra.mxu0 %v442
        %v566 = vpop.f32.mrf.mxu0
        %v567 = vadd.f32 0.0, %v566
        %v568 = vpop.f32.mrf.mxu0
        %569 = vmatprep.mubr.f32.mxu0 0.0
        %570 = vmatmul.mubr.f32.gmra.mxu0 %v443
        %v571 = vpop.f32.mrf.mxu0
        %v572 = vadd.f32 0.0, %v571
        %v573 = vpop.f32.mrf.mxu0
        %574 = vmatprep.mubr.f32.mxu0 0.0
        %575 = vmatmul.mubr.f32.gmra.mxu0 %v444
        %v576 = vpop.f32.mrf.mxu0
        %v577 = vadd.f32 0.0, %v576
        %v578 = vpop.f32.mrf.mxu0
        %579 = vdwg.mxu0
        %v580 = vadd.f32 %v445, %v537
        %v581 = vadd.f32 %v446, %v542
        %v582 = vadd.f32 %v447, %v547
        %v583 = vadd.f32 %v448, %v552
        %v584 = vadd.f32 %v449, %v557
        %v585 = vadd.f32 %v450, %v562
        %v586 = vadd.f32 %v451, %v567
        %v587 = vadd.f32 %v452, %v572
        %v588 = vadd.f32 %v453, %v577
        %589 = vst [vmem:[#allocation2] sm:$0xff] %v580
        %590 = vst [vmem:[#allocation2 + $0x8] sm:$0xff] %v581
        %591 = vst [vmem:[#allocation2 + $0x10] sm:$0xff] %v582
        %592 = vst [vmem:[#allocation2 + $0x18] sm:$0xff] %v583
        %593 = vst [vmem:[#allocation2 + $0x20] sm:$0xff] %v584
        %594 = vst [vmem:[#allocation2 + $0x28] sm:$0xff] %v585
        %595 = vst [vmem:[#allocation2 + $0x30] sm:$0xff] %v586
        %596 = vst [vmem:[#allocation2 + $0x38] sm:$0xff] %v587
        %597 = vst [vmem:[#allocation2 + $0x40] sm:$0xff] %v588
        %s598 = scalar_lea.vmem %s379, 88 [#allocation3]
        %v599 = vld [vmem:[%s598] sm:$0xff]
        %v600 = vld [vmem:[%s598 + $0x8] sm:$0xff]
        %v601 = vld [vmem:[%s598 + $0x10] sm:$0xff]
        %v602 = vld [vmem:[%s598 + $0x18] sm:$0xff]
        %v603 = vld [vmem:[%s598 + $0x20] sm:$0xff]
        %v604 = vld [vmem:[%s598 + $0x28] sm:$0xff]
        %v605 = vld [vmem:[%s598 + $0x30] sm:$0xff]
        %v606 = vld [vmem:[%s598 + $0x38] sm:$0xff]
        %v607 = vld [vmem:[%s598 + $0x40] sm:$0xff]
        %v608 = vld [vmem:[#allocation2] sm:$0xff]
        %v609 = vld [vmem:[#allocation2 + $0x8] sm:$0xff]
        %v610 = vld [vmem:[#allocation2 + $0x10] sm:$0xff]
        %v611 = vld [vmem:[#allocation2 + $0x18] sm:$0xff]
        %v612 = vld [vmem:[#allocation2 + $0x20] sm:$0xff]
        %v613 = vld [vmem:[#allocation2 + $0x28] sm:$0xff]
        %v614 = vld [vmem:[#allocation2 + $0x30] sm:$0xff]
        %v615 = vld [vmem:[#allocation2 + $0x38] sm:$0xff]
        %v616 = vld [vmem:[#allocation2 + $0x40] sm:$0xff]
        %s617 = scalar_lea.vmem %s409, 128
        %v618 = vld [vmem:[%s617] sm:$0xff]
        %v619 = vld [vmem:[%s617 + $0x8] sm:$0xff]
        %v620 = vld [vmem:[%s617 + $0x10] sm:$0xff]
        %v621 = vld [vmem:[%s617 + $0x18] sm:$0xff]
        %v622 = vld [vmem:[%s617 + $0x20] sm:$0xff]
        %v623 = vld [vmem:[%s617 + $0x28] sm:$0xff]
        %v624 = vld [vmem:[%s617 + $0x30] sm:$0xff]
        %v625 = vld [vmem:[%s617 + $0x38] sm:$0xff]
        %v626 = vld [vmem:[%s617 + $0x40] sm:$0xff]
        %v627 = vld [vmem:[%s617 + $0x48] sm:$0xff]
        %v628 = vld [vmem:[%s617 + $0x50] sm:$0xff]
        %v629 = vld [vmem:[%s617 + $0x58] sm:$0xff]
        %v630 = vld [vmem:[%s617 + $0x60] sm:$0xff]
        %v631 = vld [vmem:[%s617 + $0x68] sm:$0xff]
        %v632 = vld [vmem:[%s617 + $0x70] sm:$0xff]
        %v633 = vld [vmem:[%s617 + $0x78] sm:$0xff]
        %634 = vmatprep.subr.mxu0 0.0
        %635 = vmatpush1.msra.mxu0 %v633
        %636 = vmatprep.subr.mxu0 0.0
        %637 = vmatpush1.msra.mxu0 %v632
        %638 = vmatprep.subr.mxu0 0.0
        %639 = vmatpush1.msra.mxu0 %v631
        %640 = vmatprep.subr.mxu0 0.0
        %641 = vmatpush1.msra.mxu0 %v630
        %642 = vmatprep.subr.mxu0 0.0
        %643 = vmatpush1.msra.mxu0 %v629
        %644 = vmatprep.subr.mxu0 0.0
        %645 = vmatpush1.msra.mxu0 %v628
        %646 = vmatprep.subr.mxu0 0.0
        %647 = vmatpush1.msra.mxu0 %v627
        %648 = vmatprep.subr.mxu0 0.0
        %649 = vmatpush1.msra.mxu0 %v626
        %650 = vmatprep.subr.mxu0 0.0
        %651 = vmatpush1.msra.mxu0 %v625
        %652 = vmatprep.subr.mxu0 0.0
        %653 = vmatpush1.msra.mxu0 %v624
        %654 = vmatprep.subr.mxu0 0.0
        %655 = vmatpush1.msra.mxu0 %v623
        %656 = vmatprep.subr.mxu0 0.0
        %657 = vmatpush1.msra.mxu0 %v622
        %658 = vmatprep.subr.mxu0 0.0
        %659 = vmatpush1.msra.mxu0 %v621
        %660 = vmatprep.subr.mxu0 0.0
        %661 = vmatpush1.msra.mxu0 %v620
        %662 = vmatprep.subr.mxu0 0.0
        %663 = vmatpush1.msra.mxu0 %v619
        %664 = vmatprep.subr.mxu0 0.0
        %665 = vmatpush1.msra.mxu0 %v618
        %666 = vmatprep.subr.mxu0 0.0
        %667 = vmatpush2.msra.mxu0 0.0
        %668 = vmatprep.subr.mxu0 0.0
        %669 = vmatpush2.msra.mxu0 0.0
        %670 = vmatprep.subr.mxu0 0.0
        %671 = vmatpush2.msra.mxu0 0.0
        %672 = vmatprep.subr.mxu0 0.0
        %673 = vmatpush2.msra.mxu0 0.0
        %674 = vmatprep.subr.mxu0 0.0
        %675 = vmatpush2.msra.mxu0 0.0
        %676 = vmatprep.subr.mxu0 0.0
        %677 = vmatpush2.msra.mxu0 0.0
        %678 = vmatprep.subr.mxu0 0.0
        %679 = vmatpush2.msra.mxu0 0.0
        %680 = vmatprep.subr.mxu0 0.0
        %681 = vmatpush2.msra.mxu0 0.0
        %682 = vmatprep.subr.mxu0 0.0
        %683 = vmatpush2.msra.mxu0 0.0
        %684 = vmatprep.subr.mxu0 0.0
        %685 = vmatpush2.msra.mxu0 0.0
        %686 = vmatprep.subr.mxu0 0.0
        %687 = vmatpush2.msra.mxu0 0.0
        %688 = vmatprep.subr.mxu0 0.0
        %689 = vmatpush2.msra.mxu0 0.0
        %690 = vmatprep.subr.mxu0 0.0
        %691 = vmatpush2.msra.mxu0 0.0
        %692 = vmatprep.subr.mxu0 0.0
        %693 = vmatpush2.msra.mxu0 0.0
        %694 = vmatprep.subr.mxu0 0.0
        %695 = vmatpush2.msra.mxu0 0.0
        %696 = vmatprep.subr.mxu0 0.0
        %697 = vmatpush2.msra.mxu0 0.0
        %698 = vmatprep.mubr.f32.mxu0 0.0
        %699 = vmatmul.mubr.f32.gmra.mxu0 %v599
        %v700 = vpop.f32.mrf.mxu0
        %v701 = vadd.f32 0.0, %v700
        %v702 = vpop.f32.mrf.mxu0
        %703 = vmatprep.mubr.f32.mxu0 0.0
        %704 = vmatmul.mubr.f32.gmra.mxu0 %v600
        %v705 = vpop.f32.mrf.mxu0
        %v706 = vadd.f32 0.0, %v705
        %v707 = vpop.f32.mrf.mxu0
        %708 = vmatprep.mubr.f32.mxu0 0.0
        %709 = vmatmul.mubr.f32.gmra.mxu0 %v601
        %v710 = vpop.f32.mrf.mxu0
        %v711 = vadd.f32 0.0, %v710
        %v712 = vpop.f32.mrf.mxu0
        %713 = vmatprep.mubr.f32.mxu0 0.0
        %714 = vmatmul.mubr.f32.gmra.mxu0 %v602
        %v715 = vpop.f32.mrf.mxu0
        %v716 = vadd.f32 0.0, %v715
        %v717 = vpop.f32.mrf.mxu0
        %718 = vmatprep.mubr.f32.mxu0 0.0
        %719 = vmatmul.mubr.f32.gmra.mxu0 %v603
        %v720 = vpop.f32.mrf.mxu0
        %v721 = vadd.f32 0.0, %v720
        %v722 = vpop.f32.mrf.mxu0
        %723 = vmatprep.mubr.f32.mxu0 0.0
        %724 = vmatmul.mubr.f32.gmra.mxu0 %v604
        %v725 = vpop.f32.mrf.mxu0
        %v726 = vadd.f32 0.0, %v725
        %v727 = vpop.f32.mrf.mxu0
        %728 = vmatprep.mubr.f32.mxu0 0.0
        %729 = vmatmul.mubr.f32.gmra.mxu0 %v605
        %v730 = vpop.f32.mrf.mxu0
        %v731 = vadd.f32 0.0, %v730
        %v732 = vpop.f32.mrf.mxu0
        %733 = vmatprep.mubr.f32.mxu0 0.0
        %734 = vmatmul.mubr.f32.gmra.mxu0 %v606
        %v735 = vpop.f32.mrf.mxu0
        %v736 = vadd.f32 0.0, %v735
        %v737 = vpop.f32.mrf.mxu0
        %738 = vmatprep.mubr.f32.mxu0 0.0
        %739 = vmatmul.mubr.f32.gmra.mxu0 %v607
        %v740 = vpop.f32.mrf.mxu0
        %v741 = vadd.f32 0.0, %v740
        %v742 = vpop.f32.mrf.mxu0
        %743 = vdwg.mxu0
        %v744 = vadd.f32 %v608, %v701
        %v745 = vadd.f32 %v609, %v706
        %v746 = vadd.f32 %v610, %v711
        %v747 = vadd.f32 %v611, %v716
        %v748 = vadd.f32 %v612, %v721
        %v749 = vadd.f32 %v613, %v726
        %v750 = vadd.f32 %v614, %v731
        %v751 = vadd.f32 %v615, %v736
        %v752 = vadd.f32 %v616, %v741
        %753 = vst [vmem:[#allocation2] sm:$0xff] %v744
        %754 = vst [vmem:[#allocation2 + $0x8] sm:$0xff] %v745
        %755 = vst [vmem:[#allocation2 + $0x10] sm:$0xff] %v746
        %756 = vst [vmem:[#allocation2 + $0x18] sm:$0xff] %v747
        %757 = vst [vmem:[#allocation2 + $0x20] sm:$0xff] %v748
        %758 = vst [vmem:[#allocation2 + $0x28] sm:$0xff] %v749
        %759 = vst [vmem:[#allocation2 + $0x30] sm:$0xff] %v750
        %760 = vst [vmem:[#allocation2 + $0x38] sm:$0xff] %v751
        %761 = vst [vmem:[#allocation2 + $0x40] sm:$0xff] %v752
        %v762 = vld [vmem:[%s379 + $0x1] sm:$0xff]
        %v763 = vld [vmem:[%s379 + $0x9] sm:$0xff]
        %v764 = vld [vmem:[%s379 + $0x11] sm:$0xff]
        %v765 = vld [vmem:[%s379 + $0x19] sm:$0xff]
        %v766 = vld [vmem:[%s379 + $0x21] sm:$0xff]
        %v767 = vld [vmem:[%s379 + $0x29] sm:$0xff]
        %v768 = vld [vmem:[%s379 + $0x31] sm:$0xff]
        %v769 = vld [vmem:[%s379 + $0x39] sm:$0xff]
        %v770 = vld [vmem:[%s379 + $0x41] sm:$0xff]
        %v771 = vld [vmem:[#allocation2] sm:$0xff]
        %v772 = vld [vmem:[#allocation2 + $0x8] sm:$0xff]
        %v773 = vld [vmem:[#allocation2 + $0x10] sm:$0xff]
        %v774 = vld [vmem:[#allocation2 + $0x18] sm:$0xff]
        %v775 = vld [vmem:[#allocation2 + $0x20] sm:$0xff]
        %v776 = vld [vmem:[#allocation2 + $0x28] sm:$0xff]
        %v777 = vld [vmem:[#allocation2 + $0x30] sm:$0xff]
        %v778 = vld [vmem:[#allocation2 + $0x38] sm:$0xff]
        %v779 = vld [vmem:[#allocation2 + $0x40] sm:$0xff]
        %s780 = scalar_lea.vmem %s409, 256
        %v781 = vld [vmem:[%s780] sm:$0xff]
        %v782 = vld [vmem:[%s780 + $0x8] sm:$0xff]
        %v783 = vld [vmem:[%s780 + $0x10] sm:$0xff]
        %v784 = vld [vmem:[%s780 + $0x18] sm:$0xff]
        %v785 = vld [vmem:[%s780 + $0x20] sm:$0xff]
        %v786 = vld [vmem:[%s780 + $0x28] sm:$0xff]
        %v787 = vld [vmem:[%s780 + $0x30] sm:$0xff]
        %v788 = vld [vmem:[%s780 + $0x38] sm:$0xff]
        %v789 = vld [vmem:[%s780 + $0x40] sm:$0xff]
        %v790 = vld [vmem:[%s780 + $0x48] sm:$0xff]
        %v791 = vld [vmem:[%s780 + $0x50] sm:$0xff]
        %v792 = vld [vmem:[%s780 + $0x58] sm:$0xff]
        %v793 = vld [vmem:[%s780 + $0x60] sm:$0xff]
        %v794 = vld [vmem:[%s780 + $0x68] sm:$0xff]
        %v795 = vld [vmem:[%s780 + $0x70] sm:$0xff]
        %v796 = vld [vmem:[%s780 + $0x78] sm:$0xff]
        %797 = vmatprep.subr.mxu0 0.0
        %798 = vmatpush1.msra.mxu0 %v796
        %799 = vmatprep.subr.mxu0 0.0
        %800 = vmatpush1.msra.mxu0 %v795
        %801 = vmatprep.subr.mxu0 0.0
        %802 = vmatpush1.msra.mxu0 %v794
        %803 = vmatprep.subr.mxu0 0.0
        %804 = vmatpush1.msra.mxu0 %v793
        %805 = vmatprep.subr.mxu0 0.0
        %806 = vmatpush1.msra.mxu0 %v792
        %807 = vmatprep.subr.mxu0 0.0
        %808 = vmatpush1.msra.mxu0 %v791
        %809 = vmatprep.subr.mxu0 0.0
        %810 = vmatpush1.msra.mxu0 %v790
        %811 = vmatprep.subr.mxu0 0.0
        %812 = vmatpush1.msra.mxu0 %v789
        %813 = vmatprep.subr.mxu0 0.0
        %814 = vmatpush1.msra.mxu0 %v788
        %815 = vmatprep.subr.mxu0 0.0
        %816 = vmatpush1.msra.mxu0 %v787
        %817 = vmatprep.subr.mxu0 0.0
        %818 = vmatpush1.msra.mxu0 %v786
        %819 = vmatprep.subr.mxu0 0.0
        %820 = vmatpush1.msra.mxu0 %v785
        %821 = vmatprep.subr.mxu0 0.0
        %822 = vmatpush1.msra.mxu0 %v784
        %823 = vmatprep.subr.mxu0 0.0
        %824 = vmatpush1.msra.mxu0 %v783
        %825 = vmatprep.subr.mxu0 0.0
        %826 = vmatpush1.msra.mxu0 %v782
        %827 = vmatprep.subr.mxu0 0.0
        %828 = vmatpush1.msra.mxu0 %v781
        %829 = vmatprep.subr.mxu0 0.0
        %830 = vmatpush2.msra.mxu0 0.0
        %831 = vmatprep.subr.mxu0 0.0
        %832 = vmatpush2.msra.mxu0 0.0
        %833 = vmatprep.subr.mxu0 0.0
        %834 = vmatpush2.msra.mxu0 0.0
        %835 = vmatprep.subr.mxu0 0.0
        %836 = vmatpush2.msra.mxu0 0.0
        %837 = vmatprep.subr.mxu0 0.0
        %838 = vmatpush2.msra.mxu0 0.0
        %839 = vmatprep.subr.mxu0 0.0
        %840 = vmatpush2.msra.mxu0 0.0
        %841 = vmatprep.subr.mxu0 0.0
        %842 = vmatpush2.msra.mxu0 0.0
        %843 = vmatprep.subr.mxu0 0.0
        %844 = vmatpush2.msra.mxu0 0.0
        %845 = vmatprep.subr.mxu0 0.0
        %846 = vmatpush2.msra.mxu0 0.0
        %847 = vmatprep.subr.mxu0 0.0
        %848 = vmatpush2.msra.mxu0 0.0
        %849 = vmatprep.subr.mxu0 0.0
        %850 = vmatpush2.msra.mxu0 0.0
        %851 = vmatprep.subr.mxu0 0.0
        %852 = vmatpush2.msra.mxu0 0.0
        %853 = vmatprep.subr.mxu0 0.0
        %854 = vmatpush2.msra.mxu0 0.0
        %855 = vmatprep.subr.mxu0 0.0
        %856 = vmatpush2.msra.mxu0 0.0
        %857 = vmatprep.subr.mxu0 0.0
        %858 = vmatpush2.msra.mxu0 0.0
        %859 = vmatprep.subr.mxu0 0.0
        %860 = vmatpush2.msra.mxu0 0.0
        %861 = vmatprep.mubr.f32.mxu0 0.0
        %862 = vmatmul.mubr.f32.gmra.mxu0 %v762
        %v863 = vpop.f32.mrf.mxu0
        %v864 = vadd.f32 0.0, %v863
        %v865 = vpop.f32.mrf.mxu0
        %866 = vmatprep.mubr.f32.mxu0 0.0
        %867 = vmatmul.mubr.f32.gmra.mxu0 %v763
        %v868 = vpop.f32.mrf.mxu0
        %v869 = vadd.f32 0.0, %v868
        %v870 = vpop.f32.mrf.mxu0
        %871 = vmatprep.mubr.f32.mxu0 0.0
        %872 = vmatmul.mubr.f32.gmra.mxu0 %v764
        %v873 = vpop.f32.mrf.mxu0
        %v874 = vadd.f32 0.0, %v873
        %v875 = vpop.f32.mrf.mxu0
        %876 = vmatprep.mubr.f32.mxu0 0.0
        %877 = vmatmul.mubr.f32.gmra.mxu0 %v765
        %v878 = vpop.f32.mrf.mxu0
        %v879 = vadd.f32 0.0, %v878
        %v880 = vpop.f32.mrf.mxu0
        %881 = vmatprep.mubr.f32.mxu0 0.0
        %882 = vmatmul.mubr.f32.gmra.mxu0 %v766
        %v883 = vpop.f32.mrf.mxu0
        %v884 = vadd.f32 0.0, %v883
        %v885 = vpop.f32.mrf.mxu0
        %886 = vmatprep.mubr.f32.mxu0 0.0
        %887 = vmatmul.mubr.f32.gmra.mxu0 %v767
        %v888 = vpop.f32.mrf.mxu0
        %v889 = vadd.f32 0.0, %v888
        %v890 = vpop.f32.mrf.mxu0
        %891 = vmatprep.mubr.f32.mxu0 0.0
        %892 = vmatmul.mubr.f32.gmra.mxu0 %v768
        %v893 = vpop.f32.mrf.mxu0
        %v894 = vadd.f32 0.0, %v893
        %v895 = vpop.f32.mrf.mxu0
        %896 = vmatprep.mubr.f32.mxu0 0.0
        %897 = vmatmul.mubr.f32.gmra.mxu0 %v769
        %v898 = vpop.f32.mrf.mxu0
        %v899 = vadd.f32 0.0, %v898
        %v900 = vpop.f32.mrf.mxu0
        %901 = vmatprep.mubr.f32.mxu0 0.0
        %902 = vmatmul.mubr.f32.gmra.mxu0 %v770
        %v903 = vpop.f32.mrf.mxu0
        %v904 = vadd.f32 0.0, %v903
        %v905 = vpop.f32.mrf.mxu0
        %906 = vdwg.mxu0
        %v907 = vadd.f32 %v771, %v864
        %v908 = vadd.f32 %v772, %v869
        %v909 = vadd.f32 %v773, %v874
        %v910 = vadd.f32 %v774, %v879
        %v911 = vadd.f32 %v775, %v884
        %v912 = vadd.f32 %v776, %v889
        %v913 = vadd.f32 %v777, %v894
        %v914 = vadd.f32 %v778, %v899
        %v915 = vadd.f32 %v779, %v904
        %916 = vst [vmem:[#allocation2] sm:$0xff] %v907
        %917 = vst [vmem:[#allocation2 + $0x8] sm:$0xff] %v908
        %918 = vst [vmem:[#allocation2 + $0x10] sm:$0xff] %v909
        %919 = vst [vmem:[#allocation2 + $0x18] sm:$0xff] %v910
        %920 = vst [vmem:[#allocation2 + $0x20] sm:$0xff] %v911
        %921 = vst [vmem:[#allocation2 + $0x28] sm:$0xff] %v912
        %922 = vst [vmem:[#allocation2 + $0x30] sm:$0xff] %v913
        %923 = vst [vmem:[#allocation2 + $0x38] sm:$0xff] %v914
        %924 = vst [vmem:[#allocation2 + $0x40] sm:$0xff] %v915
        %s925 = scalar_lea.vmem %s379, 176 [#allocation3]
        %v926 = vld [vmem:[%s925] sm:$0xff]
        %v927 = vld [vmem:[%s925 + $0x8] sm:$0xff]
        %v928 = vld [vmem:[%s925 + $0x10] sm:$0xff]
        %v929 = vld [vmem:[%s925 + $0x18] sm:$0xff]
        %v930 = vld [vmem:[%s925 + $0x20] sm:$0xff]
        %v931 = vld [vmem:[%s925 + $0x28] sm:$0xff]
        %v932 = vld [vmem:[%s925 + $0x30] sm:$0xff]
        %v933 = vld [vmem:[%s925 + $0x38] sm:$0xff]
        %v934 = vld [vmem:[%s925 + $0x40] sm:$0xff]
        %v935 = vld [vmem:[#allocation2] sm:$0xff]
        %v936 = vld [vmem:[#allocation2 + $0x8] sm:$0xff]
        %v937 = vld [vmem:[#allocation2 + $0x10] sm:$0xff]
        %v938 = vld [vmem:[#allocation2 + $0x18] sm:$0xff]
        %v939 = vld [vmem:[#allocation2 + $0x20] sm:$0xff]
        %v940 = vld [vmem:[#allocation2 + $0x28] sm:$0xff]
        %v941 = vld [vmem:[#allocation2 + $0x30] sm:$0xff]
        %v942 = vld [vmem:[#allocation2 + $0x38] sm:$0xff]
        %v943 = vld [vmem:[#allocation2 + $0x40] sm:$0xff]
        %s944 = scalar_lea.vmem %s409, 384
        %v945 = vld [vmem:[%s944] sm:$0xff]
        %v946 = vld [vmem:[%s944 + $0x8] sm:$0xff]
        %v947 = vld [vmem:[%s944 + $0x10] sm:$0xff]
        %v948 = vld [vmem:[%s944 + $0x18] sm:$0xff]
        %v949 = vld [vmem:[%s944 + $0x20] sm:$0xff]
        %v950 = vld [vmem:[%s944 + $0x28] sm:$0xff]
        %v951 = vld [vmem:[%s944 + $0x30] sm:$0xff]
        %v952 = vld [vmem:[%s944 + $0x38] sm:$0xff]
        %v953 = vld [vmem:[%s944 + $0x40] sm:$0xff]
        %v954 = vld [vmem:[%s944 + $0x48] sm:$0xff]
        %v955 = vld [vmem:[%s944 + $0x50] sm:$0xff]
        %v956 = vld [vmem:[%s944 + $0x58] sm:$0xff]
        %v957 = vld [vmem:[%s944 + $0x60] sm:$0xff]
        %v958 = vld [vmem:[%s944 + $0x68] sm:$0xff]
        %v959 = vld [vmem:[%s944 + $0x70] sm:$0xff]
        %v960 = vld [vmem:[%s944 + $0x78] sm:$0xff]
        %961 = vmatprep.subr.mxu0 0.0
        %962 = vmatpush1.msra.mxu0 %v960
        %963 = vmatprep.subr.mxu0 0.0
        %964 = vmatpush1.msra.mxu0 %v959
        %965 = vmatprep.subr.mxu0 0.0
        %966 = vmatpush1.msra.mxu0 %v958
        %967 = vmatprep.subr.mxu0 0.0
        %968 = vmatpush1.msra.mxu0 %v957
        %969 = vmatprep.subr.mxu0 0.0
        %970 = vmatpush1.msra.mxu0 %v956
        %971 = vmatprep.subr.mxu0 0.0
        %972 = vmatpush1.msra.mxu0 %v955
        %973 = vmatprep.subr.mxu0 0.0
        %974 = vmatpush1.msra.mxu0 %v954
        %975 = vmatprep.subr.mxu0 0.0
        %976 = vmatpush1.msra.mxu0 %v953
        %977 = vmatprep.subr.mxu0 0.0
        %978 = vmatpush1.msra.mxu0 %v952
        %979 = vmatprep.subr.mxu0 0.0
        %980 = vmatpush1.msra.mxu0 %v951
        %981 = vmatprep.subr.mxu0 0.0
        %982 = vmatpush1.msra.mxu0 %v950
        %983 = vmatprep.subr.mxu0 0.0
        %984 = vmatpush1.msra.mxu0 %v949
        %985 = vmatprep.subr.mxu0 0.0
        %986 = vmatpush1.msra.mxu0 %v948
        %987 = vmatprep.subr.mxu0 0.0
        %988 = vmatpush1.msra.mxu0 %v947
        %989 = vmatprep.subr.mxu0 0.0
        %990 = vmatpush1.msra.mxu0 %v946
        %991 = vmatprep.subr.mxu0 0.0
        %992 = vmatpush1.msra.mxu0 %v945
        %993 = vmatprep.subr.mxu0 0.0
        %994 = vmatpush2.msra.mxu0 0.0
        %995 = vmatprep.subr.mxu0 0.0
        %996 = vmatpush2.msra.mxu0 0.0
        %997 = vmatprep.subr.mxu0 0.0
        %998 = vmatpush2.msra.mxu0 0.0
        %999 = vmatprep.subr.mxu0 0.0
        %1000 = vmatpush2.msra.mxu0 0.0
        %1001 = vmatprep.subr.mxu0 0.0
        %1002 = vmatpush2.msra.mxu0 0.0
        %1003 = vmatprep.subr.mxu0 0.0
        %1004 = vmatpush2.msra.mxu0 0.0
        %1005 = vmatprep.subr.mxu0 0.0
        %1006 = vmatpush2.msra.mxu0 0.0
        %1007 = vmatprep.subr.mxu0 0.0
        %1008 = vmatpush2.msra.mxu0 0.0
        %1009 = vmatprep.subr.mxu0 0.0
        %1010 = vmatpush2.msra.mxu0 0.0
        %1011 = vmatprep.subr.mxu0 0.0
        %1012 = vmatpush2.msra.mxu0 0.0
        %1013 = vmatprep.subr.mxu0 0.0
        %1014 = vmatpush2.msra.mxu0 0.0
        %1015 = vmatprep.subr.mxu0 0.0
        %1016 = vmatpush2.msra.mxu0 0.0
        %1017 = vmatprep.subr.mxu0 0.0
        %1018 = vmatpush2.msra.mxu0 0.0
        %1019 = vmatprep.subr.mxu0 0.0
        %1020 = vmatpush2.msra.mxu0 0.0
        %1021 = vmatprep.subr.mxu0 0.0
        %1022 = vmatpush2.msra.mxu0 0.0
        %1023 = vmatprep.subr.mxu0 0.0
        %1024 = vmatpush2.msra.mxu0 0.0
        %1025 = vmatprep.mubr.f32.mxu0 0.0
        %1026 = vmatmul.mubr.f32.gmra.mxu0 %v926
        %v1027 = vpop.f32.mrf.mxu0
        %v1028 = vadd.f32 0.0, %v1027
        %v1029 = vpop.f32.mrf.mxu0
        %1030 = vmatprep.mubr.f32.mxu0 0.0
        %1031 = vmatmul.mubr.f32.gmra.mxu0 %v927
        %v1032 = vpop.f32.mrf.mxu0
        %v1033 = vadd.f32 0.0, %v1032
        %v1034 = vpop.f32.mrf.mxu0
        %1035 = vmatprep.mubr.f32.mxu0 0.0
        %1036 = vmatmul.mubr.f32.gmra.mxu0 %v928
        %v1037 = vpop.f32.mrf.mxu0
        %v1038 = vadd.f32 0.0, %v1037
        %v1039 = vpop.f32.mrf.mxu0
        %1040 = vmatprep.mubr.f32.mxu0 0.0
        %1041 = vmatmul.mubr.f32.gmra.mxu0 %v929
        %v1042 = vpop.f32.mrf.mxu0
        %v1043 = vadd.f32 0.0, %v1042
        %v1044 = vpop.f32.mrf.mxu0
        %1045 = vmatprep.mubr.f32.mxu0 0.0
        %1046 = vmatmul.mubr.f32.gmra.mxu0 %v930
        %v1047 = vpop.f32.mrf.mxu0
        %v1048 = vadd.f32 0.0, %v1047
        %v1049 = vpop.f32.mrf.mxu0
        %1050 = vmatprep.mubr.f32.mxu0 0.0
        %1051 = vmatmul.mubr.f32.gmra.mxu0 %v931
        %v1052 = vpop.f32.mrf.mxu0
        %v1053 = vadd.f32 0.0, %v1052
        %v1054 = vpop.f32.mrf.mxu0
        %1055 = vmatprep.mubr.f32.mxu0 0.0
        %1056 = vmatmul.mubr.f32.gmra.mxu0 %v932
        %v1057 = vpop.f32.mrf.mxu0
        %v1058 = vadd.f32 0.0, %v1057
        %v1059 = vpop.f32.mrf.mxu0
        %1060 = vmatprep.mubr.f32.mxu0 0.0
        %1061 = vmatmul.mubr.f32.gmra.mxu0 %v933
        %v1062 = vpop.f32.mrf.mxu0
        %v1063 = vadd.f32 0.0, %v1062
        %v1064 = vpop.f32.mrf.mxu0
        %1065 = vmatprep.mubr.f32.mxu0 0.0
        %1066 = vmatmul.mubr.f32.gmra.mxu0 %v934
        %v1067 = vpop.f32.mrf.mxu0
        %v1068 = vadd.f32 0.0, %v1067
        %v1069 = vpop.f32.mrf.mxu0
        %1070 = vdwg.mxu0
        %v1071 = vadd.f32 %v935, %v1028
        %v1072 = vadd.f32 %v936, %v1033
        %v1073 = vadd.f32 %v937, %v1038
        %v1074 = vadd.f32 %v938, %v1043
        %v1075 = vadd.f32 %v939, %v1048
        %v1076 = vadd.f32 %v940, %v1053
        %v1077 = vadd.f32 %v941, %v1058
        %v1078 = vadd.f32 %v942, %v1063
        %v1079 = vadd.f32 %v943, %v1068
        %1080 = vst [vmem:[#allocation2] sm:$0xff] %v1071
        %1081 = vst [vmem:[#allocation2 + $0x8] sm:$0xff] %v1072
        %1082 = vst [vmem:[#allocation2 + $0x10] sm:$0xff] %v1073
        %1083 = vst [vmem:[#allocation2 + $0x18] sm:$0xff] %v1074
        %1084 = vst [vmem:[#allocation2 + $0x20] sm:$0xff] %v1075
        %1085 = vst [vmem:[#allocation2 + $0x28] sm:$0xff] %v1076
        %1086 = vst [vmem:[#allocation2 + $0x30] sm:$0xff] %v1077
        %1087 = vst [vmem:[#allocation2 + $0x38] sm:$0xff] %v1078
        %1088 = vst [vmem:[#allocation2 + $0x40] sm:$0xff] %v1079
        %s1089 = scalar_lea.vmem %s379, 264 [#allocation3]
        %v1090 = vld [vmem:[%s1089] sm:$0xff]
        %v1091 = vld [vmem:[%s1089 + $0x8] sm:$0xff]
        %v1092 = vld [vmem:[%s1089 + $0x10] sm:$0xff]
        %v1093 = vld [vmem:[%s1089 + $0x18] sm:$0xff]
        %v1094 = vld [vmem:[%s1089 + $0x20] sm:$0xff]
        %v1095 = vld [vmem:[%s1089 + $0x28] sm:$0xff]
        %v1096 = vld [vmem:[%s1089 + $0x30] sm:$0xff]
        %v1097 = vld [vmem:[%s1089 + $0x38] sm:$0xff]
        %v1098 = vld [vmem:[%s1089 + $0x40] sm:$0xff]
        %v1099 = vld [vmem:[#allocation2] sm:$0xff]
        %v1100 = vld [vmem:[#allocation2 + $0x8] sm:$0xff]
        %v1101 = vld [vmem:[#allocation2 + $0x10] sm:$0xff]
        %v1102 = vld [vmem:[#allocation2 + $0x18] sm:$0xff]
        %v1103 = vld [vmem:[#allocation2 + $0x20] sm:$0xff]
        %v1104 = vld [vmem:[#allocation2 + $0x28] sm:$0xff]
        %v1105 = vld [vmem:[#allocation2 + $0x30] sm:$0xff]
        %v1106 = vld [vmem:[#allocation2 + $0x38] sm:$0xff]
        %v1107 = vld [vmem:[#allocation2 + $0x40] sm:$0xff]
        %s1108 = scalar_lea.vmem %s409, 512
        %v1109 = vld [vmem:[%s1108] sm:$0xff]
        %v1110 = vld [vmem:[%s1108 + $0x8] sm:$0xff]
        %v1111 = vld [vmem:[%s1108 + $0x10] sm:$0xff]
        %v1112 = vld [vmem:[%s1108 + $0x18] sm:$0xff]
        %v1113 = vld [vmem:[%s1108 + $0x20] sm:$0xff]
        %v1114 = vld [vmem:[%s1108 + $0x28] sm:$0xff]
        %v1115 = vld [vmem:[%s1108 + $0x30] sm:$0xff]
        %v1116 = vld [vmem:[%s1108 + $0x38] sm:$0xff]
        %v1117 = vld [vmem:[%s1108 + $0x40] sm:$0xff]
        %v1118 = vld [vmem:[%s1108 + $0x48] sm:$0xff]
        %v1119 = vld [vmem:[%s1108 + $0x50] sm:$0xff]
        %v1120 = vld [vmem:[%s1108 + $0x58] sm:$0xff]
        %v1121 = vld [vmem:[%s1108 + $0x60] sm:$0xff]
        %v1122 = vld [vmem:[%s1108 + $0x68] sm:$0xff]
        %v1123 = vld [vmem:[%s1108 + $0x70] sm:$0xff]
        %v1124 = vld [vmem:[%s1108 + $0x78] sm:$0xff]
        %1125 = vmatprep.subr.mxu0 0.0
        %1126 = vmatpush1.msra.mxu0 %v1124
        %1127 = vmatprep.subr.mxu0 0.0
        %1128 = vmatpush1.msra.mxu0 %v1123
        %1129 = vmatprep.subr.mxu0 0.0
        %1130 = vmatpush1.msra.mxu0 %v1122
        %1131 = vmatprep.subr.mxu0 0.0
        %1132 = vmatpush1.msra.mxu0 %v1121
        %1133 = vmatprep.subr.mxu0 0.0
        %1134 = vmatpush1.msra.mxu0 %v1120
        %1135 = vmatprep.subr.mxu0 0.0
        %1136 = vmatpush1.msra.mxu0 %v1119
        %1137 = vmatprep.subr.mxu0 0.0
        %1138 = vmatpush1.msra.mxu0 %v1118
        %1139 = vmatprep.subr.mxu0 0.0
        %1140 = vmatpush1.msra.mxu0 %v1117
        %1141 = vmatprep.subr.mxu0 0.0
        %1142 = vmatpush1.msra.mxu0 %v1116
        %1143 = vmatprep.subr.mxu0 0.0
        %1144 = vmatpush1.msra.mxu0 %v1115
        %1145 = vmatprep.subr.mxu0 0.0
        %1146 = vmatpush1.msra.mxu0 %v1114
        %1147 = vmatprep.subr.mxu0 0.0
        %1148 = vmatpush1.msra.mxu0 %v1113
        %1149 = vmatprep.subr.mxu0 0.0
        %1150 = vmatpush1.msra.mxu0 %v1112
        %1151 = vmatprep.subr.mxu0 0.0
        %1152 = vmatpush1.msra.mxu0 %v1111
        %1153 = vmatprep.subr.mxu0 0.0
        %1154 = vmatpush1.msra.mxu0 %v1110
        %1155 = vmatprep.subr.mxu0 0.0
        %1156 = vmatpush1.msra.mxu0 %v1109
        %1157 = vmatprep.subr.mxu0 0.0
        %1158 = vmatpush2.msra.mxu0 0.0
        %1159 = vmatprep.subr.mxu0 0.0
        %1160 = vmatpush2.msra.mxu0 0.0
        %1161 = vmatprep.subr.mxu0 0.0
        %1162 = vmatpush2.msra.mxu0 0.0
        %1163 = vmatprep.subr.mxu0 0.0
        %1164 = vmatpush2.msra.mxu0 0.0
        %1165 = vmatprep.subr.mxu0 0.0
        %1166 = vmatpush2.msra.mxu0 0.0
        %1167 = vmatprep.subr.mxu0 0.0
        %1168 = vmatpush2.msra.mxu0 0.0
        %1169 = vmatprep.subr.mxu0 0.0
        %1170 = vmatpush2.msra.mxu0 0.0
        %1171 = vmatprep.subr.mxu0 0.0
        %1172 = vmatpush2.msra.mxu0 0.0
        %1173 = vmatprep.subr.mxu0 0.0
        %1174 = vmatpush2.msra.mxu0 0.0
        %1175 = vmatprep.subr.mxu0 0.0
        %1176 = vmatpush2.msra.mxu0 0.0
        %1177 = vmatprep.subr.mxu0 0.0
        %1178 = vmatpush2.msra.mxu0 0.0
        %1179 = vmatprep.subr.mxu0 0.0
        %1180 = vmatpush2.msra.mxu0 0.0
        %1181 = vmatprep.subr.mxu0 0.0
        %1182 = vmatpush2.msra.mxu0 0.0
        %1183 = vmatprep.subr.mxu0 0.0
        %1184 = vmatpush2.msra.mxu0 0.0
        %1185 = vmatprep.subr.mxu0 0.0
        %1186 = vmatpush2.msra.mxu0 0.0
        %1187 = vmatprep.subr.mxu0 0.0
        %1188 = vmatpush2.msra.mxu0 0.0
        %1189 = vmatprep.mubr.f32.mxu0 0.0
        %1190 = vmatmul.mubr.f32.gmra.mxu0 %v1090
        %v1191 = vpop.f32.mrf.mxu0
        %v1192 = vadd.f32 0.0, %v1191
        %v1193 = vpop.f32.mrf.mxu0
        %1194 = vmatprep.mubr.f32.mxu0 0.0
        %1195 = vmatmul.mubr.f32.gmra.mxu0 %v1091
        %v1196 = vpop.f32.mrf.mxu0
        %v1197 = vadd.f32 0.0, %v1196
        %v1198 = vpop.f32.mrf.mxu0
        %1199 = vmatprep.mubr.f32.mxu0 0.0
        %1200 = vmatmul.mubr.f32.gmra.mxu0 %v1092
        %v1201 = vpop.f32.mrf.mxu0
        %v1202 = vadd.f32 0.0, %v1201
        %v1203 = vpop.f32.mrf.mxu0
        %1204 = vmatprep.mubr.f32.mxu0 0.0
        %1205 = vmatmul.mubr.f32.gmra.mxu0 %v1093
        %v1206 = vpop.f32.mrf.mxu0
        %v1207 = vadd.f32 0.0, %v1206
        %v1208 = vpop.f32.mrf.mxu0
        %1209 = vmatprep.mubr.f32.mxu0 0.0
        %1210 = vmatmul.mubr.f32.gmra.mxu0 %v1094
        %v1211 = vpop.f32.mrf.mxu0
        %v1212 = vadd.f32 0.0, %v1211
        %v1213 = vpop.f32.mrf.mxu0
        %1214 = vmatprep.mubr.f32.mxu0 0.0
        %1215 = vmatmul.mubr.f32.gmra.mxu0 %v1095
        %v1216 = vpop.f32.mrf.mxu0
        %v1217 = vadd.f32 0.0, %v1216
        %v1218 = vpop.f32.mrf.mxu0
        %1219 = vmatprep.mubr.f32.mxu0 0.0
        %1220 = vmatmul.mubr.f32.gmra.mxu0 %v1096
        %v1221 = vpop.f32.mrf.mxu0
        %v1222 = vadd.f32 0.0, %v1221
        %v1223 = vpop.f32.mrf.mxu0
        %1224 = vmatprep.mubr.f32.mxu0 0.0
        %1225 = vmatmul.mubr.f32.gmra.mxu0 %v1097
        %v1226 = vpop.f32.mrf.mxu0
        %v1227 = vadd.f32 0.0, %v1226
        %v1228 = vpop.f32.mrf.mxu0
        %1229 = vmatprep.mubr.f32.mxu0 0.0
        %1230 = vmatmul.mubr.f32.gmra.mxu0 %v1098
        %v1231 = vpop.f32.mrf.mxu0
        %v1232 = vadd.f32 0.0, %v1231
        %v1233 = vpop.f32.mrf.mxu0
        %1234 = vdwg.mxu0
        %v1235 = vadd.f32 %v1099, %v1192
        %v1236 = vadd.f32 %v1100, %v1197
        %v1237 = vadd.f32 %v1101, %v1202
        %v1238 = vadd.f32 %v1102, %v1207
        %v1239 = vadd.f32 %v1103, %v1212
        %v1240 = vadd.f32 %v1104, %v1217
        %v1241 = vadd.f32 %v1105, %v1222
        %v1242 = vadd.f32 %v1106, %v1227
        %v1243 = vadd.f32 %v1107, %v1232
        %1244 = vst [vmem:[#allocation2] sm:$0xff] %v1235
        %1245 = vst [vmem:[#allocation2 + $0x8] sm:$0xff] %v1236
        %1246 = vst [vmem:[#allocation2 + $0x10] sm:$0xff] %v1237
        %1247 = vst [vmem:[#allocation2 + $0x18] sm:$0xff] %v1238
        %1248 = vst [vmem:[#allocation2 + $0x20] sm:$0xff] %v1239
        %1249 = vst [vmem:[#allocation2 + $0x28] sm:$0xff] %v1240
        %1250 = vst [vmem:[#allocation2 + $0x30] sm:$0xff] %v1241
        %1251 = vst [vmem:[#allocation2 + $0x38] sm:$0xff] %v1242
        %1252 = vst [vmem:[#allocation2 + $0x40] sm:$0xff] %v1243
        %v1253 = vld [vmem:[%s925 + $0x1] sm:$0xff]
        %v1254 = vld [vmem:[%s925 + $0x9] sm:$0xff]
        %v1255 = vld [vmem:[%s925 + $0x11] sm:$0xff]
        %v1256 = vld [vmem:[%s925 + $0x19] sm:$0xff]
        %v1257 = vld [vmem:[%s925 + $0x21] sm:$0xff]
        %v1258 = vld [vmem:[%s925 + $0x29] sm:$0xff]
        %v1259 = vld [vmem:[%s925 + $0x31] sm:$0xff]
        %v1260 = vld [vmem:[%s925 + $0x39] sm:$0xff]
        %v1261 = vld [vmem:[%s925 + $0x41] sm:$0xff]
        %v1262 = vld [vmem:[#allocation2] sm:$0xff]
        %v1263 = vld [vmem:[#allocation2 + $0x8] sm:$0xff]
        %v1264 = vld [vmem:[#allocation2 + $0x10] sm:$0xff]
        %v1265 = vld [vmem:[#allocation2 + $0x18] sm:$0xff]
        %v1266 = vld [vmem:[#allocation2 + $0x20] sm:$0xff]
        %v1267 = vld [vmem:[#allocation2 + $0x28] sm:$0xff]
        %v1268 = vld [vmem:[#allocation2 + $0x30] sm:$0xff]
        %v1269 = vld [vmem:[#allocation2 + $0x38] sm:$0xff]
        %v1270 = vld [vmem:[#allocation2 + $0x40] sm:$0xff]
        %s1271 = scalar_lea.vmem %s409, 640
        %v1272 = vld [vmem:[%s1271] sm:$0xff]
        %v1273 = vld [vmem:[%s1271 + $0x8] sm:$0xff]
        %v1274 = vld [vmem:[%s1271 + $0x10] sm:$0xff]
        %v1275 = vld [vmem:[%s1271 + $0x18] sm:$0xff]
        %v1276 = vld [vmem:[%s1271 + $0x20] sm:$0xff]
        %v1277 = vld [vmem:[%s1271 + $0x28] sm:$0xff]
        %v1278 = vld [vmem:[%s1271 + $0x30] sm:$0xff]
        %v1279 = vld [vmem:[%s1271 + $0x38] sm:$0xff]
        %v1280 = vld [vmem:[%s1271 + $0x40] sm:$0xff]
        %v1281 = vld [vmem:[%s1271 + $0x48] sm:$0xff]
        %v1282 = vld [vmem:[%s1271 + $0x50] sm:$0xff]
        %v1283 = vld [vmem:[%s1271 + $0x58] sm:$0xff]
        %v1284 = vld [vmem:[%s1271 + $0x60] sm:$0xff]
        %v1285 = vld [vmem:[%s1271 + $0x68] sm:$0xff]
        %v1286 = vld [vmem:[%s1271 + $0x70] sm:$0xff]
        %v1287 = vld [vmem:[%s1271 + $0x78] sm:$0xff]
        %1288 = vmatprep.subr.mxu0 0.0
        %1289 = vmatpush1.msra.mxu0 %v1287
        %1290 = vmatprep.subr.mxu0 0.0
        %1291 = vmatpush1.msra.mxu0 %v1286
        %1292 = vmatprep.subr.mxu0 0.0
        %1293 = vmatpush1.msra.mxu0 %v1285
        %1294 = vmatprep.subr.mxu0 0.0
        %1295 = vmatpush1.msra.mxu0 %v1284
        %1296 = vmatprep.subr.mxu0 0.0
        %1297 = vmatpush1.msra.mxu0 %v1283
        %1298 = vmatprep.subr.mxu0 0.0
        %1299 = vmatpush1.msra.mxu0 %v1282
        %1300 = vmatprep.subr.mxu0 0.0
        %1301 = vmatpush1.msra.mxu0 %v1281
        %1302 = vmatprep.subr.mxu0 0.0
        %1303 = vmatpush1.msra.mxu0 %v1280
        %1304 = vmatprep.subr.mxu0 0.0
        %1305 = vmatpush1.msra.mxu0 %v1279
        %1306 = vmatprep.subr.mxu0 0.0
        %1307 = vmatpush1.msra.mxu0 %v1278
        %1308 = vmatprep.subr.mxu0 0.0
        %1309 = vmatpush1.msra.mxu0 %v1277
        %1310 = vmatprep.subr.mxu0 0.0
        %1311 = vmatpush1.msra.mxu0 %v1276
        %1312 = vmatprep.subr.mxu0 0.0
        %1313 = vmatpush1.msra.mxu0 %v1275
        %1314 = vmatprep.subr.mxu0 0.0
        %1315 = vmatpush1.msra.mxu0 %v1274
        %1316 = vmatprep.subr.mxu0 0.0
        %1317 = vmatpush1.msra.mxu0 %v1273
        %1318 = vmatprep.subr.mxu0 0.0
        %1319 = vmatpush1.msra.mxu0 %v1272
        %1320 = vmatprep.subr.mxu0 0.0
        %1321 = vmatpush2.msra.mxu0 0.0
        %1322 = vmatprep.subr.mxu0 0.0
        %1323 = vmatpush2.msra.mxu0 0.0
        %1324 = vmatprep.subr.mxu0 0.0
        %1325 = vmatpush2.msra.mxu0 0.0
        %1326 = vmatprep.subr.mxu0 0.0
        %1327 = vmatpush2.msra.mxu0 0.0
        %1328 = vmatprep.subr.mxu0 0.0
        %1329 = vmatpush2.msra.mxu0 0.0
        %1330 = vmatprep.subr.mxu0 0.0
        %1331 = vmatpush2.msra.mxu0 0.0
        %1332 = vmatprep.subr.mxu0 0.0
        %1333 = vmatpush2.msra.mxu0 0.0
        %1334 = vmatprep.subr.mxu0 0.0
        %1335 = vmatpush2.msra.mxu0 0.0
        %1336 = vmatprep.subr.mxu0 0.0
        %1337 = vmatpush2.msra.mxu0 0.0
        %1338 = vmatprep.subr.mxu0 0.0
        %1339 = vmatpush2.msra.mxu0 0.0
        %1340 = vmatprep.subr.mxu0 0.0
        %1341 = vmatpush2.msra.mxu0 0.0
        %1342 = vmatprep.subr.mxu0 0.0
        %1343 = vmatpush2.msra.mxu0 0.0
        %1344 = vmatprep.subr.mxu0 0.0
        %1345 = vmatpush2.msra.mxu0 0.0
        %1346 = vmatprep.subr.mxu0 0.0
        %1347 = vmatpush2.msra.mxu0 0.0
        %1348 = vmatprep.subr.mxu0 0.0
        %1349 = vmatpush2.msra.mxu0 0.0
        %1350 = vmatprep.subr.mxu0 0.0
        %1351 = vmatpush2.msra.mxu0 0.0
        %1352 = vmatprep.mubr.f32.mxu0 0.0
        %1353 = vmatmul.mubr.f32.gmra.mxu0 %v1253
        %v1354 = vpop.f32.mrf.mxu0
        %v1355 = vadd.f32 0.0, %v1354
        %v1356 = vpop.f32.mrf.mxu0
        %1357 = vmatprep.mubr.f32.mxu0 0.0
        %1358 = vmatmul.mubr.f32.gmra.mxu0 %v1254
        %v1359 = vpop.f32.mrf.mxu0
        %v1360 = vadd.f32 0.0, %v1359
        %v1361 = vpop.f32.mrf.mxu0
        %1362 = vmatprep.mubr.f32.mxu0 0.0
        %1363 = vmatmul.mubr.f32.gmra.mxu0 %v1255
        %v1364 = vpop.f32.mrf.mxu0
        %v1365 = vadd.f32 0.0, %v1364
        %v1366 = vpop.f32.mrf.mxu0
        %1367 = vmatprep.mubr.f32.mxu0 0.0
        %1368 = vmatmul.mubr.f32.gmra.mxu0 %v1256
        %v1369 = vpop.f32.mrf.mxu0
        %v1370 = vadd.f32 0.0, %v1369
        %v1371 = vpop.f32.mrf.mxu0
        %1372 = vmatprep.mubr.f32.mxu0 0.0
        %1373 = vmatmul.mubr.f32.gmra.mxu0 %v1257
        %v1374 = vpop.f32.mrf.mxu0
        %v1375 = vadd.f32 0.0, %v1374
        %v1376 = vpop.f32.mrf.mxu0
        %1377 = vmatprep.mubr.f32.mxu0 0.0
        %1378 = vmatmul.mubr.f32.gmra.mxu0 %v1258
        %v1379 = vpop.f32.mrf.mxu0
        %v1380 = vadd.f32 0.0, %v1379
        %v1381 = vpop.f32.mrf.mxu0
        %1382 = vmatprep.mubr.f32.mxu0 0.0
        %1383 = vmatmul.mubr.f32.gmra.mxu0 %v1259
        %v1384 = vpop.f32.mrf.mxu0
        %v1385 = vadd.f32 0.0, %v1384
        %v1386 = vpop.f32.mrf.mxu0
        %1387 = vmatprep.mubr.f32.mxu0 0.0
        %1388 = vmatmul.mubr.f32.gmra.mxu0 %v1260
        %v1389 = vpop.f32.mrf.mxu0
        %v1390 = vadd.f32 0.0, %v1389
        %v1391 = vpop.f32.mrf.mxu0
        %1392 = vmatprep.mubr.f32.mxu0 0.0
        %1393 = vmatmul.mubr.f32.gmra.mxu0 %v1261
        %v1394 = vpop.f32.mrf.mxu0
        %v1395 = vadd.f32 0.0, %v1394
        %v1396 = vpop.f32.mrf.mxu0
        %1397 = vdwg.mxu0
        %v1398 = vadd.f32 %v1262, %v1355
        %v1399 = vadd.f32 %v1263, %v1360
        %v1400 = vadd.f32 %v1264, %v1365
        %v1401 = vadd.f32 %v1265, %v1370
        %v1402 = vadd.f32 %v1266, %v1375
        %v1403 = vadd.f32 %v1267, %v1380
        %v1404 = vadd.f32 %v1268, %v1385
        %v1405 = vadd.f32 %v1269, %v1390
        %v1406 = vadd.f32 %v1270, %v1395
        %1407 = vst [vmem:[#allocation2] sm:$0xff] %v1398
        %1408 = vst [vmem:[#allocation2 + $0x8] sm:$0xff] %v1399
        %1409 = vst [vmem:[#allocation2 + $0x10] sm:$0xff] %v1400
        %1410 = vst [vmem:[#allocation2 + $0x18] sm:$0xff] %v1401
        %1411 = vst [vmem:[#allocation2 + $0x20] sm:$0xff] %v1402
        %1412 = vst [vmem:[#allocation2 + $0x28] sm:$0xff] %v1403
        %1413 = vst [vmem:[#allocation2 + $0x30] sm:$0xff] %v1404
        %1414 = vst [vmem:[#allocation2 + $0x38] sm:$0xff] %v1405
        %1415 = vst [vmem:[#allocation2 + $0x40] sm:$0xff] %v1406
        %v1416 = vld [vmem:[%s379 + $0x9] sm:$0xff]
        %v1417 = vld [vmem:[%s379 + $0x11] sm:$0xff]
        %v1418 = vld [vmem:[%s379 + $0x19] sm:$0xff]
        %v1419 = vld [vmem:[%s379 + $0x21] sm:$0xff]
        %v1420 = vld [vmem:[%s379 + $0x29] sm:$0xff]
        %v1421 = vld [vmem:[%s379 + $0x31] sm:$0xff]
        %v1422 = vld [vmem:[%s379 + $0x39] sm:$0xff]
        %v1423 = vld [vmem:[%s379 + $0x41] sm:$0xff]
        %v1424 = vld [vmem:[%s379 + $0x49] sm:$0xff]
        %v1425 = vld [vmem:[#allocation2] sm:$0xff]
        %v1426 = vld [vmem:[#allocation2 + $0x8] sm:$0xff]
        %v1427 = vld [vmem:[#allocation2 + $0x10] sm:$0xff]
        %v1428 = vld [vmem:[#allocation2 + $0x18] sm:$0xff]
        %v1429 = vld [vmem:[#allocation2 + $0x20] sm:$0xff]
        %v1430 = vld [vmem:[#allocation2 + $0x28] sm:$0xff]
        %v1431 = vld [vmem:[#allocation2 + $0x30] sm:$0xff]
        %v1432 = vld [vmem:[#allocation2 + $0x38] sm:$0xff]
        %v1433 = vld [vmem:[#allocation2 + $0x40] sm:$0xff]
        %s1434 = scalar_lea.vmem %s409, 768
        %v1435 = vld [vmem:[%s1434] sm:$0xff]
        %v1436 = vld [vmem:[%s1434 + $0x8] sm:$0xff]
        %v1437 = vld [vmem:[%s1434 + $0x10] sm:$0xff]
        %v1438 = vld [vmem:[%s1434 + $0x18] sm:$0xff]
        %v1439 = vld [vmem:[%s1434 + $0x20] sm:$0xff]
        %v1440 = vld [vmem:[%s1434 + $0x28] sm:$0xff]
        %v1441 = vld [vmem:[%s1434 + $0x30] sm:$0xff]
        %v1442 = vld [vmem:[%s1434 + $0x38] sm:$0xff]
        %v1443 = vld [vmem:[%s1434 + $0x40] sm:$0xff]
        %v1444 = vld [vmem:[%s1434 + $0x48] sm:$0xff]
        %v1445 = vld [vmem:[%s1434 + $0x50] sm:$0xff]
        %v1446 = vld [vmem:[%s1434 + $0x58] sm:$0xff]
        %v1447 = vld [vmem:[%s1434 + $0x60] sm:$0xff]
        %v1448 = vld [vmem:[%s1434 + $0x68] sm:$0xff]
        %v1449 = vld [vmem:[%s1434 + $0x70] sm:$0xff]
        %v1450 = vld [vmem:[%s1434 + $0x78] sm:$0xff]
        %1451 = vmatprep.subr.mxu0 0.0
        %1452 = vmatpush1.msra.mxu0 %v1450
        %1453 = vmatprep.subr.mxu0 0.0
        %1454 = vmatpush1.msra.mxu0 %v1449
        %1455 = vmatprep.subr.mxu0 0.0
        %1456 = vmatpush1.msra.mxu0 %v1448
        %1457 = vmatprep.subr.mxu0 0.0
        %1458 = vmatpush1.msra.mxu0 %v1447
        %1459 = vmatprep.subr.mxu0 0.0
        %1460 = vmatpush1.msra.mxu0 %v1446
        %1461 = vmatprep.subr.mxu0 0.0
        %1462 = vmatpush1.msra.mxu0 %v1445
        %1463 = vmatprep.subr.mxu0 0.0
        %1464 = vmatpush1.msra.mxu0 %v1444
        %1465 = vmatprep.subr.mxu0 0.0
        %1466 = vmatpush1.msra.mxu0 %v1443
        %1467 = vmatprep.subr.mxu0 0.0
        %1468 = vmatpush1.msra.mxu0 %v1442
        %1469 = vmatprep.subr.mxu0 0.0
        %1470 = vmatpush1.msra.mxu0 %v1441
        %1471 = vmatprep.subr.mxu0 0.0
        %1472 = vmatpush1.msra.mxu0 %v1440
        %1473 = vmatprep.subr.mxu0 0.0
        %1474 = vmatpush1.msra.mxu0 %v1439
        %1475 = vmatprep.subr.mxu0 0.0
        %1476 = vmatpush1.msra.mxu0 %v1438
        %1477 = vmatprep.subr.mxu0 0.0
        %1478 = vmatpush1.msra.mxu0 %v1437
        %1479 = vmatprep.subr.mxu0 0.0
        %1480 = vmatpush1.msra.mxu0 %v1436
        %1481 = vmatprep.subr.mxu0 0.0
        %1482 = vmatpush1.msra.mxu0 %v1435
        %1483 = vmatprep.subr.mxu0 0.0
        %1484 = vmatpush2.msra.mxu0 0.0
        %1485 = vmatprep.subr.mxu0 0.0
        %1486 = vmatpush2.msra.mxu0 0.0
        %1487 = vmatprep.subr.mxu0 0.0
        %1488 = vmatpush2.msra.mxu0 0.0
        %1489 = vmatprep.subr.mxu0 0.0
        %1490 = vmatpush2.msra.mxu0 0.0
        %1491 = vmatprep.subr.mxu0 0.0
        %1492 = vmatpush2.msra.mxu0 0.0
        %1493 = vmatprep.subr.mxu0 0.0
        %1494 = vmatpush2.msra.mxu0 0.0
        %1495 = vmatprep.subr.mxu0 0.0
        %1496 = vmatpush2.msra.mxu0 0.0
        %1497 = vmatprep.subr.mxu0 0.0
        %1498 = vmatpush2.msra.mxu0 0.0
        %1499 = vmatprep.subr.mxu0 0.0
        %1500 = vmatpush2.msra.mxu0 0.0
        %1501 = vmatprep.subr.mxu0 0.0
        %1502 = vmatpush2.msra.mxu0 0.0
        %1503 = vmatprep.subr.mxu0 0.0
        %1504 = vmatpush2.msra.mxu0 0.0
        %1505 = vmatprep.subr.mxu0 0.0
        %1506 = vmatpush2.msra.mxu0 0.0
        %1507 = vmatprep.subr.mxu0 0.0
        %1508 = vmatpush2.msra.mxu0 0.0
        %1509 = vmatprep.subr.mxu0 0.0
        %1510 = vmatpush2.msra.mxu0 0.0
        %1511 = vmatprep.subr.mxu0 0.0
        %1512 = vmatpush2.msra.mxu0 0.0
        %1513 = vmatprep.subr.mxu0 0.0
        %1514 = vmatpush2.msra.mxu0 0.0
        %1515 = vmatprep.mubr.f32.mxu0 0.0
        %1516 = vmatmul.mubr.f32.gmra.mxu0 %v1416
        %v1517 = vpop.f32.mrf.mxu0
        %v1518 = vadd.f32 0.0, %v1517
        %v1519 = vpop.f32.mrf.mxu0
        %1520 = vmatprep.mubr.f32.mxu0 0.0
        %1521 = vmatmul.mubr.f32.gmra.mxu0 %v1417
        %v1522 = vpop.f32.mrf.mxu0
        %v1523 = vadd.f32 0.0, %v1522
        %v1524 = vpop.f32.mrf.mxu0
        %1525 = vmatprep.mubr.f32.mxu0 0.0
        %1526 = vmatmul.mubr.f32.gmra.mxu0 %v1418
        %v1527 = vpop.f32.mrf.mxu0
        %v1528 = vadd.f32 0.0, %v1527
        %v1529 = vpop.f32.mrf.mxu0
        %1530 = vmatprep.mubr.f32.mxu0 0.0
        %1531 = vmatmul.mubr.f32.gmra.mxu0 %v1419
        %v1532 = vpop.f32.mrf.mxu0
        %v1533 = vadd.f32 0.0, %v1532
        %v1534 = vpop.f32.mrf.mxu0
        %1535 = vmatprep.mubr.f32.mxu0 0.0
        %1536 = vmatmul.mubr.f32.gmra.mxu0 %v1420
        %v1537 = vpop.f32.mrf.mxu0
        %v1538 = vadd.f32 0.0, %v1537
        %v1539 = vpop.f32.mrf.mxu0
        %1540 = vmatprep.mubr.f32.mxu0 0.0
        %1541 = vmatmul.mubr.f32.gmra.mxu0 %v1421
        %v1542 = vpop.f32.mrf.mxu0
        %v1543 = vadd.f32 0.0, %v1542
        %v1544 = vpop.f32.mrf.mxu0
        %1545 = vmatprep.mubr.f32.mxu0 0.0
        %1546 = vmatmul.mubr.f32.gmra.mxu0 %v1422
        %v1547 = vpop.f32.mrf.mxu0
        %v1548 = vadd.f32 0.0, %v1547
        %v1549 = vpop.f32.mrf.mxu0
        %1550 = vmatprep.mubr.f32.mxu0 0.0
        %1551 = vmatmul.mubr.f32.gmra.mxu0 %v1423
        %v1552 = vpop.f32.mrf.mxu0
        %v1553 = vadd.f32 0.0, %v1552
        %v1554 = vpop.f32.mrf.mxu0
        %1555 = vmatprep.mubr.f32.mxu0 0.0
        %1556 = vmatmul.mubr.f32.gmra.mxu0 %v1424
        %v1557 = vpop.f32.mrf.mxu0
        %v1558 = vadd.f32 0.0, %v1557
        %v1559 = vpop.f32.mrf.mxu0
        %1560 = vdwg.mxu0
        %v1561 = vadd.f32 %v1425, %v1518
        %v1562 = vadd.f32 %v1426, %v1523
        %v1563 = vadd.f32 %v1427, %v1528
        %v1564 = vadd.f32 %v1428, %v1533
        %v1565 = vadd.f32 %v1429, %v1538
        %v1566 = vadd.f32 %v1430, %v1543
        %v1567 = vadd.f32 %v1431, %v1548
        %v1568 = vadd.f32 %v1432, %v1553
        %v1569 = vadd.f32 %v1433, %v1558
        %1570 = vst [vmem:[#allocation2] sm:$0xff] %v1561
        %1571 = vst [vmem:[#allocation2 + $0x8] sm:$0xff] %v1562
        %1572 = vst [vmem:[#allocation2 + $0x10] sm:$0xff] %v1563
        %1573 = vst [vmem:[#allocation2 + $0x18] sm:$0xff] %v1564
        %1574 = vst [vmem:[#allocation2 + $0x20] sm:$0xff] %v1565
        %1575 = vst [vmem:[#allocation2 + $0x28] sm:$0xff] %v1566
        %1576 = vst [vmem:[#allocation2 + $0x30] sm:$0xff] %v1567
        %1577 = vst [vmem:[#allocation2 + $0x38] sm:$0xff] %v1568
        %1578 = vst [vmem:[#allocation2 + $0x40] sm:$0xff] %v1569
        %v1579 = vld [vmem:[%s598 + $0x9] sm:$0xff]
        %v1580 = vld [vmem:[%s598 + $0x11] sm:$0xff]
        %v1581 = vld [vmem:[%s598 + $0x19] sm:$0xff]
        %v1582 = vld [vmem:[%s598 + $0x21] sm:$0xff]
        %v1583 = vld [vmem:[%s598 + $0x29] sm:$0xff]
        %v1584 = vld [vmem:[%s598 + $0x31] sm:$0xff]
        %v1585 = vld [vmem:[%s598 + $0x39] sm:$0xff]
        %v1586 = vld [vmem:[%s598 + $0x41] sm:$0xff]
        %v1587 = vld [vmem:[%s598 + $0x49] sm:$0xff]
        %v1588 = vld [vmem:[#allocation2] sm:$0xff]
        %v1589 = vld [vmem:[#allocation2 + $0x8] sm:$0xff]
        %v1590 = vld [vmem:[#allocation2 + $0x10] sm:$0xff]
        %v1591 = vld [vmem:[#allocation2 + $0x18] sm:$0xff]
        %v1592 = vld [vmem:[#allocation2 + $0x20] sm:$0xff]
        %v1593 = vld [vmem:[#allocation2 + $0x28] sm:$0xff]
        %v1594 = vld [vmem:[#allocation2 + $0x30] sm:$0xff]
        %v1595 = vld [vmem:[#allocation2 + $0x38] sm:$0xff]
        %v1596 = vld [vmem:[#allocation2 + $0x40] sm:$0xff]
        %s1597 = scalar_lea.vmem %s409, 896
        %v1598 = vld [vmem:[%s1597] sm:$0xff]
        %v1599 = vld [vmem:[%s1597 + $0x8] sm:$0xff]
        %v1600 = vld [vmem:[%s1597 + $0x10] sm:$0xff]
        %v1601 = vld [vmem:[%s1597 + $0x18] sm:$0xff]
        %v1602 = vld [vmem:[%s1597 + $0x20] sm:$0xff]
        %v1603 = vld [vmem:[%s1597 + $0x28] sm:$0xff]
        %v1604 = vld [vmem:[%s1597 + $0x30] sm:$0xff]
        %v1605 = vld [vmem:[%s1597 + $0x38] sm:$0xff]
        %v1606 = vld [vmem:[%s1597 + $0x40] sm:$0xff]
        %v1607 = vld [vmem:[%s1597 + $0x48] sm:$0xff]
        %v1608 = vld [vmem:[%s1597 + $0x50] sm:$0xff]
        %v1609 = vld [vmem:[%s1597 + $0x58] sm:$0xff]
        %v1610 = vld [vmem:[%s1597 + $0x60] sm:$0xff]
        %v1611 = vld [vmem:[%s1597 + $0x68] sm:$0xff]
        %v1612 = vld [vmem:[%s1597 + $0x70] sm:$0xff]
        %v1613 = vld [vmem:[%s1597 + $0x78] sm:$0xff]
        %1614 = vmatprep.subr.mxu0 0.0
        %1615 = vmatpush1.msra.mxu0 %v1613
        %1616 = vmatprep.subr.mxu0 0.0
        %1617 = vmatpush1.msra.mxu0 %v1612
        %1618 = vmatprep.subr.mxu0 0.0
        %1619 = vmatpush1.msra.mxu0 %v1611
        %1620 = vmatprep.subr.mxu0 0.0
        %1621 = vmatpush1.msra.mxu0 %v1610
        %1622 = vmatprep.subr.mxu0 0.0
        %1623 = vmatpush1.msra.mxu0 %v1609
        %1624 = vmatprep.subr.mxu0 0.0
        %1625 = vmatpush1.msra.mxu0 %v1608
        %1626 = vmatprep.subr.mxu0 0.0
        %1627 = vmatpush1.msra.mxu0 %v1607
        %1628 = vmatprep.subr.mxu0 0.0
        %1629 = vmatpush1.msra.mxu0 %v1606
        %1630 = vmatprep.subr.mxu0 0.0
        %1631 = vmatpush1.msra.mxu0 %v1605
        %1632 = vmatprep.subr.mxu0 0.0
        %1633 = vmatpush1.msra.mxu0 %v1604
        %1634 = vmatprep.subr.mxu0 0.0
        %1635 = vmatpush1.msra.mxu0 %v1603
        %1636 = vmatprep.subr.mxu0 0.0
        %1637 = vmatpush1.msra.mxu0 %v1602
        %1638 = vmatprep.subr.mxu0 0.0
        %1639 = vmatpush1.msra.mxu0 %v1601
        %1640 = vmatprep.subr.mxu0 0.0
        %1641 = vmatpush1.msra.mxu0 %v1600
        %1642 = vmatprep.subr.mxu0 0.0
        %1643 = vmatpush1.msra.mxu0 %v1599
        %1644 = vmatprep.subr.mxu0 0.0
        %1645 = vmatpush1.msra.mxu0 %v1598
        %1646 = vmatprep.subr.mxu0 0.0
        %1647 = vmatpush2.msra.mxu0 0.0
        %1648 = vmatprep.subr.mxu0 0.0
        %1649 = vmatpush2.msra.mxu0 0.0
        %1650 = vmatprep.subr.mxu0 0.0
        %1651 = vmatpush2.msra.mxu0 0.0
        %1652 = vmatprep.subr.mxu0 0.0
        %1653 = vmatpush2.msra.mxu0 0.0
        %1654 = vmatprep.subr.mxu0 0.0
        %1655 = vmatpush2.msra.mxu0 0.0
        %1656 = vmatprep.subr.mxu0 0.0
        %1657 = vmatpush2.msra.mxu0 0.0
        %1658 = vmatprep.subr.mxu0 0.0
        %1659 = vmatpush2.msra.mxu0 0.0
        %1660 = vmatprep.subr.mxu0 0.0
        %1661 = vmatpush2.msra.mxu0 0.0
        %1662 = vmatprep.subr.mxu0 0.0
        %1663 = vmatpush2.msra.mxu0 0.0
        %1664 = vmatprep.subr.mxu0 0.0
        %1665 = vmatpush2.msra.mxu0 0.0
        %1666 = vmatprep.subr.mxu0 0.0
        %1667 = vmatpush2.msra.mxu0 0.0
        %1668 = vmatprep.subr.mxu0 0.0
        %1669 = vmatpush2.msra.mxu0 0.0
        %1670 = vmatprep.subr.mxu0 0.0
        %1671 = vmatpush2.msra.mxu0 0.0
        %1672 = vmatprep.subr.mxu0 0.0
        %1673 = vmatpush2.msra.mxu0 0.0
        %1674 = vmatprep.subr.mxu0 0.0
        %1675 = vmatpush2.msra.mxu0 0.0
        %1676 = vmatprep.subr.mxu0 0.0
        %1677 = vmatpush2.msra.mxu0 0.0
        %1678 = vmatprep.mubr.f32.mxu0 0.0
        %1679 = vmatmul.mubr.f32.gmra.mxu0 %v1579
        %v1680 = vpop.f32.mrf.mxu0
        %v1681 = vadd.f32 0.0, %v1680
        %v1682 = vpop.f32.mrf.mxu0
        %1683 = vmatprep.mubr.f32.mxu0 0.0
        %1684 = vmatmul.mubr.f32.gmra.mxu0 %v1580
        %v1685 = vpop.f32.mrf.mxu0
        %v1686 = vadd.f32 0.0, %v1685
        %v1687 = vpop.f32.mrf.mxu0
        %1688 = vmatprep.mubr.f32.mxu0 0.0
        %1689 = vmatmul.mubr.f32.gmra.mxu0 %v1581
        %v1690 = vpop.f32.mrf.mxu0
        %v1691 = vadd.f32 0.0, %v1690
        %v1692 = vpop.f32.mrf.mxu0
        %1693 = vmatprep.mubr.f32.mxu0 0.0
        %1694 = vmatmul.mubr.f32.gmra.mxu0 %v1582
        %v1695 = vpop.f32.mrf.mxu0
        %v1696 = vadd.f32 0.0, %v1695
        %v1697 = vpop.f32.mrf.mxu0
        %1698 = vmatprep.mubr.f32.mxu0 0.0
        %1699 = vmatmul.mubr.f32.gmra.mxu0 %v1583
        %v1700 = vpop.f32.mrf.mxu0
        %v1701 = vadd.f32 0.0, %v1700
        %v1702 = vpop.f32.mrf.mxu0
        %1703 = vmatprep.mubr.f32.mxu0 0.0
        %1704 = vmatmul.mubr.f32.gmra.mxu0 %v1584
        %v1705 = vpop.f32.mrf.mxu0
        %v1706 = vadd.f32 0.0, %v1705
        %v1707 = vpop.f32.mrf.mxu0
        %1708 = vmatprep.mubr.f32.mxu0 0.0
        %1709 = vmatmul.mubr.f32.gmra.mxu0 %v1585
        %v1710 = vpop.f32.mrf.mxu0
        %v1711 = vadd.f32 0.0, %v1710
        %v1712 = vpop.f32.mrf.mxu0
        %1713 = vmatprep.mubr.f32.mxu0 0.0
        %1714 = vmatmul.mubr.f32.gmra.mxu0 %v1586
        %v1715 = vpop.f32.mrf.mxu0
        %v1716 = vadd.f32 0.0, %v1715
        %v1717 = vpop.f32.mrf.mxu0
        %1718 = vmatprep.mubr.f32.mxu0 0.0
        %1719 = vmatmul.mubr.f32.gmra.mxu0 %v1587
        %v1720 = vpop.f32.mrf.mxu0
        %v1721 = vadd.f32 0.0, %v1720
        %v1722 = vpop.f32.mrf.mxu0
        %1723 = vdwg.mxu0
        %v1724 = vadd.f32 %v1588, %v1681
        %v1725 = vadd.f32 %v1589, %v1686
        %v1726 = vadd.f32 %v1590, %v1691
        %v1727 = vadd.f32 %v1591, %v1696
        %v1728 = vadd.f32 %v1592, %v1701
        %v1729 = vadd.f32 %v1593, %v1706
        %v1730 = vadd.f32 %v1594, %v1711
        %v1731 = vadd.f32 %v1595, %v1716
        %v1732 = vadd.f32 %v1596, %v1721
        %1733 = vst [vmem:[#allocation2] sm:$0xff] %v1724
        %1734 = vst [vmem:[#allocation2 + $0x8] sm:$0xff] %v1725
        %1735 = vst [vmem:[#allocation2 + $0x10] sm:$0xff] %v1726
        %1736 = vst [vmem:[#allocation2 + $0x18] sm:$0xff] %v1727
        %1737 = vst [vmem:[#allocation2 + $0x20] sm:$0xff] %v1728
        %1738 = vst [vmem:[#allocation2 + $0x28] sm:$0xff] %v1729
        %1739 = vst [vmem:[#allocation2 + $0x30] sm:$0xff] %v1730
        %1740 = vst [vmem:[#allocation2 + $0x38] sm:$0xff] %v1731
        %1741 = vst [vmem:[#allocation2 + $0x40] sm:$0xff] %v1732
        %v1742 = vld [vmem:[%s379 + $0xa] sm:$0xff]
        %v1743 = vld [vmem:[%s379 + $0x12] sm:$0xff]
        %v1744 = vld [vmem:[%s379 + $0x1a] sm:$0xff]
        %v1745 = vld [vmem:[%s379 + $0x22] sm:$0xff]
        %v1746 = vld [vmem:[%s379 + $0x2a] sm:$0xff]
        %v1747 = vld [vmem:[%s379 + $0x32] sm:$0xff]
        %v1748 = vld [vmem:[%s379 + $0x3a] sm:$0xff]
        %v1749 = vld [vmem:[%s379 + $0x42] sm:$0xff]
        %v1750 = vld [vmem:[%s379 + $0x4a] sm:$0xff]
        %v1751 = vld [vmem:[#allocation2] sm:$0xff]
        %v1752 = vld [vmem:[#allocation2 + $0x8] sm:$0xff]
        %v1753 = vld [vmem:[#allocation2 + $0x10] sm:$0xff]
        %v1754 = vld [vmem:[#allocation2 + $0x18] sm:$0xff]
        %v1755 = vld [vmem:[#allocation2 + $0x20] sm:$0xff]
        %v1756 = vld [vmem:[#allocation2 + $0x28] sm:$0xff]
        %v1757 = vld [vmem:[#allocation2 + $0x30] sm:$0xff]
        %v1758 = vld [vmem:[#allocation2 + $0x38] sm:$0xff]
        %v1759 = vld [vmem:[#allocation2 + $0x40] sm:$0xff]
        %s1760 = scalar_lea.vmem %s409, 1024
        %v1761 = vld [vmem:[%s1760] sm:$0xff]
        %v1762 = vld [vmem:[%s1760 + $0x8] sm:$0xff]
        %v1763 = vld [vmem:[%s1760 + $0x10] sm:$0xff]
        %v1764 = vld [vmem:[%s1760 + $0x18] sm:$0xff]
        %v1765 = vld [vmem:[%s1760 + $0x20] sm:$0xff]
        %v1766 = vld [vmem:[%s1760 + $0x28] sm:$0xff]
        %v1767 = vld [vmem:[%s1760 + $0x30] sm:$0xff]
        %v1768 = vld [vmem:[%s1760 + $0x38] sm:$0xff]
        %v1769 = vld [vmem:[%s1760 + $0x40] sm:$0xff]
        %v1770 = vld [vmem:[%s1760 + $0x48] sm:$0xff]
        %v1771 = vld [vmem:[%s1760 + $0x50] sm:$0xff]
        %v1772 = vld [vmem:[%s1760 + $0x58] sm:$0xff]
        %v1773 = vld [vmem:[%s1760 + $0x60] sm:$0xff]
        %v1774 = vld [vmem:[%s1760 + $0x68] sm:$0xff]
        %v1775 = vld [vmem:[%s1760 + $0x70] sm:$0xff]
        %v1776 = vld [vmem:[%s1760 + $0x78] sm:$0xff]
        %1777 = vmatprep.subr.mxu0 0.0
        %1778 = vmatpush1.msra.mxu0 %v1776
        %1779 = vmatprep.subr.mxu0 0.0
        %1780 = vmatpush1.msra.mxu0 %v1775
        %1781 = vmatprep.subr.mxu0 0.0
        %1782 = vmatpush1.msra.mxu0 %v1774
        %1783 = vmatprep.subr.mxu0 0.0
        %1784 = vmatpush1.msra.mxu0 %v1773
        %1785 = vmatprep.subr.mxu0 0.0
        %1786 = vmatpush1.msra.mxu0 %v1772
        %1787 = vmatprep.subr.mxu0 0.0
        %1788 = vmatpush1.msra.mxu0 %v1771
        %1789 = vmatprep.subr.mxu0 0.0
        %1790 = vmatpush1.msra.mxu0 %v1770
        %1791 = vmatprep.subr.mxu0 0.0
        %1792 = vmatpush1.msra.mxu0 %v1769
        %1793 = vmatprep.subr.mxu0 0.0
        %1794 = vmatpush1.msra.mxu0 %v1768
        %1795 = vmatprep.subr.mxu0 0.0
        %1796 = vmatpush1.msra.mxu0 %v1767
        %1797 = vmatprep.subr.mxu0 0.0
        %1798 = vmatpush1.msra.mxu0 %v1766
        %1799 = vmatprep.subr.mxu0 0.0
        %1800 = vmatpush1.msra.mxu0 %v1765
        %1801 = vmatprep.subr.mxu0 0.0
        %1802 = vmatpush1.msra.mxu0 %v1764
        %1803 = vmatprep.subr.mxu0 0.0
        %1804 = vmatpush1.msra.mxu0 %v1763
        %1805 = vmatprep.subr.mxu0 0.0
        %1806 = vmatpush1.msra.mxu0 %v1762
        %1807 = vmatprep.subr.mxu0 0.0
        %1808 = vmatpush1.msra.mxu0 %v1761
        %1809 = vmatprep.subr.mxu0 0.0
        %1810 = vmatpush2.msra.mxu0 0.0
        %1811 = vmatprep.subr.mxu0 0.0
        %1812 = vmatpush2.msra.mxu0 0.0
        %1813 = vmatprep.subr.mxu0 0.0
        %1814 = vmatpush2.msra.mxu0 0.0
        %1815 = vmatprep.subr.mxu0 0.0
        %1816 = vmatpush2.msra.mxu0 0.0
        %1817 = vmatprep.subr.mxu0 0.0
        %1818 = vmatpush2.msra.mxu0 0.0
        %1819 = vmatprep.subr.mxu0 0.0
        %1820 = vmatpush2.msra.mxu0 0.0
        %1821 = vmatprep.subr.mxu0 0.0
        %1822 = vmatpush2.msra.mxu0 0.0
        %1823 = vmatprep.subr.mxu0 0.0
        %1824 = vmatpush2.msra.mxu0 0.0
        %1825 = vmatprep.subr.mxu0 0.0
        %1826 = vmatpush2.msra.mxu0 0.0
        %1827 = vmatprep.subr.mxu0 0.0
        %1828 = vmatpush2.msra.mxu0 0.0
        %1829 = vmatprep.subr.mxu0 0.0
        %1830 = vmatpush2.msra.mxu0 0.0
        %1831 = vmatprep.subr.mxu0 0.0
        %1832 = vmatpush2.msra.mxu0 0.0
        %1833 = vmatprep.subr.mxu0 0.0
        %1834 = vmatpush2.msra.mxu0 0.0
        %1835 = vmatprep.subr.mxu0 0.0
        %1836 = vmatpush2.msra.mxu0 0.0
        %1837 = vmatprep.subr.mxu0 0.0
        %1838 = vmatpush2.msra.mxu0 0.0
        %1839 = vmatprep.subr.mxu0 0.0
        %1840 = vmatpush2.msra.mxu0 0.0
        %1841 = vmatprep.mubr.f32.mxu0 0.0
        %1842 = vmatmul.mubr.f32.gmra.mxu0 %v1742
        %v1843 = vpop.f32.mrf.mxu0
        %v1844 = vadd.f32 0.0, %v1843
        %v1845 = vpop.f32.mrf.mxu0
        %1846 = vmatprep.mubr.f32.mxu0 0.0
        %1847 = vmatmul.mubr.f32.gmra.mxu0 %v1743
        %v1848 = vpop.f32.mrf.mxu0
        %v1849 = vadd.f32 0.0, %v1848
        %v1850 = vpop.f32.mrf.mxu0
        %1851 = vmatprep.mubr.f32.mxu0 0.0
        %1852 = vmatmul.mubr.f32.gmra.mxu0 %v1744
        %v1853 = vpop.f32.mrf.mxu0
        %v1854 = vadd.f32 0.0, %v1853
        %v1855 = vpop.f32.mrf.mxu0
        %1856 = vmatprep.mubr.f32.mxu0 0.0
        %1857 = vmatmul.mubr.f32.gmra.mxu0 %v1745
        %v1858 = vpop.f32.mrf.mxu0
        %v1859 = vadd.f32 0.0, %v1858
        %v1860 = vpop.f32.mrf.mxu0
        %1861 = vmatprep.mubr.f32.mxu0 0.0
        %1862 = vmatmul.mubr.f32.gmra.mxu0 %v1746
        %v1863 = vpop.f32.mrf.mxu0
        %v1864 = vadd.f32 0.0, %v1863
        %v1865 = vpop.f32.mrf.mxu0
        %1866 = vmatprep.mubr.f32.mxu0 0.0
        %1867 = vmatmul.mubr.f32.gmra.mxu0 %v1747
        %v1868 = vpop.f32.mrf.mxu0
        %v1869 = vadd.f32 0.0, %v1868
        %v1870 = vpop.f32.mrf.mxu0
        %1871 = vmatprep.mubr.f32.mxu0 0.0
        %1872 = vmatmul.mubr.f32.gmra.mxu0 %v1748
        %v1873 = vpop.f32.mrf.mxu0
        %v1874 = vadd.f32 0.0, %v1873
        %v1875 = vpop.f32.mrf.mxu0
        %1876 = vmatprep.mubr.f32.mxu0 0.0
        %1877 = vmatmul.mubr.f32.gmra.mxu0 %v1749
        %v1878 = vpop.f32.mrf.mxu0
        %v1879 = vadd.f32 0.0, %v1878
        %v1880 = vpop.f32.mrf.mxu0
        %1881 = vmatprep.mubr.f32.mxu0 0.0
        %1882 = vmatmul.mubr.f32.gmra.mxu0 %v1750
        %v1883 = vpop.f32.mrf.mxu0
        %v1884 = vadd.f32 0.0, %v1883
        %v1885 = vpop.f32.mrf.mxu0
        %1886 = vdwg.mxu0
        %v1887 = vadd.f32 %v1751, %v1844
        %v1888 = vadd.f32 %v1752, %v1849
        %v1889 = vadd.f32 %v1753, %v1854
        %v1890 = vadd.f32 %v1754, %v1859
        %v1891 = vadd.f32 %v1755, %v1864
        %v1892 = vadd.f32 %v1756, %v1869
        %v1893 = vadd.f32 %v1757, %v1874
        %v1894 = vadd.f32 %v1758, %v1879
        %v1895 = vadd.f32 %v1759, %v1884
        %1896 = vst [vmem:[#allocation2] sm:$0xff] %v1887
        %1897 = vst [vmem:[#allocation2 + $0x8] sm:$0xff] %v1888
        %1898 = vst [vmem:[#allocation2 + $0x10] sm:$0xff] %v1889
        %1899 = vst [vmem:[#allocation2 + $0x18] sm:$0xff] %v1890
        %1900 = vst [vmem:[#allocation2 + $0x20] sm:$0xff] %v1891
        %1901 = vst [vmem:[#allocation2 + $0x28] sm:$0xff] %v1892
        %1902 = vst [vmem:[#allocation2 + $0x30] sm:$0xff] %v1893
        %1903 = vst [vmem:[#allocation2 + $0x38] sm:$0xff] %v1894
        %1904 = vst [vmem:[#allocation2 + $0x40] sm:$0xff] %v1895
        // Predicated region
        $region75: #{_lambda_.2} parent=65 // pred_check
          %p1905 = pneg %p416
        $region76: #{_lambda_.2} parent=65 // pred_check_branch
          %1907 = sbr.rel (%p1905) target = $region78
        $region77: #{_lambda_.2} parent=65 // pred_region
          %v1908 = vld [vmem:[#allocation2] sm:$0xff]
          %v1909 = vld [vmem:[#allocation2 + $0x8] sm:$0xff]
          %v1910 = vld [vmem:[#allocation2 + $0x10] sm:$0xff]
          %v1911 = vld [vmem:[#allocation2 + $0x18] sm:$0xff]
          %v1912 = vld [vmem:[#allocation2 + $0x20] sm:$0xff]
          %v1913 = vld [vmem:[#allocation2 + $0x28] sm:$0xff]
          %v1914 = vld [vmem:[#allocation2 + $0x30] sm:$0xff]
          %v1915 = vld [vmem:[#allocation2 + $0x38] sm:$0xff]
          %v1916 = vld [vmem:[#allocation2 + $0x40] sm:$0xff]
          %1917 = vst [vmem:[%s415] sm:$0xff] %v1908
          %1918 = vst [vmem:[%s415 + $0x8] sm:$0xff] %v1909
          %1919 = vst [vmem:[%s415 + $0x10] sm:$0xff] %v1910
          %1920 = vst [vmem:[%s415 + $0x18] sm:$0xff] %v1911
          %1921 = vst [vmem:[%s415 + $0x20] sm:$0xff] %v1912
          %1922 = vst [vmem:[%s415 + $0x28] sm:$0xff] %v1913
          %1923 = vst [vmem:[%s415 + $0x30] sm:$0xff] %v1914
          %1924 = vst [vmem:[%s415 + $0x38] sm:$0xff] %v1915
          %1925 = vst [vmem:[%s415 + $0x40] sm:$0xff] %v1916
        $region78: #{_lambda_.2} parent=65 // pred_fallthru
          _
        %p1926 = scmp.lt.s32.totalorder %s18, 1
        %s1927 = scalar_select %p1926, %s18, 1
        %s1928 = smul.addr %s1927, 9
        %s1929 = smul.addr %s1928, 8
        %s1930 = scalar_lea.vmem %s3, %s1929
        // Predicated region
        $region79: #{_lambda_.2} parent=65 // pred_check
          %p1931 = pneg %p119
        $region80: #{_lambda_.2} parent=65 // pred_check_branch
          %1933 = sbr.rel (%p1931) target = $region82
        $region81: #{_lambda_.2} parent=65 // pred_region
          _
        $region82: #{_lambda_.2} parent=65 // pred_fallthru
          _
      $region66: #{_lambda_.2} parent=5 // pred_fallthru
        _
      %p1934 = scmp.le.s32.totalorder 2, %s9
      // Predicated region
      $region83: #{_lambda_.2} parent=5 // pred_check
        %p1935 = pneg %p1934
      $region84: #{_lambda_.2} parent=5 // pred_check_branch
        %1937 = sbr.rel (%p1935) target = $region86
      $region85: #{_lambda_.2} parent=5 // pred_region
        %s1938 = ssub.s32 %s9, 2
        // Predicated region
        $region87: #{_lambda_.2} parent=85 // pred_check
          %p1939 = pneg %p125
        $region88: #{_lambda_.2} parent=85 // pred_check_branch
          %1941 = sbr.rel (%p1939) target = $region90
        $region89: #{_lambda_.2} parent=85 // pred_region
          %p1942 = scmp.lt.s32.totalorder %s20, 1
          %s1943 = scalar_select %p1942, %s20, 1
          %s1944 = smul.addr %s1943, 9
          %s1945 = smul.addr %s1944, 8
          %s1946 = scalar_lea.vmem %s3, %s1945
        $region90: #{_lambda_.2} parent=85 // pred_fallthru
          _
      $region86: #{_lambda_.2} parent=5 // pred_fallthru
        _
    $region6: #{_lambda_.2} parent=1 // loop_footer
      %s13 = sadd.s32 1, %s9
    $region7: #{_lambda_.2} parent=1 // loop_footer_branch
      %8 = sbr.rel target = $region3
    $region8: #{_lambda_.2} parent=1 // loop_exit
      _

// kernel: _lambda_.3
$region0: #{_lambda_.3}
  #allocation0 [shape = 'u32[]', space=smem, size = 0x4, offset = 0x4, fixed_abs, tag = 'smem constant byte address 0x4 - core index']
  #allocation1 [shape = 'u32[144,128]{1,0:T(1,128)}', space=vmem, size = 0x12000, scoped, tag = 'internal scratch']
  #allocation2 [shape = 'f32[24,128]{1,0:T(8,128)}', space=vmem, size = 0x3000, scoped, tag = 'scratch operand']
  %s0 = inlined_call_operand.vmem [shape: f32[4,2,32,128], index: 0, kind: input, shape index: {}]
  %s1 = inlined_call_operand.vmem [shape: f32[9,128,128], index: 1, kind: input, shape index: {}]
  %s2 = inlined_call_operand.vmem [shape: f32[1,128], index: 2, kind: input, shape index: {}]
  %s3 = inlined_call_operand.vmem [shape: f32[2,24,128], index: 3, kind: output, shape index: {}]
  %s4 = sld [smem:[#allocation0]]
  $region91: #{_lambda_.3} parent=0
    _
  %s6 = ssub.s32 1, %s4
  %s7 = scalar_select 0, %s6, %s4
  $region1: #{_lambda_.3} parent=0
    #allocation3 [shape = 'u8[131072]{0}', space=vmem, size = 0x20000, scoped, tag = 'input window, operand 0']
    loop: start=0, step=1, limit=4
    $region2: #{_lambda_.3} parent=1 // loop_pre_header
      _
    $region3: #{_lambda_.3} parent=1 // loop_header
      %s9 = sphi 0, %s13
      %p10 = scmp.ge.s32.totalorder %s9, 4
      %s16 = sphi 0, %s28
      %s17 = sphi 0, %s24
      %s18 = sphi 0, %s16
      %s19 = sphi 0, %s17
      %s20 = sphi 0, %s18
      %s21 = sphi 0, %s19
      %s33 = sphi 0, %s35
      %s36 = sphi 0, %s33
      %s37 = sphi 0, %s36
      %s53 = sphi 0, %s37
      %s59 = sphi 0, %s61
      %s62 = sphi 0, %s59
      %s63 = sphi 0, %s62
      %s79 = sphi 0, %s63
      %s83 = sphi 0, %s83
      %s85 = sphi 0, %s83
      %s86 = sphi 0, %s85
      %s100 = sphi 0, %s86
      %s106 = sphi 0, %s108
      %s109 = sphi 0, %s106
      %s110 = sphi 0, %s109
      %s126 = sphi 0, %s110
    $region4: #{_lambda_.3} parent=1 // loop_header_branch
      %12 = sbr.rel (%p10) target = $region8
    $region5: #{_lambda_.3} parent=1 // loop_body
      %s14 = ssub.s32 %s9, 1
      %s15 = ssub.s32 %s9, 2
      %s22 = sadd.s32 1, %s17
      %p23 = scmp.ge.s32.totalorder %s22, 1
      %s24 = scalar_select %p23, 0, %s22
      %s25 = sadd.s32 1, %s16
      %s26 = scalar_select %p23, %s25, %s16
      %p27 = scmp.ge.s32.totalorder %s26, 2
      %s28 = scalar_select %p27, 0, %s26
      %s29 = ssub.s32 %s16, %s28
      %s30 = ssub.s32 %s17, %s24
      %s31 = sor.u32 %s29, %s30
      %p32 = scmp.eq.s32.totalorder %s31, 0
      %s34 = sadd.s32 %s33, 1
      %s35 = scalar_select %p32, %s33, %s34
      %p38 = pneg %p32
      %p39 = scmp.eq.s32.totalorder %s9, 1
      %p40 = por %p38, %p39
      %p41 = scmp.ne.s32.totalorder %s33, %s36
      %p42 = scmp.eq.s32.totalorder %s9, 0
      %p43 = por %p41, %p42
      %p44 = scmp.ne.s32.totalorder %s33, %s36
      %p45 = scmp.eq.s32.totalorder %s14, 1
      %p46 = por %p44, %p45
      %p47 = scmp.ne.s32.totalorder %s36, %s37
      %p48 = scmp.eq.s32.totalorder %s14, 0
      %p49 = por %p47, %p48
      %p50 = scmp.ne.s32.totalorder %s36, %s37
      %p51 = scmp.eq.s32.totalorder %s15, 1
      %p52 = por %p50, %p51
      %p54 = scmp.ne.s32.totalorder %s37, %s53
      %p55 = scmp.eq.s32.totalorder %s15, 0
      %p56 = por %p54, %p55
      %s57 = ssub.s32 %s17, %s24
      %p58 = scmp.eq.s32.totalorder %s57, 0
      %s60 = sadd.s32 %s59, 1
      %s61 = scalar_select %p58, %s59, %s60
      %p64 = pneg %p58
      %p65 = scmp.eq.s32.totalorder %s9, 1
      %p66 = por %p64, %p65
      %p67 = scmp.ne.s32.totalorder %s59, %s62
      %p68 = scmp.eq.s32.totalorder %s9, 0
      %p69 = por %p67, %p68
      %p70 = scmp.ne.s32.totalorder %s59, %s62
      %p71 = scmp.eq.s32.totalorder %s14, 1
      %p72 = por %p70, %p71
      %p73 = scmp.ne.s32.totalorder %s62, %s63
      %p74 = scmp.eq.s32.totalorder %s14, 0
      %p75 = por %p73, %p74
      %p76 = scmp.ne.s32.totalorder %s62, %s63
      %p77 = scmp.eq.s32.totalorder %s15, 1
      %p78 = por %p76, %p77
      %p80 = scmp.ne.s32.totalorder %s63, %s79
      %p81 = scmp.eq.s32.totalorder %s15, 0
      %p82 = por %p80, %p81
      %s84 = sadd.s32 %s83, 1
      %p87 = scmp.eq.s32.totalorder %s9, 1
      %p88 = scmp.ne.s32.totalorder %s83, %s85
      %p89 = scmp.eq.s32.totalorder %s9, 0
      %p90 = por %p88, %p89
      %p91 = scmp.ne.s32.totalorder %s83, %s85
      %p92 = scmp.eq.s32.totalorder %s14, 1
      %p93 = por %p91, %p92
      %p94 = scmp.ne.s32.totalorder %s85, %s86
      %p95 = scmp.eq.s32.totalorder %s14, 0
      %p96 = por %p94, %p95
      %p97 = scmp.ne.s32.totalorder %s85, %s86
      %p98 = scmp.eq.s32.totalorder %s15, 1
      %p99 = por %p97, %p98
      %p101 = scmp.ne.s32.totalorder %s86, %s100
      %p102 = scmp.eq.s32.totalorder %s15, 0
      %p103 = por %p101, %p102
      %s104 = ssub.s32 %s16, %s28
      %p105 = scmp.eq.s32.totalorder %s104, 0
      %s107 = sadd.s32 %s106, 1
      %s108 = scalar_select %p105, %s106, %s107
      %p111 = pneg %p105
      %p112 = scmp.eq.s32.totalorder %s9, 1
      %p113 = por %p111, %p112
      %p114 = scmp.ne.s32.totalorder %s106, %s109
      %p115 = scmp.eq.s32.totalorder %s9, 0
      %p116 = por %p114, %p115
      %p117 = scmp.ne.s32.totalorder %s106, %s109
      %p118 = scmp.eq.s32.totalorder %s14, 1
      %p119 = por %p117, %p118
      %p120 = scmp.ne.s32.totalorder %s109, %s110
      %p121 = scmp.eq.s32.totalorder %s14, 0
      %p122 = por %p120, %p121
      %p123 = scmp.ne.s32.totalorder %s109, %s110
      %p124 = scmp.eq.s32.totalorder %s15, 1
      %p125 = por %p123, %p124
      %p127 = scmp.ne.s32.totalorder %s110, %s126
      %p128 = scmp.eq.s32.totalorder %s15, 0
      %p129 = por %p127, %p128
      %p130 = scmp.le.s32.totalorder 1, %s9
      %p131 = scmp.lt.s32.totalorder %s9, 3
      %p132 = pnand %p130, %p131
      %p133 = pneg %p132
      // Predicated region
      $region9: #{_lambda_.3} parent=5 // pred_check
        _
      $region10: #{_lambda_.3} parent=5 // pred_check_branch
        %135 = sbr.rel (%p132) target = $region12
      $region11: #{_lambda_.3} parent=5 // pred_region
        %s136 = ssub.s32 %s9, 1
        // Predicated region
        $region13: #{_lambda_.3} parent=11 // pred_check
          %p137 = pneg %p75
        $region14: #{_lambda_.3} parent=11 // pred_check_branch
          %139 = sbr.rel (%p137) target = $region16
        $region15: #{_lambda_.3} parent=11 // pred_region
          %s140 = smul.u32 16, %s19
          %p141 = scmp.lt.s32.totalorder %s140, 15
          %s142 = scalar_select %p141, %s140, 15
          %s143 = smul.addr %s142, 8
          %s144 = scalar_lea.vmem %s1, %s143
          %s145 = smul.u32 16, %s19
        $region16: #{_lambda_.3} parent=11 // pred_fallthru
          _
        // Predicated region
        $region17: #{_lambda_.3} parent=11 // pred_check
          %p146 = pneg %p96
        $region18: #{_lambda_.3} parent=11 // pred_check_branch
          %148 = sbr.rel (%p146) target = $region20
        $region19: #{_lambda_.3} parent=11 // pred_region
          _
        $region20: #{_lambda_.3} parent=11 // pred_fallthru
          _
      $region12: #{_lambda_.3} parent=5 // pred_fallthru
        _
      %p149 = scmp.lt.s32.totalorder %s9, 2
      // Predicated region
      $region21: #{_lambda_.3} parent=5 // pred_check
        %p150 = pneg %p149
      $region22: #{_lambda_.3} parent=5 // pred_check_branch
        %152 = sbr.rel (%p150) target = $region24
      $region23: #{_lambda_.3} parent=5 // pred_region
        // Predicated region
        $region25: #{_lambda_.3} parent=23 // pred_check
          %p153 = pneg %p43
        $region26: #{_lambda_.3} parent=23 // pred_check_branch
          %155 = sbr.rel (%p153) target = $region28
        $region27: #{_lambda_.3} parent=23 // pred_region
          %s156 = sand.u32 %s33, 1
          %s157 = sand.u32 %s33, 1
          %s158 = smul.addr %s157, 128
          %s159 = scalar_lea.vmem [#allocation3], %s158
          %s160 = smul.addr %s16, 4
          %s161 = sadd.s32 %s17, %s160
          %s162 = smul.addr %s161, 8
          %s163 = scalar_lea.vmem %s0, %s162
          // Predicated region
          $region29: #{_lambda_.3} parent=27 // pred_check
            _
          $region30: #{_lambda_.3} parent=27 // pred_check_branch
            %165 = sbr.rel (0) target = $region32
          $region31: #{_lambda_.3} parent=27 // pred_region
            // Predicated region
            $region33: #{_lambda_.3} parent=31 // pred_check
              _
            $region34: #{_lambda_.3} parent=31 // pred_check_branch
              %167 = sbr.rel (0) target = $region36
            $region35: #{_lambda_.3} parent=31 // pred_region
              // Predicated region
              $region48: #{_lambda_.3} parent=35 // pred_check
                _
              $region49: #{_lambda_.3} parent=35 // pred_check_branch
                %213 = sbr.rel (0) target = $region51
              $region50: #{_lambda_.3} parent=35 // pred_region
                loop: start=0, step=1, limit=1
                $region52: #{_lambda_.3} parent=50 // loop_pre_header
                  _
                $region53: #{_lambda_.3} parent=50 // loop_header
                  %s215 = sphi 0, %s219
                  %p216 = scmp.ge.s32.totalorder %s215, 1
                  %s220 = sphi %s163, %s163
                  %s221 = sphi %s159, %s159
                $region54: #{_lambda_.3} parent=50 // loop_header_branch
                  %218 = sbr.rel (%p216) target = $region58
                $region55: #{_lambda_.3} parent=50 // loop_body
                  %v222 = vld [vmem:[%s220] sm:$0xff]
                  %223 = vst [vmem:[%s221] sm:$0xff] %v222
                  %v224 = vld [vmem:[%s220 + $0x8] sm:$0xff]
                  %225 = vst [vmem:[%s221 + $0x8] sm:$0xff] %v224
                  %v226 = vld [vmem:[%s220 + $0x10] sm:$0xff]
                  %227 = vst [vmem:[%s221 + $0x10] sm:$0xff] %v226
                  %v228 = vld [vmem:[%s220 + $0x18] sm:$0xff]
                  %229 = vst [vmem:[%s221 + $0x18] sm:$0xff] %v228
                  %v230 = vld [vmem:[%s220 + $0x40] sm:$0xff]
                  %231 = vst [vmem:[%s221 + $0x20] sm:$0xff] %v230
                  %v232 = vld [vmem:[%s220 + $0x48] sm:$0xff]
                  %233 = vst [vmem:[%s221 + $0x28] sm:$0xff] %v232
                  %v234 = vld [vmem:[%s220 + $0x50] sm:$0xff]
                  %235 = vst [vmem:[%s221 + $0x30] sm:$0xff] %v234
                  %v236 = vld [vmem:[%s220 + $0x58] sm:$0xff]
                  %237 = vst [vmem:[%s221 + $0x38] sm:$0xff] %v236
                  %v238 = vld [vmem:[%s220 + $0x80] sm:$0xff]
                  %239 = vst [vmem:[%s221 + $0x40] sm:$0xff] %v238
                  %v240 = vld [vmem:[%s220 + $0x88] sm:$0xff]
                  %241 = vst [vmem:[%s221 + $0x48] sm:$0xff] %v240
                  %v242 = vld [vmem:[%s220 + $0x90] sm:$0xff]
                  %243 = vst [vmem:[%s221 + $0x50] sm:$0xff] %v242
                  %v244 = vld [vmem:[%s220 + $0x98] sm:$0xff]
                  %245 = vst [vmem:[%s221 + $0x58] sm:$0xff] %v244
                  %v246 = vld [vmem:[%s220 + $0xc0] sm:$0xff]
                  %247 = vst [vmem:[%s221 + $0x60] sm:$0xff] %v246
                  %v248 = vld [vmem:[%s220 + $0xc8] sm:$0xff]
                  %249 = vst [vmem:[%s221 + $0x68] sm:$0xff] %v248
                  %v250 = vld [vmem:[%s220 + $0xd0] sm:$0xff]
                  %251 = vst [vmem:[%s221 + $0x70] sm:$0xff] %v250
                  %v252 = vld [vmem:[%s220 + $0xd8] sm:$0xff]
                  %253 = vst [vmem:[%s221 + $0x78] sm:$0xff] %v252
                $region56: #{_lambda_.3} parent=50 // loop_footer
                  %s219 = sadd.s32 1, %s215
                $region57: #{_lambda_.3} parent=50 // loop_footer_branch
                  %214 = sbr.rel target = $region53
                $region58: #{_lambda_.3} parent=50 // loop_exit
                  _
              $region51: #{_lambda_.3} parent=35 // pred_fallthru
                _
              // Predicated region
              $region59: #{_lambda_.3} parent=35 // pred_check
                _
              $region60: #{_lambda_.3} parent=35 // pred_check_branch
                %255 = sbr.rel target = $region62
              $region61: #{_lambda_.3} parent=35 // pred_region
                _
              $region62: #{_lambda_.3} parent=35 // pred_fallthru
                _
            $region36: #{_lambda_.3} parent=31 // pred_fallthru
              _
            // Predicated region
            $region37: #{_lambda_.3} parent=31 // pred_check
              _
            $region38: #{_lambda_.3} parent=31 // pred_check_branch
              %169 = sbr.rel target = $region40
            $region39: #{_lambda_.3} parent=31 // pred_region
              %s171 = ssub.s32 256, 1
              loop: start=0, step=1, limit=1
              $region41: #{_lambda_.3} parent=39 // loop_pre_header
                _
              $region42: #{_lambda_.3} parent=39 // loop_header
                %s173 = sphi 0, %s177
                %p174 = scmp.ge.s32.totalorder %s173, 1
                %s178 = sphi %s163, %s163
                %s179 = sphi %s159, %s159
              $region43: #{_lambda_.3} parent=39 // loop_header_branch
                %176 = sbr.rel (%p174) target = $region47
              $region44: #{_lambda_.3} parent=39 // loop_body
                %v180 = vld [vmem:[%s178] sm:%s171]
                %181 = vst [vmem:[%s179] sm:%s171] %v180
                %v182 = vld [vmem:[%s178 + $0x8] sm:%s171]
                %183 = vst [vmem:[%s179 + $0x8] sm:%s171] %v182
                %v184 = vld [vmem:[%s178 + $0x10] sm:%s171]
                %185 = vst [vmem:[%s179 + $0x10] sm:%s171] %v184
                %v186 = vld [vmem:[%s178 + $0x18] sm:%s171]
                %187 = vst [vmem:[%s179 + $0x18] sm:%s171] %v186
                %v188 = vld [vmem:[%s178 + $0x40] sm:%s171]
                %189 = vst [vmem:[%s179 + $0x20] sm:%s171] %v188
                %v190 = vld [vmem:[%s178 + $0x48] sm:%s171]
                %191 = vst [vmem:[%s179 + $0x28] sm:%s171] %v190
                %v192 = vld [vmem:[%s178 + $0x50] sm:%s171]
                %193 = vst [vmem:[%s179 + $0x30] sm:%s171] %v192
                %v194 = vld [vmem:[%s178 + $0x58] sm:%s171]
                %195 = vst [vmem:[%s179 + $0x38] sm:%s171] %v194
                %v196 = vld [vmem:[%s178 + $0x80] sm:%s171]
                %197 = vst [vmem:[%s179 + $0x40] sm:%s171] %v196
                %v198 = vld [vmem:[%s178 + $0x88] sm:%s171]
                %199 = vst [vmem:[%s179 + $0x48] sm:%s171] %v198
                %v200 = vld [vmem:[%s178 + $0x90] sm:%s171]
                %201 = vst [vmem:[%s179 + $0x50] sm:%s171] %v200
                %v202 = vld [vmem:[%s178 + $0x98] sm:%s171]
                %203 = vst [vmem:[%s179 + $0x58] sm:%s171] %v202
                %v204 = vld [vmem:[%s178 + $0xc0] sm:%s171]
                %205 = vst [vmem:[%s179 + $0x60] sm:%s171] %v204
                %v206 = vld [vmem:[%s178 + $0xc8] sm:%s171]
                %207 = vst [vmem:[%s179 + $0x68] sm:%s171] %v206
                %v208 = vld [vmem:[%s178 + $0xd0] sm:%s171]
                %209 = vst [vmem:[%s179 + $0x70] sm:%s171] %v208
                %v210 = vld [vmem:[%s178 + $0xd8] sm:%s171]
                %211 = vst [vmem:[%s179 + $0x78] sm:%s171] %v210
              $region45: #{_lambda_.3} parent=39 // loop_footer
                %s177 = sadd.s32 1, %s173
              $region46: #{_lambda_.3} parent=39 // loop_footer_branch
                %172 = sbr.rel target = $region42
              $region47: #{_lambda_.3} parent=39 // loop_exit
                _
            $region40: #{_lambda_.3} parent=31 // pred_fallthru
              _
          $region32: #{_lambda_.3} parent=27 // pred_fallthru
            _
          %256 = vnop
        $region28: #{_lambda_.3} parent=23 // pred_fallthru
          _
      $region24: #{_lambda_.3} parent=5 // pred_fallthru
        _
      %p257 = scmp.le.s32.totalorder 1, %s9
      %p258 = scmp.lt.s32.totalorder %s9, 3
      %p259 = pnand %p257, %p258
      %p260 = pneg %p259
      // Predicated region
      $region63: #{_lambda_.3} parent=5 // pred_check
        _
      $region64: #{_lambda_.3} parent=5 // pred_check_branch
        %262 = sbr.rel (%p259) target = $region66
      $region65: #{_lambda_.3} parent=5 // pred_region
        %s263 = ssub.s32 %s9, 1
        %s264 = sand.u32 %s36, 1
        %s265 = sand.u32 %s36, 1
        %s266 = smul.addr %s265, 128
        %s267 = scalar_lea.vmem [#allocation3], %s266
        // Predicated region
        $region67: #{_lambda_.3} parent=65 // pred_check
          %p268 = pneg %p49
        $region68: #{_lambda_.3} parent=65 // pred_check_branch
          %270 = sbr.rel (%p268) target = $region70
        $region69: #{_lambda_.3} parent=65 // pred_region
          _
        $region70: #{_lambda_.3} parent=65 // pred_fallthru
          _
        %s271 = sand.u32 %s36, 1
        %s272 = sand.u32 %s36, 1
        %s273 = smul.addr %s272, 128
        %s274 = scalar_lea.vmem [#allocation3], %s273
        %p275 = pneg %p49
        %p276 = pneg %p46
        %s277 = smul.u32 16, %s19
        %p278 = scmp.lt.s32.totalorder %s277, 15
        %s279 = scalar_select %p278, %s277, 15
        %s280 = smul.addr %s279, 8
        %s281 = scalar_lea.vmem %s1, %s280
        %p282 = pneg %p75
        %p283 = pneg %p72
        %p284 = pneg %p96
        %p285 = pneg %p93
        %p286 = pneg %p122
        %p287 = pneg %p119
        %p288 = scmp.lt.s32.totalorder %s18, 1
        %s289 = scalar_select %p288, %s18, 1
        %s290 = smul.addr %s289, 3
        %s291 = smul.addr %s290, 8
        %s292 = scalar_lea.vmem %s3, %s291
        %s293 = smul.u32 16, %s19
        %p294 = scmp.lt.s32.totalorder %s293, 15
        %s295 = scalar_select %p294, %s293, 15
        %s296 = smul.addr %s295, 8
        %s297 = scalar_lea.vmem %s1, %s296
        %s298 = smul.u32 16, %s19
        %p299 = scmp.lt.s32.totalorder %s18, 1
        %s300 = scalar_select %p299, %s18, 1
        %s301 = smul.addr %s300, 3
        %s302 = smul.addr %s301, 8
        %s303 = scalar_lea.vmem %s3, %s302
        %p304 = scmp.eq.s32.totalorder %s19, 0
        // Predicated region
        $region71: #{_lambda_.3} parent=65 // pred_check
          %p305 = pneg %p304
        $region72: #{_lambda_.3} parent=65 // pred_check_branch
          %307 = sbr.rel (%p305) target = $region74
        $region73: #{_lambda_.3} parent=65 // pred_region
          %v308 = vld [vmem:[%s2] sm:$0x1]
          %v310 = vlaneseq
          %v311 = vshrl.u32 %v310, 7
          %v312 = vsub.s32 0, %v311
          %v313 = vrot.slane %v308, %v312
          %315 = vst [vmem:[#allocation2] sm:$0xff] %v313
          %316 = vst [vmem:[#allocation2 + $0x8] sm:$0xff] %v313
          %317 = vst [vmem:[#allocation2 + $0x10] sm:$0xff] %v313
        $region74: #{_lambda_.3} parent=65 // pred_fallthru
          _
        %v318 = vld [vmem:[%s267] sm:$0xff]
        %v319 = vld [vmem:[%s267 + $0x8] sm:$0xff]
        %v320 = vld [vmem:[%s267 + $0x10] sm:$0xff]
        %v321 = vld [vmem:[#allocation2] sm:$0xff]
        %v322 = vld [vmem:[#allocation2 + $0x8] sm:$0xff]
        %v323 = vld [vmem:[#allocation2 + $0x10] sm:$0xff]
        %v324 = vld [vmem:[%s297] sm:$0xff]
        %v325 = vld [vmem:[%s297 + $0x8] sm:$0xff]
        %v326 = vld [vmem:[%s297 + $0x10] sm:$0xff]
        %v327 = vld [vmem:[%s297 + $0x18] sm:$0xff]
        %v328 = vld [vmem:[%s297 + $0x20] sm:$0xff]
        %v329 = vld [vmem:[%s297 + $0x28] sm:$0xff]
        %v330 = vld [vmem:[%s297 + $0x30] sm:$0xff]
        %v331 = vld [vmem:[%s297 + $0x38] sm:$0xff]
        %v332 = vld [vmem:[%s297 + $0x40] sm:$0xff]
        %v333 = vld [vmem:[%s297 + $0x48] sm:$0xff]
        %v334 = vld [vmem:[%s297 + $0x50] sm:$0xff]
        %v335 = vld [vmem:[%s297 + $0x58] sm:$0xff]
        %v336 = vld [vmem:[%s297 + $0x60] sm:$0xff]
        %v337 = vld [vmem:[%s297 + $0x68] sm:$0xff]
        %v338 = vld [vmem:[%s297 + $0x70] sm:$0xff]
        %v339 = vld [vmem:[%s297 + $0x78] sm:$0xff]
        %340 = vmatprep.subr.mxu0 0.0
        %341 = vmatpush1.msra.mxu0 %v339
        %342 = vmatprep.subr.mxu0 0.0
        %343 = vmatpush1.msra.mxu0 %v338
        %344 = vmatprep.subr.mxu0 0.0
        %345 = vmatpush1.msra.mxu0 %v337
        %346 = vmatprep.subr.mxu0 0.0
        %347 = vmatpush1.msra.mxu0 %v336
        %348 = vmatprep.subr.mxu0 0.0
        %349 = vmatpush1.msra.mxu0 %v335
        %350 = vmatprep.subr.mxu0 0.0
        %351 = vmatpush1.msra.mxu0 %v334
        %352 = vmatprep.subr.mxu0 0.0
        %353 = vmatpush1.msra.mxu0 %v333
        %354 = vmatprep.subr.mxu0 0.0
        %355 = vmatpush1.msra.mxu0 %v332
        %356 = vmatprep.subr.mxu0 0.0
        %357 = vmatpush1.msra.mxu0 %v331
        %358 = vmatprep.subr.mxu0 0.0
        %359 = vmatpush1.msra.mxu0 %v330
        %360 = vmatprep.subr.mxu0 0.0
        %361 = vmatpush1.msra.mxu0 %v329
        %362 = vmatprep.subr.mxu0 0.0
        %363 = vmatpush1.msra.mxu0 %v328
        %364 = vmatprep.subr.mxu0 0.0
        %365 = vmatpush1.msra.mxu0 %v327
        %366 = vmatprep.subr.mxu0 0.0
        %367 = vmatpush1.msra.mxu0 %v326
        %368 = vmatprep.subr.mxu0 0.0
        %369 = vmatpush1.msra.mxu0 %v325
        %370 = vmatprep.subr.mxu0 0.0
        %371 = vmatpush1.msra.mxu0 %v324
        %372 = vmatprep.subr.mxu0 0.0
        %373 = vmatpush2.msra.mxu0 0.0
        %374 = vmatprep.subr.mxu0 0.0
        %375 = vmatpush2.msra.mxu0 0.0
        %376 = vmatprep.subr.mxu0 0.0
        %377 = vmatpush2.msra.mxu0 0.0
        %378 = vmatprep.subr.mxu0 0.0
        %379 = vmatpush2.msra.mxu0 0.0
        %380 = vmatprep.subr.mxu0 0.0
        %381 = vmatpush2.msra.mxu0 0.0
        %382 = vmatprep.subr.mxu0 0.0
        %383 = vmatpush2.msra.mxu0 0.0
        %384 = vmatprep.subr.mxu0 0.0
        %385 = vmatpush2.msra.mxu0 0.0
        %386 = vmatprep.subr.mxu0 0.0
        %387 = vmatpush2.msra.mxu0 0.0
        %388 = vmatprep.subr.mxu0 0.0
        %389 = vmatpush2.msra.mxu0 0.0
        %390 = vmatprep.subr.mxu0 0.0
        %391 = vmatpush2.msra.mxu0 0.0
        %392 = vmatprep.subr.mxu0 0.0
        %393 = vmatpush2.msra.mxu0 0.0
        %394 = vmatprep.subr.mxu0 0.0
        %395 = vmatpush2.msra.mxu0 0.0
        %396 = vmatprep.subr.mxu0 0.0
        %397 = vmatpush2.msra.mxu0 0.0
        %398 = vmatprep.subr.mxu0 0.0
        %399 = vmatpush2.msra.mxu0 0.0
        %400 = vmatprep.subr.mxu0 0.0
        %401 = vmatpush2.msra.mxu0 0.0
        %402 = vmatprep.subr.mxu0 0.0
        %403 = vmatpush2.msra.mxu0 0.0
        %404 = vmatprep.mubr.f32.mxu0 0.0
        %405 = vmatmul.mubr.f32.gmra.mxu0 %v318
        %v406 = vpop.f32.mrf.mxu0
        %v407 = vadd.f32 0.0, %v406
        %v408 = vpop.f32.mrf.mxu0
        %409 = vmatprep.mubr.f32.mxu0 0.0
        %410 = vmatmul.mubr.f32.gmra.mxu0 %v319
        %v411 = vpop.f32.mrf.mxu0
        %v412 = vadd.f32 0.0, %v411
        %v413 = vpop.f32.mrf.mxu0
        %414 = vmatprep.mubr.f32.mxu0 0.0
        %415 = vmatmul.mubr.f32.gmra.mxu0 %v320
        %v416 = vpop.f32.mrf.mxu0
        %v417 = vadd.f32 0.0, %v416
        %v418 = vpop.f32.mrf.mxu0
        %419 = vdwg.mxu0
        %v420 = vadd.f32 %v321, %v407
        %v421 = vadd.f32 %v322, %v412
        %v422 = vadd.f32 %v323, %v417
        %423 = vst [vmem:[#allocation2] sm:$0xff] %v420
        %424 = vst [vmem:[#allocation2 + $0x8] sm:$0xff] %v421
        %425 = vst [vmem:[#allocation2 + $0x10] sm:$0xff] %v422
        %s426 = scalar_lea.vmem %s267, 32 [#allocation3]
        %v427 = vld [vmem:[%s426] sm:$0xff]
        %v428 = vld [vmem:[%s426 + $0x8] sm:$0xff]
        %v429 = vld [vmem:[%s426 + $0x10] sm:$0xff]
        %v430 = vld [vmem:[#allocation2] sm:$0xff]
        %v431 = vld [vmem:[#allocation2 + $0x8] sm:$0xff]
        %v432 = vld [vmem:[#allocation2 + $0x10] sm:$0xff]
        %s433 = scalar_lea.vmem %s297, 128
        %v434 = vld [vmem:[%s433] sm:$0xff]
        %v435 = vld [vmem:[%s433 + $0x8] sm:$0xff]
        %v436 = vld [vmem:[%s433 + $0x10] sm:$0xff]
        %v437 = vld [vmem:[%s433 + $0x18] sm:$0xff]
        %v438 = vld [vmem:[%s433 + $0x20] sm:$0xff]
        %v439 = vld [vmem:[%s433 + $0x28] sm:$0xff]
        %v440 = vld [vmem:[%s433 + $0x30] sm:$0xff]
        %v441 = vld [vmem:[%s433 + $0x38] sm:$0xff]
        %v442 = vld [vmem:[%s433 + $0x40] sm:$0xff]
        %v443 = vld [vmem:[%s433 + $0x48] sm:$0xff]
        %v444 = vld [vmem:[%s433 + $0x50] sm:$0xff]
        %v445 = vld [vmem:[%s433 + $0x58] sm:$0xff]
        %v446 = vld [vmem:[%s433 + $0x60] sm:$0xff]
        %v447 = vld [vmem:[%s433 + $0x68] sm:$0xff]
        %v448 = vld [vmem:[%s433 + $0x70] sm:$0xff]
        %v449 = vld [vmem:[%s433 + $0x78] sm:$0xff]
        %450 = vmatprep.subr.mxu0 0.0
        %451 = vmatpush1.msra.mxu0 %v449
        %452 = vmatprep.subr.mxu0 0.0
        %453 = vmatpush1.msra.mxu0 %v448
        %454 = vmatprep.subr.mxu0 0.0
        %455 = vmatpush1.msra.mxu0 %v447
        %456 = vmatprep.subr.mxu0 0.0
        %457 = vmatpush1.msra.mxu0 %v446
        %458 = vmatprep.subr.mxu0 0.0
        %459 = vmatpush1.msra.mxu0 %v445
        %460 = vmatprep.subr.mxu0 0.0
        %461 = vmatpush1.msra.mxu0 %v444
        %462 = vmatprep.subr.mxu0 0.0
        %463 = vmatpush1.msra.mxu0 %v443
        %464 = vmatprep.subr.mxu0 0.0
        %465 = vmatpush1.msra.mxu0 %v442
        %466 = vmatprep.subr.mxu0 0.0
        %467 = vmatpush1.msra.mxu0 %v441
        %468 = vmatprep.subr.mxu0 0.0
        %469 = vmatpush1.msra.mxu0 %v440
        %470 = vmatprep.subr.mxu0 0.0
        %471 = vmatpush1.msra.mxu0 %v439
        %472 = vmatprep.subr.mxu0 0.0
        %473 = vmatpush1.msra.mxu0 %v438
        %474 = vmatprep.subr.mxu0 0.0
        %475 = vmatpush1.msra.mxu0 %v437
        %476 = vmatprep.subr.mxu0 0.0
        %477 = vmatpush1.msra.mxu0 %v436
        %478 = vmatprep.subr.mxu0 0.0
        %479 = vmatpush1.msra.mxu0 %v435
        %480 = vmatprep.subr.mxu0 0.0
        %481 = vmatpush1.msra.mxu0 %v434
        %482 = vmatprep.subr.mxu0 0.0
        %483 = vmatpush2.msra.mxu0 0.0
        %484 = vmatprep.subr.mxu0 0.0
        %485 = vmatpush2.msra.mxu0 0.0
        %486 = vmatprep.subr.mxu0 0.0
        %487 = vmatpush2.msra.mxu0 0.0
        %488 = vmatprep.subr.mxu0 0.0
        %489 = vmatpush2.msra.mxu0 0.0
        %490 = vmatprep.subr.mxu0 0.0
        %491 = vmatpush2.msra.mxu0 0.0
        %492 = vmatprep.subr.mxu0 0.0
        %493 = vmatpush2.msra.mxu0 0.0
        %494 = vmatprep.subr.mxu0 0.0
        %495 = vmatpush2.msra.mxu0 0.0
        %496 = vmatprep.subr.mxu0 0.0
        %497 = vmatpush2.msra.mxu0 0.0
        %498 = vmatprep.subr.mxu0 0.0
        %499 = vmatpush2.msra.mxu0 0.0
        %500 = vmatprep.subr.mxu0 0.0
        %501 = vmatpush2.msra.mxu0 0.0
        %502 = vmatprep.subr.mxu0 0.0
        %503 = vmatpush2.msra.mxu0 0.0
        %504 = vmatprep.subr.mxu0 0.0
        %505 = vmatpush2.msra.mxu0 0.0
        %506 = vmatprep.subr.mxu0 0.0
        %507 = vmatpush2.msra.mxu0 0.0
        %508 = vmatprep.subr.mxu0 0.0
        %509 = vmatpush2.msra.mxu0 0.0
        %510 = vmatprep.subr.mxu0 0.0
        %511 = vmatpush2.msra.mxu0 0.0
        %512 = vmatprep.subr.mxu0 0.0
        %513 = vmatpush2.msra.mxu0 0.0
        %514 = vmatprep.mubr.f32.mxu0 0.0
        %515 = vmatmul.mubr.f32.gmra.mxu0 %v427
        %v516 = vpop.f32.mrf.mxu0
        %v517 = vadd.f32 0.0, %v516
        %v518 = vpop.f32.mrf.mxu0
        %519 = vmatprep.mubr.f32.mxu0 0.0
        %520 = vmatmul.mubr.f32.gmra.mxu0 %v428
        %v521 = vpop.f32.mrf.mxu0
        %v522 = vadd.f32 0.0, %v521
        %v523 = vpop.f32.mrf.mxu0
        %524 = vmatprep.mubr.f32.mxu0 0.0
        %525 = vmatmul.mubr.f32.gmra.mxu0 %v429
        %v526 = vpop.f32.mrf.mxu0
        %v527 = vadd.f32 0.0, %v526
        %v528 = vpop.f32.mrf.mxu0
        %529 = vdwg.mxu0
        %v530 = vadd.f32 %v430, %v517
        %v531 = vadd.f32 %v431, %v522
        %v532 = vadd.f32 %v432, %v527
        %533 = vst [vmem:[#allocation2] sm:$0xff] %v530
        %534 = vst [vmem:[#allocation2 + $0x8] sm:$0xff] %v531
        %535 = vst [vmem:[#allocation2 + $0x10] sm:$0xff] %v532
        %v536 = vld [vmem:[%s267 + $0x1] sm:$0xff]
        %v537 = vld [vmem:[%s267 + $0x9] sm:$0xff]
        %v538 = vld [vmem:[%s267 + $0x11] sm:$0xff]
        %v539 = vld [vmem:[#allocation2] sm:$0xff]
        %v540 = vld [vmem:[#allocation2 + $0x8] sm:$0xff]
        %v541 = vld [vmem:[#allocation2 + $0x10] sm:$0xff]
        %s542 = scalar_lea.vmem %s297, 256
        %v543 = vld [vmem:[%s542] sm:$0xff]
        %v544 = vld [vmem:[%s542 + $0x8] sm:$0xff]
        %v545 = vld [vmem:[%s542 + $0x10] sm:$0xff]
        %v546 = vld [vmem:[%s542 + $0x18] sm:$0xff]
        %v547 = vld [vmem:[%s542 + $0x20] sm:$0xff]
        %v548 = vld [vmem:[%s542 + $0x28] sm:$0xff]
        %v549 = vld [vmem:[%s542 + $0x30] sm:$0xff]
        %v550 = vld [vmem:[%s542 + $0x38] sm:$0xff]
        %v551 = vld [vmem:[%s542 + $0x40] sm:$0xff]
        %v552 = vld [vmem:[%s542 + $0x48] sm:$0xff]
        %v553 = vld [vmem:[%s542 + $0x50] sm:$0xff]
        %v554 = vld [vmem:[%s542 + $0x58] sm:$0xff]
        %v555 = vld [vmem:[%s542 + $0x60] sm:$0xff]
        %v556 = vld [vmem:[%s542 + $0x68] sm:$0xff]
        %v557 = vld [vmem:[%s542 + $0x70] sm:$0xff]
        %v558 = vld [vmem:[%s542 + $0x78] sm:$0xff]
        %559 = vmatprep.subr.mxu0 0.0
        %560 = vmatpush1.msra.mxu0 %v558
        %561 = vmatprep.subr.mxu0 0.0
        %562 = vmatpush1.msra.mxu0 %v557
        %563 = vmatprep.subr.mxu0 0.0
        %564 = vmatpush1.msra.mxu0 %v556
        %565 = vmatprep.subr.mxu0 0.0
        %566 = vmatpush1.msra.mxu0 %v555
        %567 = vmatprep.subr.mxu0 0.0
        %568 = vmatpush1.msra.mxu0 %v554
        %569 = vmatprep.subr.mxu0 0.0
        %570 = vmatpush1.msra.mxu0 %v553
        %571 = vmatprep.subr.mxu0 0.0
        %572 = vmatpush1.msra.mxu0 %v552
        %573 = vmatprep.subr.mxu0 0.0
        %574 = vmatpush1.msra.mxu0 %v551
        %575 = vmatprep.subr.mxu0 0.0
        %576 = vmatpush1.msra.mxu0 %v550
        %577 = vmatprep.subr.mxu0 0.0
        %578 = vmatpush1.msra.mxu0 %v549
        %579 = vmatprep.subr.mxu0 0.0
        %580 = vmatpush1.msra.mxu0 %v548
        %581 = vmatprep.subr.mxu0 0.0
        %582 = vmatpush1.msra.mxu0 %v547
        %583 = vmatprep.subr.mxu0 0.0
        %584 = vmatpush1.msra.mxu0 %v546
        %585 = vmatprep.subr.mxu0 0.0
        %586 = vmatpush1.msra.mxu0 %v545
        %587 = vmatprep.subr.mxu0 0.0
        %588 = vmatpush1.msra.mxu0 %v544
        %589 = vmatprep.subr.mxu0 0.0
        %590 = vmatpush1.msra.mxu0 %v543
        %591 = vmatprep.subr.mxu0 0.0
        %592 = vmatpush2.msra.mxu0 0.0
        %593 = vmatprep.subr.mxu0 0.0
        %594 = vmatpush2.msra.mxu0 0.0
        %595 = vmatprep.subr.mxu0 0.0
        %596 = vmatpush2.msra.mxu0 0.0
        %597 = vmatprep.subr.mxu0 0.0
        %598 = vmatpush2.msra.mxu0 0.0
        %599 = vmatprep.subr.mxu0 0.0
        %600 = vmatpush2.msra.mxu0 0.0
        %601 = vmatprep.subr.mxu0 0.0
        %602 = vmatpush2.msra.mxu0 0.0
        %603 = vmatprep.subr.mxu0 0.0
        %604 = vmatpush2.msra.mxu0 0.0
        %605 = vmatprep.subr.mxu0 0.0
        %606 = vmatpush2.msra.mxu0 0.0
        %607 = vmatprep.subr.mxu0 0.0
        %608 = vmatpush2.msra.mxu0 0.0
        %609 = vmatprep.subr.mxu0 0.0
        %610 = vmatpush2.msra.mxu0 0.0
        %611 = vmatprep.subr.mxu0 0.0
        %612 = vmatpush2.msra.mxu0 0.0
        %613 = vmatprep.subr.mxu0 0.0
        %614 = vmatpush2.msra.mxu0 0.0
        %615 = vmatprep.subr.mxu0 0.0
        %616 = vmatpush2.msra.mxu0 0.0
        %617 = vmatprep.subr.mxu0 0.0
        %618 = vmatpush2.msra.mxu0 0.0
        %619 = vmatprep.subr.mxu0 0.0
        %620 = vmatpush2.msra.mxu0 0.0
        %621 = vmatprep.subr.mxu0 0.0
        %622 = vmatpush2.msra.mxu0 0.0
        %623 = vmatprep.mubr.f32.mxu0 0.0
        %624 = vmatmul.mubr.f32.gmra.mxu0 %v536
        %v625 = vpop.f32.mrf.mxu0
        %v626 = vadd.f32 0.0, %v625
        %v627 = vpop.f32.mrf.mxu0
        %628 = vmatprep.mubr.f32.mxu0 0.0
        %629 = vmatmul.mubr.f32.gmra.mxu0 %v537
        %v630 = vpop.f32.mrf.mxu0
        %v631 = vadd.f32 0.0, %v630
        %v632 = vpop.f32.mrf.mxu0
        %633 = vmatprep.mubr.f32.mxu0 0.0
        %634 = vmatmul.mubr.f32.gmra.mxu0 %v538
        %v635 = vpop.f32.mrf.mxu0
        %v636 = vadd.f32 0.0, %v635
        %v637 = vpop.f32.mrf.mxu0
        %638 = vdwg.mxu0
        %v639 = vadd.f32 %v539, %v626
        %v640 = vadd.f32 %v540, %v631
        %v641 = vadd.f32 %v541, %v636
        %642 = vst [vmem:[#allocation2] sm:$0xff] %v639
        %643 = vst [vmem:[#allocation2 + $0x8] sm:$0xff] %v640
        %644 = vst [vmem:[#allocation2 + $0x10] sm:$0xff] %v641
        %s645 = scalar_lea.vmem %s267, 64 [#allocation3]
        %v646 = vld [vmem:[%s645] sm:$0xff]
        %v647 = vld [vmem:[%s645 + $0x8] sm:$0xff]
        %v648 = vld [vmem:[%s645 + $0x10] sm:$0xff]
        %v649 = vld [vmem:[#allocation2] sm:$0xff]
        %v650 = vld [vmem:[#allocation2 + $0x8] sm:$0xff]
        %v651 = vld [vmem:[#allocation2 + $0x10] sm:$0xff]
        %s652 = scalar_lea.vmem %s297, 384
        %v653 = vld [vmem:[%s652] sm:$0xff]
        %v654 = vld [vmem:[%s652 + $0x8] sm:$0xff]
        %v655 = vld [vmem:[%s652 + $0x10] sm:$0xff]
        %v656 = vld [vmem:[%s652 + $0x18] sm:$0xff]
        %v657 = vld [vmem:[%s652 + $0x20] sm:$0xff]
        %v658 = vld [vmem:[%s652 + $0x28] sm:$0xff]
        %v659 = vld [vmem:[%s652 + $0x30] sm:$0xff]
        %v660 = vld [vmem:[%s652 + $0x38] sm:$0xff]
        %v661 = vld [vmem:[%s652 + $0x40] sm:$0xff]
        %v662 = vld [vmem:[%s652 + $0x48] sm:$0xff]
        %v663 = vld [vmem:[%s652 + $0x50] sm:$0xff]
        %v664 = vld [vmem:[%s652 + $0x58] sm:$0xff]
        %v665 = vld [vmem:[%s652 + $0x60] sm:$0xff]
        %v666 = vld [vmem:[%s652 + $0x68] sm:$0xff]
        %v667 = vld [vmem:[%s652 + $0x70] sm:$0xff]
        %v668 = vld [vmem:[%s652 + $0x78] sm:$0xff]
        %669 = vmatprep.subr.mxu0 0.0
        %670 = vmatpush1.msra.mxu0 %v668
        %671 = vmatprep.subr.mxu0 0.0
        %672 = vmatpush1.msra.mxu0 %v667
        %673 = vmatprep.subr.mxu0 0.0
        %674 = vmatpush1.msra.mxu0 %v666
        %675 = vmatprep.subr.mxu0 0.0
        %676 = vmatpush1.msra.mxu0 %v665
        %677 = vmatprep.subr.mxu0 0.0
        %678 = vmatpush1.msra.mxu0 %v664
        %679 = vmatprep.subr.mxu0 0.0
        %680 = vmatpush1.msra.mxu0 %v663
        %681 = vmatprep.subr.mxu0 0.0
        %682 = vmatpush1.msra.mxu0 %v662
        %683 = vmatprep.subr.mxu0 0.0
        %684 = vmatpush1.msra.mxu0 %v661
        %685 = vmatprep.subr.mxu0 0.0
        %686 = vmatpush1.msra.mxu0 %v660
        %687 = vmatprep.subr.mxu0 0.0
        %688 = vmatpush1.msra.mxu0 %v659
        %689 = vmatprep.subr.mxu0 0.0
        %690 = vmatpush1.msra.mxu0 %v658
        %691 = vmatprep.subr.mxu0 0.0
        %692 = vmatpush1.msra.mxu0 %v657
        %693 = vmatprep.subr.mxu0 0.0
        %694 = vmatpush1.msra.mxu0 %v656
        %695 = vmatprep.subr.mxu0 0.0
        %696 = vmatpush1.msra.mxu0 %v655
        %697 = vmatprep.subr.mxu0 0.0
        %698 = vmatpush1.msra.mxu0 %v654
        %699 = vmatprep.subr.mxu0 0.0
        %700 = vmatpush1.msra.mxu0 %v653
        %701 = vmatprep.subr.mxu0 0.0
        %702 = vmatpush2.msra.mxu0 0.0
        %703 = vmatprep.subr.mxu0 0.0
        %704 = vmatpush2.msra.mxu0 0.0
        %705 = vmatprep.subr.mxu0 0.0
        %706 = vmatpush2.msra.mxu0 0.0
        %707 = vmatprep.subr.mxu0 0.0
        %708 = vmatpush2.msra.mxu0 0.0
        %709 = vmatprep.subr.mxu0 0.0
        %710 = vmatpush2.msra.mxu0 0.0
        %711 = vmatprep.subr.mxu0 0.0
        %712 = vmatpush2.msra.mxu0 0.0
        %713 = vmatprep.subr.mxu0 0.0
        %714 = vmatpush2.msra.mxu0 0.0
        %715 = vmatprep.subr.mxu0 0.0
        %716 = vmatpush2.msra.mxu0 0.0
        %717 = vmatprep.subr.mxu0 0.0
        %718 = vmatpush2.msra.mxu0 0.0
        %719 = vmatprep.subr.mxu0 0.0
        %720 = vmatpush2.msra.mxu0 0.0
        %721 = vmatprep.subr.mxu0 0.0
        %722 = vmatpush2.msra.mxu0 0.0
        %723 = vmatprep.subr.mxu0 0.0
        %724 = vmatpush2.msra.mxu0 0.0
        %725 = vmatprep.subr.mxu0 0.0
        %726 = vmatpush2.msra.mxu0 0.0
        %727 = vmatprep.subr.mxu0 0.0
        %728 = vmatpush2.msra.mxu0 0.0
        %729 = vmatprep.subr.mxu0 0.0
        %730 = vmatpush2.msra.mxu0 0.0
        %731 = vmatprep.subr.mxu0 0.0
        %732 = vmatpush2.msra.mxu0 0.0
        %733 = vmatprep.mubr.f32.mxu0 0.0
        %734 = vmatmul.mubr.f32.gmra.mxu0 %v646
        %v735 = vpop.f32.mrf.mxu0
        %v736 = vadd.f32 0.0, %v735
        %v737 = vpop.f32.mrf.mxu0
        %738 = vmatprep.mubr.f32.mxu0 0.0
        %739 = vmatmul.mubr.f32.gmra.mxu0 %v647
        %v740 = vpop.f32.mrf.mxu0
        %v741 = vadd.f32 0.0, %v740
        %v742 = vpop.f32.mrf.mxu0
        %743 = vmatprep.mubr.f32.mxu0 0.0
        %744 = vmatmul.mubr.f32.gmra.mxu0 %v648
        %v745 = vpop.f32.mrf.mxu0
        %v746 = vadd.f32 0.0, %v745
        %v747 = vpop.f32.mrf.mxu0
        %748 = vdwg.mxu0
        %v749 = vadd.f32 %v649, %v736
        %v750 = vadd.f32 %v650, %v741
        %v751 = vadd.f32 %v651, %v746
        %752 = vst [vmem:[#allocation2] sm:$0xff] %v749
        %753 = vst [vmem:[#allocation2 + $0x8] sm:$0xff] %v750
        %754 = vst [vmem:[#allocation2 + $0x10] sm:$0xff] %v751
        %s755 = scalar_lea.vmem %s267, 96 [#allocation3]
        %v756 = vld [vmem:[%s755] sm:$0xff]
        %v757 = vld [vmem:[%s755 + $0x8] sm:$0xff]
        %v758 = vld [vmem:[%s755 + $0x10] sm:$0xff]
        %v759 = vld [vmem:[#allocation2] sm:$0xff]
        %v760 = vld [vmem:[#allocation2 + $0x8] sm:$0xff]
        %v761 = vld [vmem:[#allocation2 + $0x10] sm:$0xff]
        %s762 = scalar_lea.vmem %s297, 512
        %v763 = vld [vmem:[%s762] sm:$0xff]
        %v764 = vld [vmem:[%s762 + $0x8] sm:$0xff]
        %v765 = vld [vmem:[%s762 + $0x10] sm:$0xff]
        %v766 = vld [vmem:[%s762 + $0x18] sm:$0xff]
        %v767 = vld [vmem:[%s762 + $0x20] sm:$0xff]
        %v768 = vld [vmem:[%s762 + $0x28] sm:$0xff]
        %v769 = vld [vmem:[%s762 + $0x30] sm:$0xff]
        %v770 = vld [vmem:[%s762 + $0x38] sm:$0xff]
        %v771 = vld [vmem:[%s762 + $0x40] sm:$0xff]
        %v772 = vld [vmem:[%s762 + $0x48] sm:$0xff]
        %v773 = vld [vmem:[%s762 + $0x50] sm:$0xff]
        %v774 = vld [vmem:[%s762 + $0x58] sm:$0xff]
        %v775 = vld [vmem:[%s762 + $0x60] sm:$0xff]
        %v776 = vld [vmem:[%s762 + $0x68] sm:$0xff]
        %v777 = vld [vmem:[%s762 + $0x70] sm:$0xff]
        %v778 = vld [vmem:[%s762 + $0x78] sm:$0xff]
        %779 = vmatprep.subr.mxu0 0.0
        %780 = vmatpush1.msra.mxu0 %v778
        %781 = vmatprep.subr.mxu0 0.0
        %782 = vmatpush1.msra.mxu0 %v777
        %783 = vmatprep.subr.mxu0 0.0
        %784 = vmatpush1.msra.mxu0 %v776
        %785 = vmatprep.subr.mxu0 0.0
        %786 = vmatpush1.msra.mxu0 %v775
        %787 = vmatprep.subr.mxu0 0.0
        %788 = vmatpush1.msra.mxu0 %v774
        %789 = vmatprep.subr.mxu0 0.0
        %790 = vmatpush1.msra.mxu0 %v773
        %791 = vmatprep.subr.mxu0 0.0
        %792 = vmatpush1.msra.mxu0 %v772
        %793 = vmatprep.subr.mxu0 0.0
        %794 = vmatpush1.msra.mxu0 %v771
        %795 = vmatprep.subr.mxu0 0.0
        %796 = vmatpush1.msra.mxu0 %v770
        %797 = vmatprep.subr.mxu0 0.0
        %798 = vmatpush1.msra.mxu0 %v769
        %799 = vmatprep.subr.mxu0 0.0
        %800 = vmatpush1.msra.mxu0 %v768
        %801 = vmatprep.subr.mxu0 0.0
        %802 = vmatpush1.msra.mxu0 %v767
        %803 = vmatprep.subr.mxu0 0.0
        %804 = vmatpush1.msra.mxu0 %v766
        %805 = vmatprep.subr.mxu0 0.0
        %806 = vmatpush1.msra.mxu0 %v765
        %807 = vmatprep.subr.mxu0 0.0
        %808 = vmatpush1.msra.mxu0 %v764
        %809 = vmatprep.subr.mxu0 0.0
        %810 = vmatpush1.msra.mxu0 %v763
        %811 = vmatprep.subr.mxu0 0.0
        %812 = vmatpush2.msra.mxu0 0.0
        %813 = vmatprep.subr.mxu0 0.0
        %814 = vmatpush2.msra.mxu0 0.0
        %815 = vmatprep.subr.mxu0 0.0
        %816 = vmatpush2.msra.mxu0 0.0
        %817 = vmatprep.subr.mxu0 0.0
        %818 = vmatpush2.msra.mxu0 0.0
        %819 = vmatprep.subr.mxu0 0.0
        %820 = vmatpush2.msra.mxu0 0.0
        %821 = vmatprep.subr.mxu0 0.0
        %822 = vmatpush2.msra.mxu0 0.0
        %823 = vmatprep.subr.mxu0 0.0
        %824 = vmatpush2.msra.mxu0 0.0
        %825 = vmatprep.subr.mxu0 0.0
        %826 = vmatpush2.msra.mxu0 0.0
        %827 = vmatprep.subr.mxu0 0.0
        %828 = vmatpush2.msra.mxu0 0.0
        %829 = vmatprep.subr.mxu0 0.0
        %830 = vmatpush2.msra.mxu0 0.0
        %831 = vmatprep.subr.mxu0 0.0
        %832 = vmatpush2.msra.mxu0 0.0
        %833 = vmatprep.subr.mxu0 0.0
        %834 = vmatpush2.msra.mxu0 0.0
        %835 = vmatprep.subr.mxu0 0.0
        %836 = vmatpush2.msra.mxu0 0.0
        %837 = vmatprep.subr.mxu0 0.0
        %838 = vmatpush2.msra.mxu0 0.0
        %839 = vmatprep.subr.mxu0 0.0
        %840 = vmatpush2.msra.mxu0 0.0
        %841 = vmatprep.subr.mxu0 0.0
        %842 = vmatpush2.msra.mxu0 0.0
        %843 = vmatprep.mubr.f32.mxu0 0.0
        %844 = vmatmul.mubr.f32.gmra.mxu0 %v756
        %v845 = vpop.f32.mrf.mxu0
        %v846 = vadd.f32 0.0, %v845
        %v847 = vpop.f32.mrf.mxu0
        %848 = vmatprep.mubr.f32.mxu0 0.0
        %849 = vmatmul.mubr.f32.gmra.mxu0 %v757
        %v850 = vpop.f32.mrf.mxu0
        %v851 = vadd.f32 0.0, %v850
        %v852 = vpop.f32.mrf.mxu0
        %853 = vmatprep.mubr.f32.mxu0 0.0
        %854 = vmatmul.mubr.f32.gmra.mxu0 %v758
        %v855 = vpop.f32.mrf.mxu0
        %v856 = vadd.f32 0.0, %v855
        %v857 = vpop.f32.mrf.mxu0
        %858 = vdwg.mxu0
        %v859 = vadd.f32 %v759, %v846
        %v860 = vadd.f32 %v760, %v851
        %v861 = vadd.f32 %v761, %v856
        %862 = vst [vmem:[#allocation2] sm:$0xff] %v859
        %863 = vst [vmem:[#allocation2 + $0x8] sm:$0xff] %v860
        %864 = vst [vmem:[#allocation2 + $0x10] sm:$0xff] %v861
        %v865 = vld [vmem:[%s645 + $0x1] sm:$0xff]
        %v866 = vld [vmem:[%s645 + $0x9] sm:$0xff]
        %v867 = vld [vmem:[%s645 + $0x11] sm:$0xff]
        %v868 = vld [vmem:[#allocation2] sm:$0xff]
        %v869 = vld [vmem:[#allocation2 + $0x8] sm:$0xff]
        %v870 = vld [vmem:[#allocation2 + $0x10] sm:$0xff]
        %s871 = scalar_lea.vmem %s297, 640
        %v872 = vld [vmem:[%s871] sm:$0xff]
        %v873 = vld [vmem:[%s871 + $0x8] sm:$0xff]
        %v874 = vld [vmem:[%s871 + $0x10] sm:$0xff]
        %v875 = vld [vmem:[%s871 + $0x18] sm:$0xff]
        %v876 = vld [vmem:[%s871 + $0x20] sm:$0xff]
        %v877 = vld [vmem:[%s871 + $0x28] sm:$0xff]
        %v878 = vld [vmem:[%s871 + $0x30] sm:$0xff]
        %v879 = vld [vmem:[%s871 + $0x38] sm:$0xff]
        %v880 = vld [vmem:[%s871 + $0x40] sm:$0xff]
        %v881 = vld [vmem:[%s871 + $0x48] sm:$0xff]
        %v882 = vld [vmem:[%s871 + $0x50] sm:$0xff]
        %v883 = vld [vmem:[%s871 + $0x58] sm:$0xff]
        %v884 = vld [vmem:[%s871 + $0x60] sm:$0xff]
        %v885 = vld [vmem:[%s871 + $0x68] sm:$0xff]
        %v886 = vld [vmem:[%s871 + $0x70] sm:$0xff]
        %v887 = vld [vmem:[%s871 + $0x78] sm:$0xff]
        %888 = vmatprep.subr.mxu0 0.0
        %889 = vmatpush1.msra.mxu0 %v887
        %890 = vmatprep.subr.mxu0 0.0
        %891 = vmatpush1.msra.mxu0 %v886
        %892 = vmatprep.subr.mxu0 0.0
        %893 = vmatpush1.msra.mxu0 %v885
        %894 = vmatprep.subr.mxu0 0.0
        %895 = vmatpush1.msra.mxu0 %v884
        %896 = vmatprep.subr.mxu0 0.0
        %897 = vmatpush1.msra.mxu0 %v883
        %898 = vmatprep.subr.mxu0 0.0
        %899 = vmatpush1.msra.mxu0 %v882
        %900 = vmatprep.subr.mxu0 0.0
        %901 = vmatpush1.msra.mxu0 %v881
        %902 = vmatprep.subr.mxu0 0.0
        %903 = vmatpush1.msra.mxu0 %v880
        %904 = vmatprep.subr.mxu0 0.0
        %905 = vmatpush1.msra.mxu0 %v879
        %906 = vmatprep.subr.mxu0 0.0
        %907 = vmatpush1.msra.mxu0 %v878
        %908 = vmatprep.subr.mxu0 0.0
        %909 = vmatpush1.msra.mxu0 %v877
        %910 = vmatprep.subr.mxu0 0.0
        %911 = vmatpush1.msra.mxu0 %v876
        %912 = vmatprep.subr.mxu0 0.0
        %913 = vmatpush1.msra.mxu0 %v875
        %914 = vmatprep.subr.mxu0 0.0
        %915 = vmatpush1.msra.mxu0 %v874
        %916 = vmatprep.subr.mxu0 0.0
        %917 = vmatpush1.msra.mxu0 %v873
        %918 = vmatprep.subr.mxu0 0.0
        %919 = vmatpush1.msra.mxu0 %v872
        %920 = vmatprep.subr.mxu0 0.0
        %921 = vmatpush2.msra.mxu0 0.0
        %922 = vmatprep.subr.mxu0 0.0
        %923 = vmatpush2.msra.mxu0 0.0
        %924 = vmatprep.subr.mxu0 0.0
        %925 = vmatpush2.msra.mxu0 0.0
        %926 = vmatprep.subr.mxu0 0.0
        %927 = vmatpush2.msra.mxu0 0.0
        %928 = vmatprep.subr.mxu0 0.0
        %929 = vmatpush2.msra.mxu0 0.0
        %930 = vmatprep.subr.mxu0 0.0
        %931 = vmatpush2.msra.mxu0 0.0
        %932 = vmatprep.subr.mxu0 0.0
        %933 = vmatpush2.msra.mxu0 0.0
        %934 = vmatprep.subr.mxu0 0.0
        %935 = vmatpush2.msra.mxu0 0.0
        %936 = vmatprep.subr.mxu0 0.0
        %937 = vmatpush2.msra.mxu0 0.0
        %938 = vmatprep.subr.mxu0 0.0
        %939 = vmatpush2.msra.mxu0 0.0
        %940 = vmatprep.subr.mxu0 0.0
        %941 = vmatpush2.msra.mxu0 0.0
        %942 = vmatprep.subr.mxu0 0.0
        %943 = vmatpush2.msra.mxu0 0.0
        %944 = vmatprep.subr.mxu0 0.0
        %945 = vmatpush2.msra.mxu0 0.0
        %946 = vmatprep.subr.mxu0 0.0
        %947 = vmatpush2.msra.mxu0 0.0
        %948 = vmatprep.subr.mxu0 0.0
        %949 = vmatpush2.msra.mxu0 0.0
        %950 = vmatprep.subr.mxu0 0.0
        %951 = vmatpush2.msra.mxu0 0.0
        %952 = vmatprep.mubr.f32.mxu0 0.0
        %953 = vmatmul.mubr.f32.gmra.mxu0 %v865
        %v954 = vpop.f32.mrf.mxu0
        %v955 = vadd.f32 0.0, %v954
        %v956 = vpop.f32.mrf.mxu0
        %957 = vmatprep.mubr.f32.mxu0 0.0
        %958 = vmatmul.mubr.f32.gmra.mxu0 %v866
        %v959 = vpop.f32.mrf.mxu0
        %v960 = vadd.f32 0.0, %v959
        %v961 = vpop.f32.mrf.mxu0
        %962 = vmatprep.mubr.f32.mxu0 0.0
        %963 = vmatmul.mubr.f32.gmra.mxu0 %v867
        %v964 = vpop.f32.mrf.mxu0
        %v965 = vadd.f32 0.0, %v964
        %v966 = vpop.f32.mrf.mxu0
        %967 = vdwg.mxu0
        %v968 = vadd.f32 %v868, %v955
        %v969 = vadd.f32 %v869, %v960
        %v970 = vadd.f32 %v870, %v965
        %971 = vst [vmem:[#allocation2] sm:$0xff] %v968
        %972 = vst [vmem:[#allocation2 + $0x8] sm:$0xff] %v969
        %973 = vst [vmem:[#allocation2 + $0x10] sm:$0xff] %v970
        %v974 = vld [vmem:[%s267 + $0x5] sm:$0xff]
        %v975 = vld [vmem:[%s267 + $0xd] sm:$0xff]
        %v976 = vld [vmem:[%s267 + $0x15] sm:$0xff]
        %v977 = vld [vmem:[#allocation2] sm:$0xff]
        %v978 = vld [vmem:[#allocation2 + $0x8] sm:$0xff]
        %v979 = vld [vmem:[#allocation2 + $0x10] sm:$0xff]
        %s980 = scalar_lea.vmem %s297, 768
        %v981 = vld [vmem:[%s980] sm:$0xff]
        %v982 = vld [vmem:[%s980 + $0x8] sm:$0xff]
        %v983 = vld [vmem:[%s980 + $0x10] sm:$0xff]
        %v984 = vld [vmem:[%s980 + $0x18] sm:$0xff]
        %v985 = vld [vmem:[%s980 + $0x20] sm:$0xff]
        %v986 = vld [vmem:[%s980 + $0x28] sm:$0xff]
        %v987 = vld [vmem:[%s980 + $0x30] sm:$0xff]
        %v988 = vld [vmem:[%s980 + $0x38] sm:$0xff]
        %v989 = vld [vmem:[%s980 + $0x40] sm:$0xff]
        %v990 = vld [vmem:[%s980 + $0x48] sm:$0xff]
        %v991 = vld [vmem:[%s980 + $0x50] sm:$0xff]
        %v992 = vld [vmem:[%s980 + $0x58] sm:$0xff]
        %v993 = vld [vmem:[%s980 + $0x60] sm:$0xff]
        %v994 = vld [vmem:[%s980 + $0x68] sm:$0xff]
        %v995 = vld [vmem:[%s980 + $0x70] sm:$0xff]
        %v996 = vld [vmem:[%s980 + $0x78] sm:$0xff]
        %997 = vmatprep.subr.mxu0 0.0
        %998 = vmatpush1.msra.mxu0 %v996
        %999 = vmatprep.subr.mxu0 0.0
        %1000 = vmatpush1.msra.mxu0 %v995
        %1001 = vmatprep.subr.mxu0 0.0
        %1002 = vmatpush1.msra.mxu0 %v994
        %1003 = vmatprep.subr.mxu0 0.0
        %1004 = vmatpush1.msra.mxu0 %v993
        %1005 = vmatprep.subr.mxu0 0.0
        %1006 = vmatpush1.msra.mxu0 %v992
        %1007 = vmatprep.subr.mxu0 0.0
        %1008 = vmatpush1.msra.mxu0 %v991
        %1009 = vmatprep.subr.mxu0 0.0
        %1010 = vmatpush1.msra.mxu0 %v990
        %1011 = vmatprep.subr.mxu0 0.0
        %1012 = vmatpush1.msra.mxu0 %v989
        %1013 = vmatprep.subr.mxu0 0.0
        %1014 = vmatpush1.msra.mxu0 %v988
        %1015 = vmatprep.subr.mxu0 0.0
        %1016 = vmatpush1.msra.mxu0 %v987
        %1017 = vmatprep.subr.mxu0 0.0
        %1018 = vmatpush1.msra.mxu0 %v986
        %1019 = vmatprep.subr.mxu0 0.0
        %1020 = vmatpush1.msra.mxu0 %v985
        %1021 = vmatprep.subr.mxu0 0.0
        %1022 = vmatpush1.msra.mxu0 %v984
        %1023 = vmatprep.subr.mxu0 0.0
        %1024 = vmatpush1.msra.mxu0 %v983
        %1025 = vmatprep.subr.mxu0 0.0
        %1026 = vmatpush1.msra.mxu0 %v982
        %1027 = vmatprep.subr.mxu0 0.0
        %1028 = vmatpush1.msra.mxu0 %v981
        %1029 = vmatprep.subr.mxu0 0.0
        %1030 = vmatpush2.msra.mxu0 0.0
        %1031 = vmatprep.subr.mxu0 0.0
        %1032 = vmatpush2.msra.mxu0 0.0
        %1033 = vmatprep.subr.mxu0 0.0
        %1034 = vmatpush2.msra.mxu0 0.0
        %1035 = vmatprep.subr.mxu0 0.0
        %1036 = vmatpush2.msra.mxu0 0.0
        %1037 = vmatprep.subr.mxu0 0.0
        %1038 = vmatpush2.msra.mxu0 0.0
        %1039 = vmatprep.subr.mxu0 0.0
        %1040 = vmatpush2.msra.mxu0 0.0
        %1041 = vmatprep.subr.mxu0 0.0
        %1042 = vmatpush2.msra.mxu0 0.0
        %1043 = vmatprep.subr.mxu0 0.0
        %1044 = vmatpush2.msra.mxu0 0.0
        %1045 = vmatprep.subr.mxu0 0.0
        %1046 = vmatpush2.msra.mxu0 0.0
        %1047 = vmatprep.subr.mxu0 0.0
        %1048 = vmatpush2.msra.mxu0 0.0
        %1049 = vmatprep.subr.mxu0 0.0
        %1050 = vmatpush2.msra.mxu0 0.0
        %1051 = vmatprep.subr.mxu0 0.0
        %1052 = vmatpush2.msra.mxu0 0.0
        %1053 = vmatprep.subr.mxu0 0.0
        %1054 = vmatpush2.msra.mxu0 0.0
        %1055 = vmatprep.subr.mxu0 0.0
        %1056 = vmatpush2.msra.mxu0 0.0
        %1057 = vmatprep.subr.mxu0 0.0
        %1058 = vmatpush2.msra.mxu0 0.0
        %1059 = vmatprep.subr.mxu0 0.0
        %1060 = vmatpush2.msra.mxu0 0.0
        %1061 = vmatprep.mubr.f32.mxu0 0.0
        %1062 = vmatmul.mubr.f32.gmra.mxu0 %v974
        %v1063 = vpop.f32.mrf.mxu0
        %v1064 = vadd.f32 0.0, %v1063
        %v1065 = vpop.f32.mrf.mxu0
        %1066 = vmatprep.mubr.f32.mxu0 0.0
        %1067 = vmatmul.mubr.f32.gmra.mxu0 %v975
        %v1068 = vpop.f32.mrf.mxu0
        %v1069 = vadd.f32 0.0, %v1068
        %v1070 = vpop.f32.mrf.mxu0
        %1071 = vmatprep.mubr.f32.mxu0 0.0
        %1072 = vmatmul.mubr.f32.gmra.mxu0 %v976
        %v1073 = vpop.f32.mrf.mxu0
        %v1074 = vadd.f32 0.0, %v1073
        %v1075 = vpop.f32.mrf.mxu0
        %1076 = vdwg.mxu0
        %v1077 = vadd.f32 %v977, %v1064
        %v1078 = vadd.f32 %v978, %v1069
        %v1079 = vadd.f32 %v979, %v1074
        %1080 = vst [vmem:[#allocation2] sm:$0xff] %v1077
        %1081 = vst [vmem:[#allocation2 + $0x8] sm:$0xff] %v1078
        %1082 = vst [vmem:[#allocation2 + $0x10] sm:$0xff] %v1079
        %v1083 = vld [vmem:[%s426 + $0x5] sm:$0xff]
        %v1084 = vld [vmem:[%s426 + $0xd] sm:$0xff]
        %v1085 = vld [vmem:[%s426 + $0x15] sm:$0xff]
        %v1086 = vld [vmem:[#allocation2] sm:$0xff]
        %v1087 = vld [vmem:[#allocation2 + $0x8] sm:$0xff]
        %v1088 = vld [vmem:[#allocation2 + $0x10] sm:$0xff]
        %s1089 = scalar_lea.vmem %s297, 896
        %v1090 = vld [vmem:[%s1089] sm:$0xff]
        %v1091 = vld [vmem:[%s1089 + $0x8] sm:$0xff]
        %v1092 = vld [vmem:[%s1089 + $0x10] sm:$0xff]
        %v1093 = vld [vmem:[%s1089 + $0x18] sm:$0xff]
        %v1094 = vld [vmem:[%s1089 + $0x20] sm:$0xff]
        %v1095 = vld [vmem:[%s1089 + $0x28] sm:$0xff]
        %v1096 = vld [vmem:[%s1089 + $0x30] sm:$0xff]
        %v1097 = vld [vmem:[%s1089 + $0x38] sm:$0xff]
        %v1098 = vld [vmem:[%s1089 + $0x40] sm:$0xff]
        %v1099 = vld [vmem:[%s1089 + $0x48] sm:$0xff]
        %v1100 = vld [vmem:[%s1089 + $0x50] sm:$0xff]
        %v1101 = vld [vmem:[%s1089 + $0x58] sm:$0xff]
        %v1102 = vld [vmem:[%s1089 + $0x60] sm:$0xff]
        %v1103 = vld [vmem:[%s1089 + $0x68] sm:$0xff]
        %v1104 = vld [vmem:[%s1089 + $0x70] sm:$0xff]
        %v1105 = vld [vmem:[%s1089 + $0x78] sm:$0xff]
        %1106 = vmatprep.subr.mxu0 0.0
        %1107 = vmatpush1.msra.mxu0 %v1105
        %1108 = vmatprep.subr.mxu0 0.0
        %1109 = vmatpush1.msra.mxu0 %v1104
        %1110 = vmatprep.subr.mxu0 0.0
        %1111 = vmatpush1.msra.mxu0 %v1103
        %1112 = vmatprep.subr.mxu0 0.0
        %1113 = vmatpush1.msra.mxu0 %v1102
        %1114 = vmatprep.subr.mxu0 0.0
        %1115 = vmatpush1.msra.mxu0 %v1101
        %1116 = vmatprep.subr.mxu0 0.0
        %1117 = vmatpush1.msra.mxu0 %v1100
        %1118 = vmatprep.subr.mxu0 0.0
        %1119 = vmatpush1.msra.mxu0 %v1099
        %1120 = vmatprep.subr.mxu0 0.0
        %1121 = vmatpush1.msra.mxu0 %v1098
        %1122 = vmatprep.subr.mxu0 0.0
        %1123 = vmatpush1.msra.mxu0 %v1097
        %1124 = vmatprep.subr.mxu0 0.0
        %1125 = vmatpush1.msra.mxu0 %v1096
        %1126 = vmatprep.subr.mxu0 0.0
        %1127 = vmatpush1.msra.mxu0 %v1095
        %1128 = vmatprep.subr.mxu0 0.0
        %1129 = vmatpush1.msra.mxu0 %v1094
        %1130 = vmatprep.subr.mxu0 0.0
        %1131 = vmatpush1.msra.mxu0 %v1093
        %1132 = vmatprep.subr.mxu0 0.0
        %1133 = vmatpush1.msra.mxu0 %v1092
        %1134 = vmatprep.subr.mxu0 0.0
        %1135 = vmatpush1.msra.mxu0 %v1091
        %1136 = vmatprep.subr.mxu0 0.0
        %1137 = vmatpush1.msra.mxu0 %v1090
        %1138 = vmatprep.subr.mxu0 0.0
        %1139 = vmatpush2.msra.mxu0 0.0
        %1140 = vmatprep.subr.mxu0 0.0
        %1141 = vmatpush2.msra.mxu0 0.0
        %1142 = vmatprep.subr.mxu0 0.0
        %1143 = vmatpush2.msra.mxu0 0.0
        %1144 = vmatprep.subr.mxu0 0.0
        %1145 = vmatpush2.msra.mxu0 0.0
        %1146 = vmatprep.subr.mxu0 0.0
        %1147 = vmatpush2.msra.mxu0 0.0
        %1148 = vmatprep.subr.mxu0 0.0
        %1149 = vmatpush2.msra.mxu0 0.0
        %1150 = vmatprep.subr.mxu0 0.0
        %1151 = vmatpush2.msra.mxu0 0.0
        %1152 = vmatprep.subr.mxu0 0.0
        %1153 = vmatpush2.msra.mxu0 0.0
        %1154 = vmatprep.subr.mxu0 0.0
        %1155 = vmatpush2.msra.mxu0 0.0
        %1156 = vmatprep.subr.mxu0 0.0
        %1157 = vmatpush2.msra.mxu0 0.0
        %1158 = vmatprep.subr.mxu0 0.0
        %1159 = vmatpush2.msra.mxu0 0.0
        %1160 = vmatprep.subr.mxu0 0.0
        %1161 = vmatpush2.msra.mxu0 0.0
        %1162 = vmatprep.subr.mxu0 0.0
        %1163 = vmatpush2.msra.mxu0 0.0
        %1164 = vmatprep.subr.mxu0 0.0
        %1165 = vmatpush2.msra.mxu0 0.0
        %1166 = vmatprep.subr.mxu0 0.0
        %1167 = vmatpush2.msra.mxu0 0.0
        %1168 = vmatprep.subr.mxu0 0.0
        %1169 = vmatpush2.msra.mxu0 0.0
        %1170 = vmatprep.mubr.f32.mxu0 0.0
        %1171 = vmatmul.mubr.f32.gmra.mxu0 %v1083
        %v1172 = vpop.f32.mrf.mxu0
        %v1173 = vadd.f32 0.0, %v1172
        %v1174 = vpop.f32.mrf.mxu0
        %1175 = vmatprep.mubr.f32.mxu0 0.0
        %1176 = vmatmul.mubr.f32.gmra.mxu0 %v1084
        %v1177 = vpop.f32.mrf.mxu0
        %v1178 = vadd.f32 0.0, %v1177
        %v1179 = vpop.f32.mrf.mxu0
        %1180 = vmatprep.mubr.f32.mxu0 0.0
        %1181 = vmatmul.mubr.f32.gmra.mxu0 %v1085
        %v1182 = vpop.f32.mrf.mxu0
        %v1183 = vadd.f32 0.0, %v1182
        %v1184 = vpop.f32.mrf.mxu0
        %1185 = vdwg.mxu0
        %v1186 = vadd.f32 %v1086, %v1173
        %v1187 = vadd.f32 %v1087, %v1178
        %v1188 = vadd.f32 %v1088, %v1183
        %1189 = vst [vmem:[#allocation2] sm:$0xff] %v1186
        %1190 = vst [vmem:[#allocation2 + $0x8] sm:$0xff] %v1187
        %1191 = vst [vmem:[#allocation2 + $0x10] sm:$0xff] %v1188
        %v1192 = vld [vmem:[%s267 + $0x6] sm:$0xff]
        %v1193 = vld [vmem:[%s267 + $0xe] sm:$0xff]
        %v1194 = vld [vmem:[%s267 + $0x16] sm:$0xff]
        %v1195 = vld [vmem:[#allocation2] sm:$0xff]
        %v1196 = vld [vmem:[#allocation2 + $0x8] sm:$0xff]
        %v1197 = vld [vmem:[#allocation2 + $0x10] sm:$0xff]
        %s1198 = scalar_lea.vmem %s297, 1024
        %v1199 = vld [vmem:[%s1198] sm:$0xff]
        %v1200 = vld [vmem:[%s1198 + $0x8] sm:$0xff]
        %v1201 = vld [vmem:[%s1198 + $0x10] sm:$0xff]
        %v1202 = vld [vmem:[%s1198 + $0x18] sm:$0xff]
        %v1203 = vld [vmem:[%s1198 + $0x20] sm:$0xff]
        %v1204 = vld [vmem:[%s1198 + $0x28] sm:$0xff]
        %v1205 = vld [vmem:[%s1198 + $0x30] sm:$0xff]
        %v1206 = vld [vmem:[%s1198 + $0x38] sm:$0xff]
        %v1207 = vld [vmem:[%s1198 + $0x40] sm:$0xff]
        %v1208 = vld [vmem:[%s1198 + $0x48] sm:$0xff]
        %v1209 = vld [vmem:[%s1198 + $0x50] sm:$0xff]
        %v1210 = vld [vmem:[%s1198 + $0x58] sm:$0xff]
        %v1211 = vld [vmem:[%s1198 + $0x60] sm:$0xff]
        %v1212 = vld [vmem:[%s1198 + $0x68] sm:$0xff]
        %v1213 = vld [vmem:[%s1198 + $0x70] sm:$0xff]
        %v1214 = vld [vmem:[%s1198 + $0x78] sm:$0xff]
        %1215 = vmatprep.subr.mxu0 0.0
        %1216 = vmatpush1.msra.mxu0 %v1214
        %1217 = vmatprep.subr.mxu0 0.0
        %1218 = vmatpush1.msra.mxu0 %v1213
        %1219 = vmatprep.subr.mxu0 0.0
        %1220 = vmatpush1.msra.mxu0 %v1212
        %1221 = vmatprep.subr.mxu0 0.0
        %1222 = vmatpush1.msra.mxu0 %v1211
        %1223 = vmatprep.subr.mxu0 0.0
        %1224 = vmatpush1.msra.mxu0 %v1210
        %1225 = vmatprep.subr.mxu0 0.0
        %1226 = vmatpush1.msra.mxu0 %v1209
        %1227 = vmatprep.subr.mxu0 0.0
        %1228 = vmatpush1.msra.mxu0 %v1208
        %1229 = vmatprep.subr.mxu0 0.0
        %1230 = vmatpush1.msra.mxu0 %v1207
        %1231 = vmatprep.subr.mxu0 0.0
        %1232 = vmatpush1.msra.mxu0 %v1206
        %1233 = vmatprep.subr.mxu0 0.0
        %1234 = vmatpush1.msra.mxu0 %v1205
        %1235 = vmatprep.subr.mxu0 0.0
        %1236 = vmatpush1.msra.mxu0 %v1204
        %1237 = vmatprep.subr.mxu0 0.0
        %1238 = vmatpush1.msra.mxu0 %v1203
        %1239 = vmatprep.subr.mxu0 0.0
        %1240 = vmatpush1.msra.mxu0 %v1202
        %1241 = vmatprep.subr.mxu0 0.0
        %1242 = vmatpush1.msra.mxu0 %v1201
        %1243 = vmatprep.subr.mxu0 0.0
        %1244 = vmatpush1.msra.mxu0 %v1200
        %1245 = vmatprep.subr.mxu0 0.0
        %1246 = vmatpush1.msra.mxu0 %v1199
        %1247 = vmatprep.subr.mxu0 0.0
        %1248 = vmatpush2.msra.mxu0 0.0
        %1249 = vmatprep.subr.mxu0 0.0
        %1250 = vmatpush2.msra.mxu0 0.0
        %1251 = vmatprep.subr.mxu0 0.0
        %1252 = vmatpush2.msra.mxu0 0.0
        %1253 = vmatprep.subr.mxu0 0.0
        %1254 = vmatpush2.msra.mxu0 0.0
        %1255 = vmatprep.subr.mxu0 0.0
        %1256 = vmatpush2.msra.mxu0 0.0
        %1257 = vmatprep.subr.mxu0 0.0
        %1258 = vmatpush2.msra.mxu0 0.0
        %1259 = vmatprep.subr.mxu0 0.0
        %1260 = vmatpush2.msra.mxu0 0.0
        %1261 = vmatprep.subr.mxu0 0.0
        %1262 = vmatpush2.msra.mxu0 0.0
        %1263 = vmatprep.subr.mxu0 0.0
        %1264 = vmatpush2.msra.mxu0 0.0
        %1265 = vmatprep.subr.mxu0 0.0
        %1266 = vmatpush2.msra.mxu0 0.0
        %1267 = vmatprep.subr.mxu0 0.0
        %1268 = vmatpush2.msra.mxu0 0.0
        %1269 = vmatprep.subr.mxu0 0.0
        %1270 = vmatpush2.msra.mxu0 0.0
        %1271 = vmatprep.subr.mxu0 0.0
        %1272 = vmatpush2.msra.mxu0 0.0
        %1273 = vmatprep.subr.mxu0 0.0
        %1274 = vmatpush2.msra.mxu0 0.0
        %1275 = vmatprep.subr.mxu0 0.0
        %1276 = vmatpush2.msra.mxu0 0.0
        %1277 = vmatprep.subr.mxu0 0.0
        %1278 = vmatpush2.msra.mxu0 0.0
        %1279 = vmatprep.mubr.f32.mxu0 0.0
        %1280 = vmatmul.mubr.f32.gmra.mxu0 %v1192
        %v1281 = vpop.f32.mrf.mxu0
        %v1282 = vadd.f32 0.0, %v1281
        %v1283 = vpop.f32.mrf.mxu0
        %1284 = vmatprep.mubr.f32.mxu0 0.0
        %1285 = vmatmul.mubr.f32.gmra.mxu0 %v1193
        %v1286 = vpop.f32.mrf.mxu0
        %v1287 = vadd.f32 0.0, %v1286
        %v1288 = vpop.f32.mrf.mxu0
        %1289 = vmatprep.mubr.f32.mxu0 0.0
        %1290 = vmatmul.mubr.f32.gmra.mxu0 %v1194
        %v1291 = vpop.f32.mrf.mxu0
        %v1292 = vadd.f32 0.0, %v1291
        %v1293 = vpop.f32.mrf.mxu0
        %1294 = vdwg.mxu0
        %v1295 = vadd.f32 %v1195, %v1282
        %v1296 = vadd.f32 %v1196, %v1287
        %v1297 = vadd.f32 %v1197, %v1292
        %1298 = vst [vmem:[#allocation2] sm:$0xff] %v1295
        %1299 = vst [vmem:[#allocation2 + $0x8] sm:$0xff] %v1296
        %1300 = vst [vmem:[#allocation2 + $0x10] sm:$0xff] %v1297
        // Predicated region
        $region75: #{_lambda_.3} parent=65 // pred_check
          %p1301 = pneg %p304
        $region76: #{_lambda_.3} parent=65 // pred_check_branch
          %1303 = sbr.rel (%p1301) target = $region78
        $region77: #{_lambda_.3} parent=65 // pred_region
          %v1304 = vld [vmem:[#allocation2] sm:$0xff]
          %v1305 = vld [vmem:[#allocation2 + $0x8] sm:$0xff]
          %v1306 = vld [vmem:[#allocation2 + $0x10] sm:$0xff]
          %1307 = vst [vmem:[%s303] sm:$0xff] %v1304
          %1308 = vst [vmem:[%s303 + $0x8] sm:$0xff] %v1305
          %1309 = vst [vmem:[%s303 + $0x10] sm:$0xff] %v1306
        $region78: #{_lambda_.3} parent=65 // pred_fallthru
          _
        %p1310 = scmp.lt.s32.totalorder %s18, 1
        %s1311 = scalar_select %p1310, %s18, 1
        %s1312 = smul.addr %s1311, 3
        %s1313 = smul.addr %s1312, 8
        %s1314 = scalar_lea.vmem %s3, %s1313
        // Predicated region
        $region79: #{_lambda_.3} parent=65 // pred_check
          %p1315 = pneg %p119
        $region80: #{_lambda_.3} parent=65 // pred_check_branch
          %1317 = sbr.rel (%p1315) target = $region82
        $region81: #{_lambda_.3} parent=65 // pred_region
          _
        $region82: #{_lambda_.3} parent=65 // pred_fallthru
          _
      $region66: #{_lambda_.3} parent=5 // pred_fallthru
        _
      %p1318 = scmp.le.s32.totalorder 2, %s9
      // Predicated region
      $region83: #{_lambda_.3} parent=5 // pred_check
        %p1319 = pneg %p1318
      $region84: #{_lambda_.3} parent=5 // pred_check_branch
        %1321 = sbr.rel (%p1319) target = $region86
      $region85: #{_lambda_.3} parent=5 // pred_region
        %s1322 = ssub.s32 %s9, 2
        // Predicated region
        $region87: #{_lambda_.3} parent=85 // pred_check
          %p1323 = pneg %p125
        $region88: #{_lambda_.3} parent=85 // pred_check_branch
          %1325 = sbr.rel (%p1323) target = $region90
        $region89: #{_lambda_.3} parent=85 // pred_region
          %p1326 = scmp.lt.s32.totalorder %s20, 1
          %s1327 = scalar_select %p1326, %s20, 1
          %s1328 = smul.addr %s1327, 3
          %s1329 = smul.addr %s1328, 8
          %s1330 = scalar_lea.vmem %s3, %s1329
        $region90: #{_lambda_.3} parent=85 // pred_fallthru
          _
      $region86: #{_lambda_.3} parent=5 // pred_fallthru
        _
    $region6: #{_lambda_.3} parent=1 // loop_footer
      %s13 = sadd.s32 1, %s9
    $region7: #{_lambda_.3} parent=1 // loop_footer_branch
      %8 = sbr.rel target = $region3
    $region8: #{_lambda_.3} parent=1 // loop_exit
      _

</llo_original>
